<compile_context>
chip_gen: v7x
topology: tpu7x:2x2x1
jax: 0.10.0
libtpu: 0.0.40
codegen_flags: <defaults>
</compile_context>

<pallas_src>
import math

import jax
import jax.numpy as jnp
from jax.experimental import pallas as pl
from jax.experimental.pallas import tpu as pltpu

_INV_SQRT2 = 1.0 / math.sqrt(2.0)
_BN_EPS = 1e-5


def _gelu_exact(x):
    # F.gelu / nn.GELU() default: exact erf-based GELU (matches PyTorch).
    return 0.5 * x * (1.0 + jax.lax.erf(x * _INV_SQRT2))


def _rup(x, m):
    return ((x + m - 1) // m) * m


# ----------------------------------------------------------------------------
# Parameter helpers: BN folding + padding
# ----------------------------------------------------------------------------
def _bn_scale_shift(bn):
    gamma, beta, rm, rv = bn
    scale = gamma / jnp.sqrt(rv + _BN_EPS)
    shift = beta - rm * scale
    return scale, shift


def _fold_linear_bn(W, b, bn):
    """Linear (W: [in,out], b: [out]) followed by eval-mode BN -> folded W', b'."""
    scale, shift = _bn_scale_shift(bn)
    Wf = W * scale[None, :]
    bf = (b if b is not None else 0.0) * scale + shift
    return Wf, bf


def _pad_mat(W, rows, cols):
    W = jnp.asarray(W, jnp.float32)
    r, c = W.shape
    return jnp.pad(W, ((0, rows - r), (0, cols - c)))


def _pad_vec(v, cols):
    v = jnp.asarray(v, jnp.float32)
    return jnp.pad(v, (0, cols - v.shape[0]))


# ----------------------------------------------------------------------------
# Operand packing: build a static "plan" plus one weight stack + one vector slab
# ----------------------------------------------------------------------------
def _pack_params(params, layer_types, Dp, Hp, H4p, H2p, Op):
    w_list = []   # (padded f32 matrix, kp, mp)
    v_list = []   # (padded 1-D f32 vector, width)

    def add_w(W, kp, mp):
        w_list.append((_pad_mat(W, kp, mp), kp, mp))
        return (len(w_list) - 1, kp, mp)

    def add_v(v, wp):
        v_list.append((_pad_vec(v, wp), wp))
        return (len(v_list) - 1, wp)

    plan = {}

    # input_proj + input_norm (BN folded into W/b)
    W_in, b_in = _fold_linear_bn(*params["input_proj"], params["input_norm"])
    plan["in_proj"] = (add_w(W_in, Dp, Hp), add_v(b_in, Hp))

    layers = []
    for i, lt in enumerate(layer_types):
        conv = params["convs"][i]
        entry = {"type": lt}
        if lt == "sage":
            Wl, bl, Wr = conv["Wl"], conv["bl"], conv["Wr"]
            if i == 0:
                # PyTorch forward: `identity if i == 0 else skips[i](identity)` -> raw add.
                entry["identity_skip"] = True
                Wr_eff, bl_eff = Wr, bl
            else:
                # lin_r and the skip Linear both act on the same h -> fold (review).
                Wsk, bsk = params["skips"][i]
                entry["identity_skip"] = False
                Wr_eff, bl_eff = Wr + Wsk, bl + bsk
            entry["Wl"] = add_w(Wl, Hp, Hp)
            entry["bl"] = add_v(bl_eff, Hp)
            entry["Wr"] = add_w(Wr_eff, Hp, Hp)
        else:  # gcn
            entry["Wg"] = add_w(conv["W"], Hp, Hp)
            entry["bg"] = add_v(conv["b"], Hp)
            if i == 0:
                entry["identity_skip"] = True
            else:
                Wsk, bsk = params["skips"][i]
                entry["identity_skip"] = False
                entry["Wsk"] = add_w(Wsk, Hp, Hp)
                entry["bsk"] = add_v(bsk, Hp)

        s1, t1 = _bn_scale_shift(params["norms1"][i])
        entry["s1"] = add_v(s1, Hp)
        entry["t1"] = add_v(t1, Hp)

        W1, b1, W2, b2 = params["ffns"][i]
        entry["W1"] = add_w(W1, Hp, H4p)
        entry["b1"] = add_v(b1, H4p)
        entry["W2"] = add_w(W2, H4p, Hp)
        entry["b2"] = add_v(b2, Hp)

        s2, t2 = _bn_scale_shift(params["norms2"][i])
        entry["s2"] = add_v(s2, Hp)
        entry["t2"] = add_v(t2, Hp)
        layers.append(entry)
    plan["layers"] = layers

    sf, tf = _bn_scale_shift(params["final_norm"])
    plan["final_s"] = add_v(sf, Hp)
    plan["final_t"] = add_v(tf, Hp)

    po = params["pre_output"]
    Wp1, bp1 = _fold_linear_bn(*po["lin1"], po["bn1"])
    Wp2, bp2 = _fold_linear_bn(*po["lin2"], po["bn2"])
    plan["p1"] = (add_w(Wp1, Hp, H2p), add_v(bp1, H2p))
    plan["p2"] = (add_w(Wp2, H2p, Hp), add_v(bp2, Hp))

    W_pred, b_pred = params["predictor"]
    plan["pred"] = (add_w(W_pred, Hp, Op), add_v(b_pred, Op))

    # Uniform padding so everything lives in a single [n_w, Kmax, Mmax] / [n_vec, Vmax]
    # stack (zero waste for the toy config where all dims pad to 128).
    Kmax = max(kp for _, kp, _ in w_list)
    Mmax = max(mp for _, _, mp in w_list)
    w_stack = jnp.stack(
        [jnp.pad(Wp, ((0, Kmax - kp), (0, Mmax - mp))) for Wp, kp, mp in w_list]
    ).astype(jnp.bfloat16)
    Vmax = max(wp for _, wp in v_list)
    v_stack = jnp.stack(
        [jnp.pad(vp, (0, Vmax - wp)) for vp, wp in v_list]
    ).astype(jnp.float32)
    return plan, w_stack, v_stack


# ----------------------------------------------------------------------------
# Fused forward kernel (layer loop unrolled at trace time from the static plan)
# ----------------------------------------------------------------------------
def _make_fused_kernel(plan):
    bf16, f32 = jnp.bfloat16, jnp.float32

    def kernel(a_mean_ref, a_gcn_ref, x_ref, w_ref, v_ref, out_ref):
        def W(spec):
            idx, kp, mp = spec
            return w_ref[idx, :kp, :mp]                       # bf16 (kp, mp)

        def V(spec):
            idx, wp = spec
            return v_ref[pl.ds(idx, 1), :wp]                  # f32 (1, wp)

        def mm(a, wspec):
            return jnp.dot(a.astype(bf16), W(wspec), preferred_element_type=f32)

        a_mean = a_mean_ref[...]                              # bf16 (Np, Np)
        a_gcn = a_gcn_ref[...]                                # bf16 (Np, Np)

        # input_proj + input_norm (folded) + GELU
        w_in, b_in = plan["in_proj"]
        h = _gelu_exact(mm(x_ref[...], w_in) + V(b_in))

        for entry in plan["layers"]:
            identity = h
            if entry["type"] == "sage":
                # mean aggregation over in-neighbors, then lin_l(aggr) + lin_r(x)
                agg = jnp.dot(a_mean, h.astype(bf16), preferred_element_type=f32)
                conv = mm(agg, entry["Wl"]) + V(entry["bl"]) + mm(h, entry["Wr"])
            else:  # gcn
                xw = mm(h, entry["Wg"])                       # x @ W (no bias)
                conv = (jnp.dot(a_gcn, xw.astype(bf16), preferred_element_type=f32)
                        + V(entry["bg"]))

            if entry["identity_skip"]:
                h = conv + identity                           # layer 0: raw identity skip
            elif "Wsk" in entry:
                h = conv + mm(identity, entry["Wsk"]) + V(entry["bsk"])   # GCN, i>0
            else:
                h = conv                                      # SAGE i>0: skip folded into Wr/bl

            h = h * V(entry["s1"]) + V(entry["t1"])           # norms1 (BN eval)

            f = _gelu_exact(mm(h, entry["W1"]) + V(entry["b1"]))
            f = mm(f, entry["W2"]) + V(entry["b2"])           # FFN Dropout = identity (eval)
            h = h + f

            h = h * V(entry["s2"]) + V(entry["t2"])           # norms2 (BN eval)
            # inter-layer F.dropout -> identity in eval mode

        h = h * V(plan["final_s"]) + V(plan["final_t"])       # final_norm

        wp1, bp1 = plan["p1"]
        wp2, bp2 = plan["p2"]
        h = _gelu_exact(mm(h, wp1) + V(bp1))                  # lin1 + bn1 folded, GELU
        h = _gelu_exact(mm(h, wp2) + V(bp2))                  # lin2 + bn2 folded, GELU

        wpr, bpr = plan["pred"]
        out_ref[...] = (mm(h, wpr) + V(bpr)).astype(out_ref.dtype)

    return kernel


# ----------------------------------------------------------------------------
# Graph densification -- computed ONCE per graph, outside the forward pass
# ----------------------------------------------------------------------------
def prepare_graph(edge_index, num_nodes):
    """Densify the sparse graph (hoisted out of the per-call wrapper).

    Node rows are padded to a multiple of 128 so A loads are lane-dense and the A@h
    matmuls have an aligned K dim.  Padded A columns are zero, so padded node rows never
    contaminate real rows (this invariant is what makes the row padding safe).  Adjacency
    is stored bf16 to halve HBM/VMEM footprint (matters most on v7x's 64 MiB VMEM).
    """
    N = int(num_nodes)
    Np = _rup(max(N, 128), 128)
    src = edge_index[0]
    dst = edge_index[1]
    A = jnp.zeros((Np, Np), jnp.float32).at[dst, src].add(1.0)   # A[dst, src] = 1
    in_deg = A.sum(axis=1)
    # SAGEConv mean aggregation (rows with zero in-degree aggregate to 0).
    A_mean = A / jnp.maximum(in_deg, 1.0)[:, None]
    # GCN symmetric normalization (add_self_loops=False), as in torch_geometric's gcn_norm.
    d_inv_sqrt = jnp.where(in_deg > 0, 1.0 / jnp.sqrt(jnp.maximum(in_deg, 1e-12)), 0.0)
    A_gcn = d_inv_sqrt[:, None] * A * d_inv_sqrt[None, :]
    return {"A_mean": A_mean.astype(jnp.bfloat16),
            "A_gcn": A_gcn.astype(jnp.bfloat16),
            "N": N, "Np": Np}


# ----------------------------------------------------------------------------
# Deterministic parameter initialization (shapes follow BiomarkerGNN.__init__)
# Linear weights are stored as (in_features, out_features) = W_torch.T
# ----------------------------------------------------------------------------
def _init_linear(key, fan_in, fan_out, use_bias=True):
    k1, k2 = jax.random.split(key)
    bound = 1.0 / math.sqrt(fan_in)
    W = jax.random.uniform(k1, (fan_in, fan_out), jnp.float32, -bound, bound)
    b = (jax.random.uniform(k2, (fan_out,), jnp.float32, -bound, bound)
         if use_bias else None)
    return W, b


def _init_bn(key, dim):
    k1, k2, k3, k4 = jax.random.split(key, 4)
    gamma = 1.0 + 0.1 * jax.random.normal(k1, (dim,), jnp.float32)
    beta = 0.1 * jax.random.normal(k2, (dim,), jnp.float32)
    rmean = 0.05 * jax.random.normal(k3, (dim,), jnp.float32)
    rvar = 1.0 + 0.1 * jnp.abs(jax.random.normal(k4, (dim,), jnp.float32))
    return (gamma, beta, rmean, rvar)


def init_params(key, input_dim, hidden_dim, output_dim, num_layers):
    keys = iter(jax.random.split(key, 64))
    p = {}
    p["input_proj"] = _init_linear(next(keys), input_dim, hidden_dim)
    p["input_norm"] = _init_bn(next(keys), hidden_dim)

    convs, norms1, norms2, ffns, skips = [], [], [], [], []
    for i in range(num_layers):
        if i % 3 == 1:
            # GCNConv(hidden, hidden, add_self_loops=False): lin (no bias) + bias param
            W, _ = _init_linear(next(keys), hidden_dim, hidden_dim, use_bias=False)
            b = jnp.zeros((hidden_dim,), jnp.float32)
            convs.append({"type": "gcn", "W": W, "b": b})
        else:
            # SAGEConv(hidden, hidden): lin_l (with bias) on aggregated, lin_r (no bias) on root
            Wl, bl = _init_linear(next(keys), hidden_dim, hidden_dim)
            Wr, _ = _init_linear(next(keys), hidden_dim, hidden_dim, use_bias=False)
            convs.append({"type": "sage", "Wl": Wl, "bl": bl, "Wr": Wr})
        norms1.append(_init_bn(next(keys), hidden_dim))
        norms2.append(_init_bn(next(keys), hidden_dim))
        W1, b1 = _init_linear(next(keys), hidden_dim, hidden_dim * 4)
        W2, b2 = _init_linear(next(keys), hidden_dim * 4, hidden_dim)
        ffns.append((W1, b1, W2, b2))
        skips.append(_init_linear(next(keys), hidden_dim, hidden_dim))
    p["convs"], p["norms1"], p["norms2"] = convs, norms1, norms2
    p["ffns"], p["skips"] = ffns, skips

    p["final_norm"] = _init_bn(next(keys), hidden_dim)
    p["pre_output"] = {
        "lin1": _init_linear(next(keys), hidden_dim, hidden_dim * 2),
        "bn1": _init_bn(next(keys), hidden_dim * 2),
        "lin2": _init_linear(next(keys), hidden_dim * 2, hidden_dim),
        "bn2": _init_bn(next(keys), hidden_dim),
    }
    p["predictor"] = _init_linear(next(keys), hidden_dim, output_dim)
    return p


# ----------------------------------------------------------------------------
# Forward pass: one grid-less fused pallas_call (eval mode)
# ----------------------------------------------------------------------------
def biomarker_gnn_forward(params, x, graph, num_layers=4):
    layer_types = tuple("gcn" if i % 3 == 1 else "sage" for i in range(num_layers))

    N, D = x.shape
    H = params["input_proj"][0].shape[1]
    O = params["predictor"][0].shape[1]
    Np = graph["Np"]
    assert graph["N"] == N and Np >= N

    Dp = _rup(D, 128)
    Hp = _rup(H, 128)
    H4p = _rup(4 * H, 128)
    H2p = _rup(2 * H, 128)
    Op = _rup(O, 128)

    x_p = jnp.pad(jnp.asarray(x, jnp.float32), ((0, Np - N), (0, Dp - D)))

    plan, w_stack, v_stack = _pack_params(params, layer_types, Dp, Hp, H4p, H2p, Op)
    kernel = _make_fused_kernel(plan)

    # Grid-less call: every operand is a single whole-array VMEM block -> no pipeline
    # double-buffering, ~5 input DMAs total instead of ~45.
    vmem = pl.BlockSpec(memory_space=pltpu.MemorySpace.VMEM)
    out_padded = pl.pallas_call(
        kernel,
        out_shape=jax.ShapeDtypeStruct((Np, Op), jnp.float32),
        in_specs=[vmem, vmem, vmem, vmem, vmem],
        out_specs=vmem,
        compiler_params=pltpu.CompilerParams(
            # Tiny footprint here, but raised explicitly so the same kernel keeps working
            # as N / hidden_dim grow (scoped defaults are 16/32 MiB; v7x physical is 64 MiB).
            vmem_limit_bytes=48 * 1024 * 1024,
        ),
    )(graph["A_mean"], graph["A_gcn"], x_p, w_stack, v_stack)

    return out_padded[:N, :O]


# ----------------------------------------------------------------------------
if __name__ == "__main__":
    N_NODES = 16
    INPUT_DIM = 8
    HIDDEN_DIM = 32
    OUTPUT_DIM = 1
    NUM_LAYERS = 4

    key = jax.random.PRNGKey(0)
    k_params, k_x = jax.random.split(key)

    params = init_params(k_params, INPUT_DIM, HIDDEN_DIM, OUTPUT_DIM, NUM_LAYERS)
    x = jax.random.normal(k_x, (N_NODES, INPUT_DIM), dtype=jnp.float32)

    # Deterministic graph: bidirectional ring plus chord edges (src -> dst).
    idx = jnp.arange(N_NODES)
    src = jnp.concatenate([idx, (idx + 1) % N_NODES, idx])
    dst = jnp.concatenate([(idx + 1) % N_NODES, idx, (idx + 5) % N_NODES])
    edge_index = jnp.stack([src, dst], axis=0).astype(jnp.int32)   # [2, 48]

    # Densification / normalization done once per graph (hoisted out of the forward).
    graph = prepare_graph(edge_index, N_NODES)

    out = biomarker_gnn_forward(params, x, graph, NUM_LAYERS)
    out = jax.block_until_ready(out)

    assert out.shape == (N_NODES, OUTPUT_DIM)
    assert bool(jnp.all(jnp.isfinite(out)))
    print("KERNEL_OK")
</pallas_src>

<mosaic_0001>
module attributes {stable_mosaic.version = 11 : i64} {
  func.func @kernel(%arg0: memref<128x128xbf16, #tpu.memory_space<vmem>>, %arg1: memref<128x128xbf16, #tpu.memory_space<vmem>>, %arg2: memref<128x128xf32, #tpu.memory_space<vmem>>, %arg3: memref<20x128x128xbf16, #tpu.memory_space<vmem>>, %arg4: memref<35x128xf32, #tpu.memory_space<vmem>>, %arg5: memref<128x128xf32, #tpu.memory_space<vmem>>) attributes {dimension_semantics = [], scalar_prefetch = 0 : i64, scratch_operands = 0 : i64, tpu.core_type = #tpu.core_type<tc>} {
    %c0 = arith.constant 0 : index
    %c0_0 = arith.constant 0 : index
    %0 = vector.load %arg0[%c0, %c0_0] : memref<128x128xbf16, #tpu.memory_space<vmem>>, vector<128x128xbf16>
    %c0_1 = arith.constant 0 : index
    %c0_2 = arith.constant 0 : index
    %1 = vector.load %arg1[%c0_1, %c0_2] : memref<128x128xbf16, #tpu.memory_space<vmem>>, vector<128x128xbf16>
    %c0_3 = arith.constant 0 : index
    %c0_4 = arith.constant 0 : index
    %2 = vector.load %arg2[%c0_3, %c0_4] : memref<128x128xf32, #tpu.memory_space<vmem>>, vector<128x128xf32>
    %3 = arith.truncf %2 : vector<128x128xf32> to vector<128x128xbf16>
    %c0_5 = arith.constant 0 : index
    %c0_6 = arith.constant 0 : index
    %c0_7 = arith.constant 0 : index
    %4 = vector.load %arg3[%c0_5, %c0_6, %c0_7] : memref<20x128x128xbf16, #tpu.memory_space<vmem>>, vector<1x128x128xbf16>
    %5 = vector.shape_cast %4 : vector<1x128x128xbf16> to vector<128x128xbf16>
    %cst = arith.constant dense<0.000000e+00> : vector<128x128xf32>
    %6 = tpu.matmul %3, %5, %cst {dimension_numbers = #tpu.dot_dimension_numbers<[1], [0], [0], [1], [0, 0, 1, 1], [], []>} : vector<128x128xbf16>, vector<128x128xbf16>, vector<128x128xf32> -> vector<128x128xf32>
    %c0_8 = arith.constant 0 : index
    %c0_9 = arith.constant 0 : index
    %7 = vector.load %arg4[%c0_8, %c0_9] : memref<35x128xf32, #tpu.memory_space<vmem>>, vector<1x128xf32>
    %8 = vector.broadcast %7 : vector<1x128xf32> to vector<128x128xf32>
    %9 = arith.addf %6, %8 : vector<128x128xf32>
    %cst_10 = arith.constant 5.000000e-01 : f32
    %10 = vector.broadcast %cst_10 : f32 to vector<128x128xf32>
    %11 = arith.mulf %10, %9 : vector<128x128xf32>
    %cst_11 = arith.constant 0.707106769 : f32
    %12 = vector.broadcast %cst_11 : f32 to vector<128x128xf32>
    %13 = arith.mulf %9, %12 : vector<128x128xf32>
    %14 = math.erf %13 : vector<128x128xf32>
    %cst_12 = arith.constant 1.000000e+00 : f32
    %15 = vector.broadcast %cst_12 : f32 to vector<128x128xf32>
    %16 = arith.addf %15, %14 : vector<128x128xf32>
    %17 = arith.mulf %11, %16 : vector<128x128xf32>
    %18 = arith.truncf %17 : vector<128x128xf32> to vector<128x128xbf16>
    %cst_13 = arith.constant dense<0.000000e+00> : vector<128x128xf32>
    %19 = tpu.matmul %0, %18, %cst_13 {dimension_numbers = #tpu.dot_dimension_numbers<[1], [0], [0], [1], [0, 0, 1, 1], [], []>} : vector<128x128xbf16>, vector<128x128xbf16>, vector<128x128xf32> -> vector<128x128xf32>
    %20 = arith.truncf %19 : vector<128x128xf32> to vector<128x128xbf16>
    %c1 = arith.constant 1 : index
    %c0_14 = arith.constant 0 : index
    %c0_15 = arith.constant 0 : index
    %21 = vector.load %arg3[%c1, %c0_14, %c0_15] : memref<20x128x128xbf16, #tpu.memory_space<vmem>>, vector<1x128x128xbf16>
    %22 = vector.shape_cast %21 : vector<1x128x128xbf16> to vector<128x128xbf16>
    %cst_16 = arith.constant dense<0.000000e+00> : vector<128x128xf32>
    %23 = tpu.matmul %20, %22, %cst_16 {dimension_numbers = #tpu.dot_dimension_numbers<[1], [0], [0], [1], [0, 0, 1, 1], [], []>} : vector<128x128xbf16>, vector<128x128xbf16>, vector<128x128xf32> -> vector<128x128xf32>
    %c1_17 = arith.constant 1 : index
    %c0_18 = arith.constant 0 : index
    %24 = vector.load %arg4[%c1_17, %c0_18] : memref<35x128xf32, #tpu.memory_space<vmem>>, vector<1x128xf32>
    %25 = vector.broadcast %24 : vector<1x128xf32> to vector<128x128xf32>
    %26 = arith.addf %23, %25 : vector<128x128xf32>
    %27 = arith.truncf %17 : vector<128x128xf32> to vector<128x128xbf16>
    %c2 = arith.constant 2 : index
    %c0_19 = arith.constant 0 : index
    %c0_20 = arith.constant 0 : index
    %28 = vector.load %arg3[%c2, %c0_19, %c0_20] : memref<20x128x128xbf16, #tpu.memory_space<vmem>>, vector<1x128x128xbf16>
    %29 = vector.shape_cast %28 : vector<1x128x128xbf16> to vector<128x128xbf16>
    %cst_21 = arith.constant dense<0.000000e+00> : vector<128x128xf32>
    %30 = tpu.matmul %27, %29, %cst_21 {dimension_numbers = #tpu.dot_dimension_numbers<[1], [0], [0], [1], [0, 0, 1, 1], [], []>} : vector<128x128xbf16>, vector<128x128xbf16>, vector<128x128xf32> -> vector<128x128xf32>
    %31 = arith.addf %26, %30 : vector<128x128xf32>
    %32 = arith.addf %31, %17 : vector<128x128xf32>
    %c2_22 = arith.constant 2 : index
    %c0_23 = arith.constant 0 : index
    %33 = vector.load %arg4[%c2_22, %c0_23] : memref<35x128xf32, #tpu.memory_space<vmem>>, vector<1x128xf32>
    %34 = vector.broadcast %33 : vector<1x128xf32> to vector<128x128xf32>
    %35 = arith.mulf %32, %34 : vector<128x128xf32>
    %c3 = arith.constant 3 : index
    %c0_24 = arith.constant 0 : index
    %36 = vector.load %arg4[%c3, %c0_24] : memref<35x128xf32, #tpu.memory_space<vmem>>, vector<1x128xf32>
    %37 = vector.broadcast %36 : vector<1x128xf32> to vector<128x128xf32>
    %38 = arith.addf %35, %37 : vector<128x128xf32>
    %39 = arith.truncf %38 : vector<128x128xf32> to vector<128x128xbf16>
    %c3_25 = arith.constant 3 : index
    %c0_26 = arith.constant 0 : index
    %c0_27 = arith.constant 0 : index
    %40 = vector.load %arg3[%c3_25, %c0_26, %c0_27] : memref<20x128x128xbf16, #tpu.memory_space<vmem>>, vector<1x128x128xbf16>
    %41 = vector.shape_cast %40 : vector<1x128x128xbf16> to vector<128x128xbf16>
    %cst_28 = arith.constant dense<0.000000e+00> : vector<128x128xf32>
    %42 = tpu.matmul %39, %41, %cst_28 {dimension_numbers = #tpu.dot_dimension_numbers<[1], [0], [0], [1], [0, 0, 1, 1], [], []>} : vector<128x128xbf16>, vector<128x128xbf16>, vector<128x128xf32> -> vector<128x128xf32>
    %c4 = arith.constant 4 : index
    %c0_29 = arith.constant 0 : index
    %43 = vector.load %arg4[%c4, %c0_29] : memref<35x128xf32, #tpu.memory_space<vmem>>, vector<1x128xf32>
    %44 = vector.broadcast %43 : vector<1x128xf32> to vector<128x128xf32>
    %45 = arith.addf %42, %44 : vector<128x128xf32>
    %cst_30 = arith.constant 5.000000e-01 : f32
    %46 = vector.broadcast %cst_30 : f32 to vector<128x128xf32>
    %47 = arith.mulf %46, %45 : vector<128x128xf32>
    %cst_31 = arith.constant 0.707106769 : f32
    %48 = vector.broadcast %cst_31 : f32 to vector<128x128xf32>
    %49 = arith.mulf %45, %48 : vector<128x128xf32>
    %50 = math.erf %49 : vector<128x128xf32>
    %cst_32 = arith.constant 1.000000e+00 : f32
    %51 = vector.broadcast %cst_32 : f32 to vector<128x128xf32>
    %52 = arith.addf %51, %50 : vector<128x128xf32>
    %53 = arith.mulf %47, %52 : vector<128x128xf32>
    %54 = arith.truncf %53 : vector<128x128xf32> to vector<128x128xbf16>
    %c4_33 = arith.constant 4 : index
    %c0_34 = arith.constant 0 : index
    %c0_35 = arith.constant 0 : index
    %55 = vector.load %arg3[%c4_33, %c0_34, %c0_35] : memref<20x128x128xbf16, #tpu.memory_space<vmem>>, vector<1x128x128xbf16>
    %56 = vector.shape_cast %55 : vector<1x128x128xbf16> to vector<128x128xbf16>
    %cst_36 = arith.constant dense<0.000000e+00> : vector<128x128xf32>
    %57 = tpu.matmul %54, %56, %cst_36 {dimension_numbers = #tpu.dot_dimension_numbers<[1], [0], [0], [1], [0, 0, 1, 1], [], []>} : vector<128x128xbf16>, vector<128x128xbf16>, vector<128x128xf32> -> vector<128x128xf32>
    %c5 = arith.constant 5 : index
    %c0_37 = arith.constant 0 : index
    %58 = vector.load %arg4[%c5, %c0_37] : memref<35x128xf32, #tpu.memory_space<vmem>>, vector<1x128xf32>
    %59 = vector.broadcast %58 : vector<1x128xf32> to vector<128x128xf32>
    %60 = arith.addf %57, %59 : vector<128x128xf32>
    %61 = arith.addf %38, %60 : vector<128x128xf32>
    %c6 = arith.constant 6 : index
    %c0_38 = arith.constant 0 : index
    %62 = vector.load %arg4[%c6, %c0_38] : memref<35x128xf32, #tpu.memory_space<vmem>>, vector<1x128xf32>
    %63 = vector.broadcast %62 : vector<1x128xf32> to vector<128x128xf32>
    %64 = arith.mulf %61, %63 : vector<128x128xf32>
    %c7 = arith.constant 7 : index
    %c0_39 = arith.constant 0 : index
    %65 = vector.load %arg4[%c7, %c0_39] : memref<35x128xf32, #tpu.memory_space<vmem>>, vector<1x128xf32>
    %66 = vector.broadcast %65 : vector<1x128xf32> to vector<128x128xf32>
    %67 = arith.addf %64, %66 : vector<128x128xf32>
    %68 = arith.truncf %67 : vector<128x128xf32> to vector<128x128xbf16>
    %c5_40 = arith.constant 5 : index
    %c0_41 = arith.constant 0 : index
    %c0_42 = arith.constant 0 : index
    %69 = vector.load %arg3[%c5_40, %c0_41, %c0_42] : memref<20x128x128xbf16, #tpu.memory_space<vmem>>, vector<1x128x128xbf16>
    %70 = vector.shape_cast %69 : vector<1x128x128xbf16> to vector<128x128xbf16>
    %cst_43 = arith.constant dense<0.000000e+00> : vector<128x128xf32>
    %71 = tpu.matmul %68, %70, %cst_43 {dimension_numbers = #tpu.dot_dimension_numbers<[1], [0], [0], [1], [0, 0, 1, 1], [], []>} : vector<128x128xbf16>, vector<128x128xbf16>, vector<128x128xf32> -> vector<128x128xf32>
    %72 = arith.truncf %71 : vector<128x128xf32> to vector<128x128xbf16>
    %cst_44 = arith.constant dense<0.000000e+00> : vector<128x128xf32>
    %73 = tpu.matmul %1, %72, %cst_44 {dimension_numbers = #tpu.dot_dimension_numbers<[1], [0], [0], [1], [0, 0, 1, 1], [], []>} : vector<128x128xbf16>, vector<128x128xbf16>, vector<128x128xf32> -> vector<128x128xf32>
    %c8 = arith.constant 8 : index
    %c0_45 = arith.constant 0 : index
    %74 = vector.load %arg4[%c8, %c0_45] : memref<35x128xf32, #tpu.memory_space<vmem>>, vector<1x128xf32>
    %75 = vector.broadcast %74 : vector<1x128xf32> to vector<128x128xf32>
    %76 = arith.addf %73, %75 : vector<128x128xf32>
    %77 = arith.truncf %67 : vector<128x128xf32> to vector<128x128xbf16>
    %c6_46 = arith.constant 6 : index
    %c0_47 = arith.constant 0 : index
    %c0_48 = arith.constant 0 : index
    %78 = vector.load %arg3[%c6_46, %c0_47, %c0_48] : memref<20x128x128xbf16, #tpu.memory_space<vmem>>, vector<1x128x128xbf16>
    %79 = vector.shape_cast %78 : vector<1x128x128xbf16> to vector<128x128xbf16>
    %cst_49 = arith.constant dense<0.000000e+00> : vector<128x128xf32>
    %80 = tpu.matmul %77, %79, %cst_49 {dimension_numbers = #tpu.dot_dimension_numbers<[1], [0], [0], [1], [0, 0, 1, 1], [], []>} : vector<128x128xbf16>, vector<128x128xbf16>, vector<128x128xf32> -> vector<128x128xf32>
    %81 = arith.addf %76, %80 : vector<128x128xf32>
    %c9 = arith.constant 9 : index
    %c0_50 = arith.constant 0 : index
    %82 = vector.load %arg4[%c9, %c0_50] : memref<35x128xf32, #tpu.memory_space<vmem>>, vector<1x128xf32>
    %83 = vector.broadcast %82 : vector<1x128xf32> to vector<128x128xf32>
    %84 = arith.addf %81, %83 : vector<128x128xf32>
    %c10 = arith.constant 10 : index
    %c0_51 = arith.constant 0 : index
    %85 = vector.load %arg4[%c10, %c0_51] : memref<35x128xf32, #tpu.memory_space<vmem>>, vector<1x128xf32>
    %86 = vector.broadcast %85 : vector<1x128xf32> to vector<128x128xf32>
    %87 = arith.mulf %84, %86 : vector<128x128xf32>
    %c11 = arith.constant 11 : index
    %c0_52 = arith.constant 0 : index
    %88 = vector.load %arg4[%c11, %c0_52] : memref<35x128xf32, #tpu.memory_space<vmem>>, vector<1x128xf32>
    %89 = vector.broadcast %88 : vector<1x128xf32> to vector<128x128xf32>
    %90 = arith.addf %87, %89 : vector<128x128xf32>
    %91 = arith.truncf %90 : vector<128x128xf32> to vector<128x128xbf16>
    %c7_53 = arith.constant 7 : index
    %c0_54 = arith.constant 0 : index
    %c0_55 = arith.constant 0 : index
    %92 = vector.load %arg3[%c7_53, %c0_54, %c0_55] : memref<20x128x128xbf16, #tpu.memory_space<vmem>>, vector<1x128x128xbf16>
    %93 = vector.shape_cast %92 : vector<1x128x128xbf16> to vector<128x128xbf16>
    %cst_56 = arith.constant dense<0.000000e+00> : vector<128x128xf32>
    %94 = tpu.matmul %91, %93, %cst_56 {dimension_numbers = #tpu.dot_dimension_numbers<[1], [0], [0], [1], [0, 0, 1, 1], [], []>} : vector<128x128xbf16>, vector<128x128xbf16>, vector<128x128xf32> -> vector<128x128xf32>
    %c12 = arith.constant 12 : index
    %c0_57 = arith.constant 0 : index
    %95 = vector.load %arg4[%c12, %c0_57] : memref<35x128xf32, #tpu.memory_space<vmem>>, vector<1x128xf32>
    %96 = vector.broadcast %95 : vector<1x128xf32> to vector<128x128xf32>
    %97 = arith.addf %94, %96 : vector<128x128xf32>
    %cst_58 = arith.constant 5.000000e-01 : f32
    %98 = vector.broadcast %cst_58 : f32 to vector<128x128xf32>
    %99 = arith.mulf %98, %97 : vector<128x128xf32>
    %cst_59 = arith.constant 0.707106769 : f32
    %100 = vector.broadcast %cst_59 : f32 to vector<128x128xf32>
    %101 = arith.mulf %97, %100 : vector<128x128xf32>
    %102 = math.erf %101 : vector<128x128xf32>
    %cst_60 = arith.constant 1.000000e+00 : f32
    %103 = vector.broadcast %cst_60 : f32 to vector<128x128xf32>
    %104 = arith.addf %103, %102 : vector<128x128xf32>
    %105 = arith.mulf %99, %104 : vector<128x128xf32>
    %106 = arith.truncf %105 : vector<128x128xf32> to vector<128x128xbf16>
    %c8_61 = arith.constant 8 : index
    %c0_62 = arith.constant 0 : index
    %c0_63 = arith.constant 0 : index
    %107 = vector.load %arg3[%c8_61, %c0_62, %c0_63] : memref<20x128x128xbf16, #tpu.memory_space<vmem>>, vector<1x128x128xbf16>
    %108 = vector.shape_cast %107 : vector<1x128x128xbf16> to vector<128x128xbf16>
    %cst_64 = arith.constant dense<0.000000e+00> : vector<128x128xf32>
    %109 = tpu.matmul %106, %108, %cst_64 {dimension_numbers = #tpu.dot_dimension_numbers<[1], [0], [0], [1], [0, 0, 1, 1], [], []>} : vector<128x128xbf16>, vector<128x128xbf16>, vector<128x128xf32> -> vector<128x128xf32>
    %c13 = arith.constant 13 : index
    %c0_65 = arith.constant 0 : index
    %110 = vector.load %arg4[%c13, %c0_65] : memref<35x128xf32, #tpu.memory_space<vmem>>, vector<1x128xf32>
    %111 = vector.broadcast %110 : vector<1x128xf32> to vector<128x128xf32>
    %112 = arith.addf %109, %111 : vector<128x128xf32>
    %113 = arith.addf %90, %112 : vector<128x128xf32>
    %c14 = arith.constant 14 : index
    %c0_66 = arith.constant 0 : index
    %114 = vector.load %arg4[%c14, %c0_66] : memref<35x128xf32, #tpu.memory_space<vmem>>, vector<1x128xf32>
    %115 = vector.broadcast %114 : vector<1x128xf32> to vector<128x128xf32>
    %116 = arith.mulf %113, %115 : vector<128x128xf32>
    %c15 = arith.constant 15 : index
    %c0_67 = arith.constant 0 : index
    %117 = vector.load %arg4[%c15, %c0_67] : memref<35x128xf32, #tpu.memory_space<vmem>>, vector<1x128xf32>
    %118 = vector.broadcast %117 : vector<1x128xf32> to vector<128x128xf32>
    %119 = arith.addf %116, %118 : vector<128x128xf32>
    %120 = arith.truncf %119 : vector<128x128xf32> to vector<128x128xbf16>
    %cst_68 = arith.constant dense<0.000000e+00> : vector<128x128xf32>
    %121 = tpu.matmul %0, %120, %cst_68 {dimension_numbers = #tpu.dot_dimension_numbers<[1], [0], [0], [1], [0, 0, 1, 1], [], []>} : vector<128x128xbf16>, vector<128x128xbf16>, vector<128x128xf32> -> vector<128x128xf32>
    %122 = arith.truncf %121 : vector<128x128xf32> to vector<128x128xbf16>
    %c9_69 = arith.constant 9 : index
    %c0_70 = arith.constant 0 : index
    %c0_71 = arith.constant 0 : index
    %123 = vector.load %arg3[%c9_69, %c0_70, %c0_71] : memref<20x128x128xbf16, #tpu.memory_space<vmem>>, vector<1x128x128xbf16>
    %124 = vector.shape_cast %123 : vector<1x128x128xbf16> to vector<128x128xbf16>
    %cst_72 = arith.constant dense<0.000000e+00> : vector<128x128xf32>
    %125 = tpu.matmul %122, %124, %cst_72 {dimension_numbers = #tpu.dot_dimension_numbers<[1], [0], [0], [1], [0, 0, 1, 1], [], []>} : vector<128x128xbf16>, vector<128x128xbf16>, vector<128x128xf32> -> vector<128x128xf32>
    %c16 = arith.constant 16 : index
    %c0_73 = arith.constant 0 : index
    %126 = vector.load %arg4[%c16, %c0_73] : memref<35x128xf32, #tpu.memory_space<vmem>>, vector<1x128xf32>
    %127 = vector.broadcast %126 : vector<1x128xf32> to vector<128x128xf32>
    %128 = arith.addf %125, %127 : vector<128x128xf32>
    %129 = arith.truncf %119 : vector<128x128xf32> to vector<128x128xbf16>
    %c10_74 = arith.constant 10 : index
    %c0_75 = arith.constant 0 : index
    %c0_76 = arith.constant 0 : index
    %130 = vector.load %arg3[%c10_74, %c0_75, %c0_76] : memref<20x128x128xbf16, #tpu.memory_space<vmem>>, vector<1x128x128xbf16>
    %131 = vector.shape_cast %130 : vector<1x128x128xbf16> to vector<128x128xbf16>
    %cst_77 = arith.constant dense<0.000000e+00> : vector<128x128xf32>
    %132 = tpu.matmul %129, %131, %cst_77 {dimension_numbers = #tpu.dot_dimension_numbers<[1], [0], [0], [1], [0, 0, 1, 1], [], []>} : vector<128x128xbf16>, vector<128x128xbf16>, vector<128x128xf32> -> vector<128x128xf32>
    %133 = arith.addf %128, %132 : vector<128x128xf32>
    %c17 = arith.constant 17 : index
    %c0_78 = arith.constant 0 : index
    %134 = vector.load %arg4[%c17, %c0_78] : memref<35x128xf32, #tpu.memory_space<vmem>>, vector<1x128xf32>
    %135 = vector.broadcast %134 : vector<1x128xf32> to vector<128x128xf32>
    %136 = arith.mulf %133, %135 : vector<128x128xf32>
    %c18 = arith.constant 18 : index
    %c0_79 = arith.constant 0 : index
    %137 = vector.load %arg4[%c18, %c0_79] : memref<35x128xf32, #tpu.memory_space<vmem>>, vector<1x128xf32>
    %138 = vector.broadcast %137 : vector<1x128xf32> to vector<128x128xf32>
    %139 = arith.addf %136, %138 : vector<128x128xf32>
    %140 = arith.truncf %139 : vector<128x128xf32> to vector<128x128xbf16>
    %c11_80 = arith.constant 11 : index
    %c0_81 = arith.constant 0 : index
    %c0_82 = arith.constant 0 : index
    %141 = vector.load %arg3[%c11_80, %c0_81, %c0_82] : memref<20x128x128xbf16, #tpu.memory_space<vmem>>, vector<1x128x128xbf16>
    %142 = vector.shape_cast %141 : vector<1x128x128xbf16> to vector<128x128xbf16>
    %cst_83 = arith.constant dense<0.000000e+00> : vector<128x128xf32>
    %143 = tpu.matmul %140, %142, %cst_83 {dimension_numbers = #tpu.dot_dimension_numbers<[1], [0], [0], [1], [0, 0, 1, 1], [], []>} : vector<128x128xbf16>, vector<128x128xbf16>, vector<128x128xf32> -> vector<128x128xf32>
    %c19 = arith.constant 19 : index
    %c0_84 = arith.constant 0 : index
    %144 = vector.load %arg4[%c19, %c0_84] : memref<35x128xf32, #tpu.memory_space<vmem>>, vector<1x128xf32>
    %145 = vector.broadcast %144 : vector<1x128xf32> to vector<128x128xf32>
    %146 = arith.addf %143, %145 : vector<128x128xf32>
    %cst_85 = arith.constant 5.000000e-01 : f32
    %147 = vector.broadcast %cst_85 : f32 to vector<128x128xf32>
    %148 = arith.mulf %147, %146 : vector<128x128xf32>
    %cst_86 = arith.constant 0.707106769 : f32
    %149 = vector.broadcast %cst_86 : f32 to vector<128x128xf32>
    %150 = arith.mulf %146, %149 : vector<128x128xf32>
    %151 = math.erf %150 : vector<128x128xf32>
    %cst_87 = arith.constant 1.000000e+00 : f32
    %152 = vector.broadcast %cst_87 : f32 to vector<128x128xf32>
    %153 = arith.addf %152, %151 : vector<128x128xf32>
    %154 = arith.mulf %148, %153 : vector<128x128xf32>
    %155 = arith.truncf %154 : vector<128x128xf32> to vector<128x128xbf16>
    %c12_88 = arith.constant 12 : index
    %c0_89 = arith.constant 0 : index
    %c0_90 = arith.constant 0 : index
    %156 = vector.load %arg3[%c12_88, %c0_89, %c0_90] : memref<20x128x128xbf16, #tpu.memory_space<vmem>>, vector<1x128x128xbf16>
    %157 = vector.shape_cast %156 : vector<1x128x128xbf16> to vector<128x128xbf16>
    %cst_91 = arith.constant dense<0.000000e+00> : vector<128x128xf32>
    %158 = tpu.matmul %155, %157, %cst_91 {dimension_numbers = #tpu.dot_dimension_numbers<[1], [0], [0], [1], [0, 0, 1, 1], [], []>} : vector<128x128xbf16>, vector<128x128xbf16>, vector<128x128xf32> -> vector<128x128xf32>
    %c20 = arith.constant 20 : index
    %c0_92 = arith.constant 0 : index
    %159 = vector.load %arg4[%c20, %c0_92] : memref<35x128xf32, #tpu.memory_space<vmem>>, vector<1x128xf32>
    %160 = vector.broadcast %159 : vector<1x128xf32> to vector<128x128xf32>
    %161 = arith.addf %158, %160 : vector<128x128xf32>
    %162 = arith.addf %139, %161 : vector<128x128xf32>
    %c21 = arith.constant 21 : index
    %c0_93 = arith.constant 0 : index
    %163 = vector.load %arg4[%c21, %c0_93] : memref<35x128xf32, #tpu.memory_space<vmem>>, vector<1x128xf32>
    %164 = vector.broadcast %163 : vector<1x128xf32> to vector<128x128xf32>
    %165 = arith.mulf %162, %164 : vector<128x128xf32>
    %c22 = arith.constant 22 : index
    %c0_94 = arith.constant 0 : index
    %166 = vector.load %arg4[%c22, %c0_94] : memref<35x128xf32, #tpu.memory_space<vmem>>, vector<1x128xf32>
    %167 = vector.broadcast %166 : vector<1x128xf32> to vector<128x128xf32>
    %168 = arith.addf %165, %167 : vector<128x128xf32>
    %169 = arith.truncf %168 : vector<128x128xf32> to vector<128x128xbf16>
    %cst_95 = arith.constant dense<0.000000e+00> : vector<128x128xf32>
    %170 = tpu.matmul %0, %169, %cst_95 {dimension_numbers = #tpu.dot_dimension_numbers<[1], [0], [0], [1], [0, 0, 1, 1], [], []>} : vector<128x128xbf16>, vector<128x128xbf16>, vector<128x128xf32> -> vector<128x128xf32>
    %171 = arith.truncf %170 : vector<128x128xf32> to vector<128x128xbf16>
    %c13_96 = arith.constant 13 : index
    %c0_97 = arith.constant 0 : index
    %c0_98 = arith.constant 0 : index
    %172 = vector.load %arg3[%c13_96, %c0_97, %c0_98] : memref<20x128x128xbf16, #tpu.memory_space<vmem>>, vector<1x128x128xbf16>
    %173 = vector.shape_cast %172 : vector<1x128x128xbf16> to vector<128x128xbf16>
    %cst_99 = arith.constant dense<0.000000e+00> : vector<128x128xf32>
    %174 = tpu.matmul %171, %173, %cst_99 {dimension_numbers = #tpu.dot_dimension_numbers<[1], [0], [0], [1], [0, 0, 1, 1], [], []>} : vector<128x128xbf16>, vector<128x128xbf16>, vector<128x128xf32> -> vector<128x128xf32>
    %c23 = arith.constant 23 : index
    %c0_100 = arith.constant 0 : index
    %175 = vector.load %arg4[%c23, %c0_100] : memref<35x128xf32, #tpu.memory_space<vmem>>, vector<1x128xf32>
    %176 = vector.broadcast %175 : vector<1x128xf32> to vector<128x128xf32>
    %177 = arith.addf %174, %176 : vector<128x128xf32>
    %178 = arith.truncf %168 : vector<128x128xf32> to vector<128x128xbf16>
    %c14_101 = arith.constant 14 : index
    %c0_102 = arith.constant 0 : index
    %c0_103 = arith.constant 0 : index
    %179 = vector.load %arg3[%c14_101, %c0_102, %c0_103] : memref<20x128x128xbf16, #tpu.memory_space<vmem>>, vector<1x128x128xbf16>
    %180 = vector.shape_cast %179 : vector<1x128x128xbf16> to vector<128x128xbf16>
    %cst_104 = arith.constant dense<0.000000e+00> : vector<128x128xf32>
    %181 = tpu.matmul %178, %180, %cst_104 {dimension_numbers = #tpu.dot_dimension_numbers<[1], [0], [0], [1], [0, 0, 1, 1], [], []>} : vector<128x128xbf16>, vector<128x128xbf16>, vector<128x128xf32> -> vector<128x128xf32>
    %182 = arith.addf %177, %181 : vector<128x128xf32>
    %c24 = arith.constant 24 : index
    %c0_105 = arith.constant 0 : index
    %183 = vector.load %arg4[%c24, %c0_105] : memref<35x128xf32, #tpu.memory_space<vmem>>, vector<1x128xf32>
    %184 = vector.broadcast %183 : vector<1x128xf32> to vector<128x128xf32>
    %185 = arith.mulf %182, %184 : vector<128x128xf32>
    %c25 = arith.constant 25 : index
    %c0_106 = arith.constant 0 : index
    %186 = vector.load %arg4[%c25, %c0_106] : memref<35x128xf32, #tpu.memory_space<vmem>>, vector<1x128xf32>
    %187 = vector.broadcast %186 : vector<1x128xf32> to vector<128x128xf32>
    %188 = arith.addf %185, %187 : vector<128x128xf32>
    %189 = arith.truncf %188 : vector<128x128xf32> to vector<128x128xbf16>
    %c15_107 = arith.constant 15 : index
    %c0_108 = arith.constant 0 : index
    %c0_109 = arith.constant 0 : index
    %190 = vector.load %arg3[%c15_107, %c0_108, %c0_109] : memref<20x128x128xbf16, #tpu.memory_space<vmem>>, vector<1x128x128xbf16>
    %191 = vector.shape_cast %190 : vector<1x128x128xbf16> to vector<128x128xbf16>
    %cst_110 = arith.constant dense<0.000000e+00> : vector<128x128xf32>
    %192 = tpu.matmul %189, %191, %cst_110 {dimension_numbers = #tpu.dot_dimension_numbers<[1], [0], [0], [1], [0, 0, 1, 1], [], []>} : vector<128x128xbf16>, vector<128x128xbf16>, vector<128x128xf32> -> vector<128x128xf32>
    %c26 = arith.constant 26 : index
    %c0_111 = arith.constant 0 : index
    %193 = vector.load %arg4[%c26, %c0_111] : memref<35x128xf32, #tpu.memory_space<vmem>>, vector<1x128xf32>
    %194 = vector.broadcast %193 : vector<1x128xf32> to vector<128x128xf32>
    %195 = arith.addf %192, %194 : vector<128x128xf32>
    %cst_112 = arith.constant 5.000000e-01 : f32
    %196 = vector.broadcast %cst_112 : f32 to vector<128x128xf32>
    %197 = arith.mulf %196, %195 : vector<128x128xf32>
    %cst_113 = arith.constant 0.707106769 : f32
    %198 = vector.broadcast %cst_113 : f32 to vector<128x128xf32>
    %199 = arith.mulf %195, %198 : vector<128x128xf32>
    %200 = math.erf %199 : vector<128x128xf32>
    %cst_114 = arith.constant 1.000000e+00 : f32
    %201 = vector.broadcast %cst_114 : f32 to vector<128x128xf32>
    %202 = arith.addf %201, %200 : vector<128x128xf32>
    %203 = arith.mulf %197, %202 : vector<128x128xf32>
    %204 = arith.truncf %203 : vector<128x128xf32> to vector<128x128xbf16>
    %c16_115 = arith.constant 16 : index
    %c0_116 = arith.constant 0 : index
    %c0_117 = arith.constant 0 : index
    %205 = vector.load %arg3[%c16_115, %c0_116, %c0_117] : memref<20x128x128xbf16, #tpu.memory_space<vmem>>, vector<1x128x128xbf16>
    %206 = vector.shape_cast %205 : vector<1x128x128xbf16> to vector<128x128xbf16>
    %cst_118 = arith.constant dense<0.000000e+00> : vector<128x128xf32>
    %207 = tpu.matmul %204, %206, %cst_118 {dimension_numbers = #tpu.dot_dimension_numbers<[1], [0], [0], [1], [0, 0, 1, 1], [], []>} : vector<128x128xbf16>, vector<128x128xbf16>, vector<128x128xf32> -> vector<128x128xf32>
    %c27 = arith.constant 27 : index
    %c0_119 = arith.constant 0 : index
    %208 = vector.load %arg4[%c27, %c0_119] : memref<35x128xf32, #tpu.memory_space<vmem>>, vector<1x128xf32>
    %209 = vector.broadcast %208 : vector<1x128xf32> to vector<128x128xf32>
    %210 = arith.addf %207, %209 : vector<128x128xf32>
    %211 = arith.addf %188, %210 : vector<128x128xf32>
    %c28 = arith.constant 28 : index
    %c0_120 = arith.constant 0 : index
    %212 = vector.load %arg4[%c28, %c0_120] : memref<35x128xf32, #tpu.memory_space<vmem>>, vector<1x128xf32>
    %213 = vector.broadcast %212 : vector<1x128xf32> to vector<128x128xf32>
    %214 = arith.mulf %211, %213 : vector<128x128xf32>
    %c29 = arith.constant 29 : index
    %c0_121 = arith.constant 0 : index
    %215 = vector.load %arg4[%c29, %c0_121] : memref<35x128xf32, #tpu.memory_space<vmem>>, vector<1x128xf32>
    %216 = vector.broadcast %215 : vector<1x128xf32> to vector<128x128xf32>
    %217 = arith.addf %214, %216 : vector<128x128xf32>
    %c30 = arith.constant 30 : index
    %c0_122 = arith.constant 0 : index
    %218 = vector.load %arg4[%c30, %c0_122] : memref<35x128xf32, #tpu.memory_space<vmem>>, vector<1x128xf32>
    %219 = vector.broadcast %218 : vector<1x128xf32> to vector<128x128xf32>
    %220 = arith.mulf %217, %219 : vector<128x128xf32>
    %c31 = arith.constant 31 : index
    %c0_123 = arith.constant 0 : index
    %221 = vector.load %arg4[%c31, %c0_123] : memref<35x128xf32, #tpu.memory_space<vmem>>, vector<1x128xf32>
    %222 = vector.broadcast %221 : vector<1x128xf32> to vector<128x128xf32>
    %223 = arith.addf %220, %222 : vector<128x128xf32>
    %224 = arith.truncf %223 : vector<128x128xf32> to vector<128x128xbf16>
    %c17_124 = arith.constant 17 : index
    %c0_125 = arith.constant 0 : index
    %c0_126 = arith.constant 0 : index
    %225 = vector.load %arg3[%c17_124, %c0_125, %c0_126] : memref<20x128x128xbf16, #tpu.memory_space<vmem>>, vector<1x128x128xbf16>
    %226 = vector.shape_cast %225 : vector<1x128x128xbf16> to vector<128x128xbf16>
    %cst_127 = arith.constant dense<0.000000e+00> : vector<128x128xf32>
    %227 = tpu.matmul %224, %226, %cst_127 {dimension_numbers = #tpu.dot_dimension_numbers<[1], [0], [0], [1], [0, 0, 1, 1], [], []>} : vector<128x128xbf16>, vector<128x128xbf16>, vector<128x128xf32> -> vector<128x128xf32>
    %c32 = arith.constant 32 : index
    %c0_128 = arith.constant 0 : index
    %228 = vector.load %arg4[%c32, %c0_128] : memref<35x128xf32, #tpu.memory_space<vmem>>, vector<1x128xf32>
    %229 = vector.broadcast %228 : vector<1x128xf32> to vector<128x128xf32>
    %230 = arith.addf %227, %229 : vector<128x128xf32>
    %cst_129 = arith.constant 5.000000e-01 : f32
    %231 = vector.broadcast %cst_129 : f32 to vector<128x128xf32>
    %232 = arith.mulf %231, %230 : vector<128x128xf32>
    %cst_130 = arith.constant 0.707106769 : f32
    %233 = vector.broadcast %cst_130 : f32 to vector<128x128xf32>
    %234 = arith.mulf %230, %233 : vector<128x128xf32>
    %235 = math.erf %234 : vector<128x128xf32>
    %cst_131 = arith.constant 1.000000e+00 : f32
    %236 = vector.broadcast %cst_131 : f32 to vector<128x128xf32>
    %237 = arith.addf %236, %235 : vector<128x128xf32>
    %238 = arith.mulf %232, %237 : vector<128x128xf32>
    %239 = arith.truncf %238 : vector<128x128xf32> to vector<128x128xbf16>
    %c18_132 = arith.constant 18 : index
    %c0_133 = arith.constant 0 : index
    %c0_134 = arith.constant 0 : index
    %240 = vector.load %arg3[%c18_132, %c0_133, %c0_134] : memref<20x128x128xbf16, #tpu.memory_space<vmem>>, vector<1x128x128xbf16>
    %241 = vector.shape_cast %240 : vector<1x128x128xbf16> to vector<128x128xbf16>
    %cst_135 = arith.constant dense<0.000000e+00> : vector<128x128xf32>
    %242 = tpu.matmul %239, %241, %cst_135 {dimension_numbers = #tpu.dot_dimension_numbers<[1], [0], [0], [1], [0, 0, 1, 1], [], []>} : vector<128x128xbf16>, vector<128x128xbf16>, vector<128x128xf32> -> vector<128x128xf32>
    %c33 = arith.constant 33 : index
    %c0_136 = arith.constant 0 : index
    %243 = vector.load %arg4[%c33, %c0_136] : memref<35x128xf32, #tpu.memory_space<vmem>>, vector<1x128xf32>
    %244 = vector.broadcast %243 : vector<1x128xf32> to vector<128x128xf32>
    %245 = arith.addf %242, %244 : vector<128x128xf32>
    %cst_137 = arith.constant 5.000000e-01 : f32
    %246 = vector.broadcast %cst_137 : f32 to vector<128x128xf32>
    %247 = arith.mulf %246, %245 : vector<128x128xf32>
    %cst_138 = arith.constant 0.707106769 : f32
    %248 = vector.broadcast %cst_138 : f32 to vector<128x128xf32>
    %249 = arith.mulf %245, %248 : vector<128x128xf32>
    %250 = math.erf %249 : vector<128x128xf32>
    %cst_139 = arith.constant 1.000000e+00 : f32
    %251 = vector.broadcast %cst_139 : f32 to vector<128x128xf32>
    %252 = arith.addf %251, %250 : vector<128x128xf32>
    %253 = arith.mulf %247, %252 : vector<128x128xf32>
    %254 = arith.truncf %253 : vector<128x128xf32> to vector<128x128xbf16>
    %c19_140 = arith.constant 19 : index
    %c0_141 = arith.constant 0 : index
    %c0_142 = arith.constant 0 : index
    %255 = vector.load %arg3[%c19_140, %c0_141, %c0_142] : memref<20x128x128xbf16, #tpu.memory_space<vmem>>, vector<1x128x128xbf16>
    %256 = vector.shape_cast %255 : vector<1x128x128xbf16> to vector<128x128xbf16>
    %cst_143 = arith.constant dense<0.000000e+00> : vector<128x128xf32>
    %257 = tpu.matmul %254, %256, %cst_143 {dimension_numbers = #tpu.dot_dimension_numbers<[1], [0], [0], [1], [0, 0, 1, 1], [], []>} : vector<128x128xbf16>, vector<128x128xbf16>, vector<128x128xf32> -> vector<128x128xf32>
    %c34 = arith.constant 34 : index
    %c0_144 = arith.constant 0 : index
    %258 = vector.load %arg4[%c34, %c0_144] : memref<35x128xf32, #tpu.memory_space<vmem>>, vector<1x128xf32>
    %259 = vector.broadcast %258 : vector<1x128xf32> to vector<128x128xf32>
    %260 = arith.addf %257, %259 : vector<128x128xf32>
    %c0_145 = arith.constant 0 : index
    %c0_146 = arith.constant 0 : index
    %261 = vector.load %arg5[%c0_145, %c0_146] : memref<128x128xf32, #tpu.memory_space<vmem>>, vector<128x128xf32>
    tpu.vector_store %arg5[%c0_145, %c0_146], %260 {strides = array<i32>} : memref<128x128xf32, #tpu.memory_space<vmem>>, vector<128x128xf32>,
    return
  }
}

</mosaic_0001>

<llo_original>
// kernel: tpu_custom_call.1
$region0: #{tpu_custom_call.1}
  #allocation0 [shape = 'u32[]', space=smem, size = 0x4, offset = 0x4, fixed_abs, tag = 'smem constant byte address 0x4 - core index']
  #allocation1 [shape = 'u32[144,128]{1,0:T(1,128)}', space=vmem, size = 0x12000, scoped, tag = 'internal scratch']
  %s0 = inlined_call_operand.hbm [shape: bf16[128,128], index: 0, kind: input, shape index: {}]
  %s1 = inlined_call_operand.hbm [shape: bf16[128,128], index: 1, kind: input, shape index: {}]
  %s2 = inlined_call_operand.hbm [shape: f32[128,128], index: 2, kind: input, shape index: {}]
  %s3 = inlined_call_operand.hbm [shape: bf16[20,128,128], index: 3, kind: input, shape index: {}]
  %s4 = inlined_call_operand.hbm [shape: f32[35,128], index: 4, kind: input, shape index: {}]
  %s5 = inlined_call_operand.hbm [shape: f32[128,128], index: 5, kind: output, shape index: {}]
  %s6 = sld [smem:[#allocation0]]
  $region50: #{tpu_custom_call.1} parent=0
    _
  %s8 = ssub.s32 1, %s6
  %s9 = scalar_select 0, %s8, %s6
  $region1: #{tpu_custom_call.1} parent=0
    #allocation2 [shape = 'u8[32768]{0}', space=vmem, size = 0x8000, scoped, tag = 'input window, operand 0, single buffered']
    #allocation3 [shape = 's32[1]{0}', space=sflag, size = 0x4, scoped, tag = 'scoped memory for tpu_custom_call.1']
    #allocation4 [shape = 's32[1]{0}', space=sflag, size = 0x4, scoped, tag = 'scoped memory for tpu_custom_call.1']
    #allocation5 [shape = 'u8[32768]{0}', space=vmem, size = 0x8000, scoped, tag = 'input window, operand 1, single buffered']
    #allocation6 [shape = 's32[1]{0}', space=sflag, size = 0x4, scoped, tag = 'scoped memory for tpu_custom_call.1']
    #allocation7 [shape = 'u8[65536]{0}', space=vmem, size = 0x10000, scoped, tag = 'input window, operand 2, single buffered']
    #allocation8 [shape = 'u8[655360]{0}', space=vmem, size = 0xa0000, scoped, tag = 'input window, operand 3, single buffered']
    #allocation9 [shape = 's32[1]{0}', space=sflag, size = 0x4, scoped, tag = 'scoped memory for tpu_custom_call.1']
    #allocation10 [shape = 'u8[20480]{0}', space=vmem, size = 0x5000, scoped, tag = 'input window, operand 4, single buffered']
    #allocation11 [shape = 'u8[65536]{0}', space=vmem, size = 0x10000, scoped, tag = 'output window, operand 0, single buffered']
    %10 = vsyncpa [#allocation3], 0
    %11 = vsyncpa [#allocation6], 0
    %12 = vsyncpa [#allocation9], 0
    %13 = vsyncpa [#allocation4], 0
    // Predicated region
    $region2: #{tpu_custom_call.1} parent=1 // pred_check
      _
    $region3: #{tpu_custom_call.1} parent=1 // pred_check_branch
      %15 = sbr.rel (0) target = $region5
    $region4: #{tpu_custom_call.1} parent=1 // pred_region
      %s17 = ssub.s32 1024, 1024
      %18 = vsyncadd [#allocation3], %s17
      %s19 = sshll.u32 [#allocation2], 4
      %s20 = int_to_ptr.vmem [resolvable:$true] %s19
      %25 = dma.hbm_to_vmem [thread:$0]  %s0, 1024, %s20, [#allocation3], 64, 64, 4
    $region5: #{tpu_custom_call.1} parent=1 // pred_fallthru
      _
    // Predicated region
    $region6: #{tpu_custom_call.1} parent=1 // pred_check
      _
    $region7: #{tpu_custom_call.1} parent=1 // pred_check_branch
      %27 = sbr.rel (0) target = $region9
    $region8: #{tpu_custom_call.1} parent=1 // pred_region
      %s29 = ssub.s32 1024, 1024
      %30 = vsyncadd [#allocation6], %s29
      %s31 = sshll.u32 [#allocation5], 4
      %s32 = int_to_ptr.vmem [resolvable:$true] %s31
      %37 = dma.hbm_to_vmem [thread:$0]  %s1, 1024, %s32, [#allocation6], 64, 64, 4
    $region9: #{tpu_custom_call.1} parent=1 // pred_fallthru
      _
    // Predicated region
    $region10: #{tpu_custom_call.1} parent=1 // pred_check
      _
    $region11: #{tpu_custom_call.1} parent=1 // pred_check_branch
      %39 = sbr.rel (0) target = $region13
    $region12: #{tpu_custom_call.1} parent=1 // pred_region
      %s41 = ssub.s32 2048, 2048
      %42 = vsyncadd [#allocation6], %s41
      %s43 = sshll.u32 [#allocation7], 4
      %s44 = int_to_ptr.vmem [resolvable:$true] %s43
      %49 = dma.hbm_to_vmem [thread:$0]  %s2, 2048, %s44, [#allocation6], 128, 128, 8
    $region13: #{tpu_custom_call.1} parent=1 // pred_fallthru
      _
    // Predicated region
    $region14: #{tpu_custom_call.1} parent=1 // pred_check
      _
    $region15: #{tpu_custom_call.1} parent=1 // pred_check_branch
      %51 = sbr.rel (0) target = $region17
    $region16: #{tpu_custom_call.1} parent=1 // pred_region
      %s53 = ssub.s32 20480, 20480
      %54 = vsyncadd [#allocation9], %s53
      %s55 = sshll.u32 [#allocation8], 4
      %s56 = int_to_ptr.vmem [resolvable:$true] %s55
      %61 = dma.hbm_to_vmem [thread:$0]  %s3, 20480, %s56, [#allocation9], 64, 64, 4
    $region17: #{tpu_custom_call.1} parent=1 // pred_fallthru
      _
    // Predicated region
    $region18: #{tpu_custom_call.1} parent=1 // pred_check
      _
    $region19: #{tpu_custom_call.1} parent=1 // pred_check_branch
      %63 = sbr.rel (0) target = $region21
    $region20: #{tpu_custom_call.1} parent=1 // pred_region
      %s65 = ssub.s32 640, 640
      %66 = vsyncadd [#allocation9], %s65
      %s67 = sshll.u32 [#allocation10], 4
      %s68 = int_to_ptr.vmem [resolvable:$true] %s67
      %73 = dma.hbm_to_vmem [thread:$0]  %s4, 640, %s68, [#allocation9], 128, 128, 8
    $region21: #{tpu_custom_call.1} parent=1 // pred_fallthru
      _
    // Predicated region
    $region22: #{tpu_custom_call.1} parent=1 // pred_check
      _
    $region23: #{tpu_custom_call.1} parent=1 // pred_check_branch
      %75 = sbr.rel (0) target = $region25
    $region24: #{tpu_custom_call.1} parent=1 // pred_region
      %76 = dma.done [#allocation3], 1024
    $region25: #{tpu_custom_call.1} parent=1 // pred_fallthru
      _
    // Predicated region
    $region26: #{tpu_custom_call.1} parent=1 // pred_check
      _
    $region27: #{tpu_custom_call.1} parent=1 // pred_check_branch
      %78 = sbr.rel (0) target = $region29
    $region28: #{tpu_custom_call.1} parent=1 // pred_region
      %79 = dma.done [#allocation6], 1024
    $region29: #{tpu_custom_call.1} parent=1 // pred_fallthru
      _
    // Predicated region
    $region30: #{tpu_custom_call.1} parent=1 // pred_check
      _
    $region31: #{tpu_custom_call.1} parent=1 // pred_check_branch
      %81 = sbr.rel (0) target = $region33
    $region32: #{tpu_custom_call.1} parent=1 // pred_region
      %82 = dma.done [#allocation6], 2048
    $region33: #{tpu_custom_call.1} parent=1 // pred_fallthru
      _
    // Predicated region
    $region34: #{tpu_custom_call.1} parent=1 // pred_check
      _
    $region35: #{tpu_custom_call.1} parent=1 // pred_check_branch
      %84 = sbr.rel (0) target = $region37
    $region36: #{tpu_custom_call.1} parent=1 // pred_region
      %85 = dma.done [#allocation9], 20480
    $region37: #{tpu_custom_call.1} parent=1 // pred_fallthru
      _
    // Predicated region
    $region38: #{tpu_custom_call.1} parent=1 // pred_check
      _
    $region39: #{tpu_custom_call.1} parent=1 // pred_check_branch
      %87 = sbr.rel (0) target = $region41
    $region40: #{tpu_custom_call.1} parent=1 // pred_region
      %88 = dma.done [#allocation9], 640
    $region41: #{tpu_custom_call.1} parent=1 // pred_fallthru
      _
    %v90 = vld [vmem:[#allocation2] sm:$0xf]
    %v91 = vld [vmem:[#allocation2 + $0x4] sm:$0xf]
    %v92 = vld [vmem:[#allocation2 + $0x8] sm:$0xf]
    %v93 = vld [vmem:[#allocation2 + $0xc] sm:$0xf]
    %v94 = vld [vmem:[#allocation2 + $0x10] sm:$0xf]
    %v95 = vld [vmem:[#allocation2 + $0x14] sm:$0xf]
    %v96 = vld [vmem:[#allocation2 + $0x18] sm:$0xf]
    %v97 = vld [vmem:[#allocation2 + $0x1c] sm:$0xf]
    %v98 = vld [vmem:[#allocation2 + $0x20] sm:$0xf]
    %v99 = vld [vmem:[#allocation2 + $0x24] sm:$0xf]
    %v100 = vld [vmem:[#allocation2 + $0x28] sm:$0xf]
    %v101 = vld [vmem:[#allocation2 + $0x2c] sm:$0xf]
    %v102 = vld [vmem:[#allocation2 + $0x30] sm:$0xf]
    %v103 = vld [vmem:[#allocation2 + $0x34] sm:$0xf]
    %v104 = vld [vmem:[#allocation2 + $0x38] sm:$0xf]
    %v105 = vld [vmem:[#allocation2 + $0x3c] sm:$0xf]
    %v106 = vld [vmem:[#allocation5] sm:$0xf]
    %v107 = vld [vmem:[#allocation5 + $0x4] sm:$0xf]
    %v108 = vld [vmem:[#allocation5 + $0x8] sm:$0xf]
    %v109 = vld [vmem:[#allocation5 + $0xc] sm:$0xf]
    %v110 = vld [vmem:[#allocation5 + $0x10] sm:$0xf]
    %v111 = vld [vmem:[#allocation5 + $0x14] sm:$0xf]
    %v112 = vld [vmem:[#allocation5 + $0x18] sm:$0xf]
    %v113 = vld [vmem:[#allocation5 + $0x1c] sm:$0xf]
    %v114 = vld [vmem:[#allocation5 + $0x20] sm:$0xf]
    %v115 = vld [vmem:[#allocation5 + $0x24] sm:$0xf]
    %v116 = vld [vmem:[#allocation5 + $0x28] sm:$0xf]
    %v117 = vld [vmem:[#allocation5 + $0x2c] sm:$0xf]
    %v118 = vld [vmem:[#allocation5 + $0x30] sm:$0xf]
    %v119 = vld [vmem:[#allocation5 + $0x34] sm:$0xf]
    %v120 = vld [vmem:[#allocation5 + $0x38] sm:$0xf]
    %v121 = vld [vmem:[#allocation5 + $0x3c] sm:$0xf]
    %v122 = vld [vmem:[#allocation7] sm:$0xff]
    %v123 = vld [vmem:[#allocation7 + $0x8] sm:$0xff]
    %v124 = vld [vmem:[#allocation7 + $0x10] sm:$0xff]
    %v125 = vld [vmem:[#allocation7 + $0x18] sm:$0xff]
    %v126 = vld [vmem:[#allocation7 + $0x20] sm:$0xff]
    %v127 = vld [vmem:[#allocation7 + $0x28] sm:$0xff]
    %v128 = vld [vmem:[#allocation7 + $0x30] sm:$0xff]
    %v129 = vld [vmem:[#allocation7 + $0x38] sm:$0xff]
    %v130 = vld [vmem:[#allocation7 + $0x40] sm:$0xff]
    %v131 = vld [vmem:[#allocation7 + $0x48] sm:$0xff]
    %v132 = vld [vmem:[#allocation7 + $0x50] sm:$0xff]
    %v133 = vld [vmem:[#allocation7 + $0x58] sm:$0xff]
    %v134 = vld [vmem:[#allocation7 + $0x60] sm:$0xff]
    %v135 = vld [vmem:[#allocation7 + $0x68] sm:$0xff]
    %v136 = vld [vmem:[#allocation7 + $0x70] sm:$0xff]
    %v137 = vld [vmem:[#allocation7 + $0x78] sm:$0xff]
    %v138 = vpack.c.bf16 %v123, %v122
    %v139 = vpack.c.bf16 %v125, %v124
    %v140 = vpack.c.bf16 %v127, %v126
    %v141 = vpack.c.bf16 %v129, %v128
    %v142 = vpack.c.bf16 %v131, %v130
    %v143 = vpack.c.bf16 %v133, %v132
    %v144 = vpack.c.bf16 %v135, %v134
    %v145 = vpack.c.bf16 %v137, %v136
    %v146 = vld [vmem:[#allocation8] sm:$0xf]
    %v147 = vld [vmem:[#allocation8 + $0x4] sm:$0xf]
    %v148 = vld [vmem:[#allocation8 + $0x8] sm:$0xf]
    %v149 = vld [vmem:[#allocation8 + $0xc] sm:$0xf]
    %v150 = vld [vmem:[#allocation8 + $0x10] sm:$0xf]
    %v151 = vld [vmem:[#allocation8 + $0x14] sm:$0xf]
    %v152 = vld [vmem:[#allocation8 + $0x18] sm:$0xf]
    %v153 = vld [vmem:[#allocation8 + $0x1c] sm:$0xf]
    %v154 = vld [vmem:[#allocation8 + $0x20] sm:$0xf]
    %v155 = vld [vmem:[#allocation8 + $0x24] sm:$0xf]
    %v156 = vld [vmem:[#allocation8 + $0x28] sm:$0xf]
    %v157 = vld [vmem:[#allocation8 + $0x2c] sm:$0xf]
    %v158 = vld [vmem:[#allocation8 + $0x30] sm:$0xf]
    %v159 = vld [vmem:[#allocation8 + $0x34] sm:$0xf]
    %v160 = vld [vmem:[#allocation8 + $0x38] sm:$0xf]
    %v161 = vld [vmem:[#allocation8 + $0x3c] sm:$0xf]
    %v162 = vld [vmem:[#allocation10] sm:$0x1]
    %v163 = vlaneseq
    %v164 = vshrl.u32 %v163, 7
    %v165 = vsub.s32 0, %v164
    %v166 = vrot.slane %v162, %v165
    %v183 = vunpack.c.l.b16 %v146
    %v184 = vunpack.c.l.b16 %v147
    %v185 = vunpack.c.l.b16 %v148
    %v186 = vunpack.c.l.b16 %v149
    %v187 = vunpack.c.l.b16 %v150
    %v188 = vunpack.c.l.b16 %v151
    %v189 = vunpack.c.l.b16 %v152
    %v190 = vunpack.c.l.b16 %v153
    %v191 = vunpack.c.l.b16 %v154
    %v192 = vunpack.c.l.b16 %v155
    %v193 = vunpack.c.l.b16 %v156
    %v194 = vunpack.c.l.b16 %v157
    %v195 = vunpack.c.l.b16 %v158
    %v196 = vunpack.c.l.b16 %v159
    %v197 = vunpack.c.l.b16 %v160
    %v198 = vunpack.c.l.b16 %v161
    %v199 = vpack.c.b16 %v184, %v183
    %v200 = vpack.c.b16 %v186, %v185
    %v201 = vpack.c.b16 %v188, %v187
    %v202 = vpack.c.b16 %v190, %v189
    %v203 = vpack.c.b16 %v192, %v191
    %v204 = vpack.c.b16 %v194, %v193
    %v205 = vpack.c.b16 %v196, %v195
    %v206 = vpack.c.b16 %v198, %v197
    %215 = vmatprep.subr.bf16.mxu0 0
    %216 = vmatpush1.bf16.msra.mxu0 %v199
    %217 = vmatprep.subr.bf16.mxu0 0
    %218 = vmatpush1.bf16.msra.mxu0 %v200
    %219 = vmatprep.subr.bf16.mxu0 0
    %220 = vmatpush1.bf16.msra.mxu0 %v201
    %221 = vmatprep.subr.bf16.mxu0 0
    %222 = vmatpush1.bf16.msra.mxu0 %v202
    %223 = vmatprep.subr.bf16.mxu0 0
    %224 = vmatpush1.bf16.msra.mxu0 %v203
    %225 = vmatprep.subr.bf16.mxu0 0
    %226 = vmatpush1.bf16.msra.mxu0 %v204
    %227 = vmatprep.subr.bf16.mxu0 0
    %228 = vmatpush1.bf16.msra.mxu0 %v205
    %229 = vmatprep.subr.bf16.mxu0 0
    %230 = vmatpush1.bf16.msra.mxu0 %v206
    %231 = vmatprep.subr.bf16.mxu0 0
    %232 = vmatpush1.bf16.msra.mxu0 0
    %233 = vmatprep.subr.bf16.mxu0 0
    %234 = vmatpush1.bf16.msra.mxu0 0
    %235 = vmatprep.subr.bf16.mxu0 0
    %236 = vmatpush1.bf16.msra.mxu0 0
    %237 = vmatprep.subr.bf16.mxu0 0
    %238 = vmatpush1.bf16.msra.mxu0 0
    %239 = vmatprep.subr.bf16.mxu0 0
    %240 = vmatpush1.bf16.msra.mxu0 0
    %241 = vmatprep.subr.bf16.mxu0 0
    %242 = vmatpush1.bf16.msra.mxu0 0
    %243 = vmatprep.subr.bf16.mxu0 0
    %244 = vmatpush1.bf16.msra.mxu0 0
    %245 = vmatprep.subr.bf16.mxu0 0
    %246 = vmatpush1.bf16.msra.mxu0 0
    %247 = vmatprep.mubr.bf16.mxu0 0
    %248 = vmatmul.mubr.bf16.gmra.mrb[0].mxu0 %v138
    %v249 = vpop.f32.mrb[0].mxu0
    %v250 = vadd.f32 %v166, %v249
    %v251 = vpop.f32.mrb[0].mxu0
    %v252 = vpop.f32.mrb[0].mxu0
    %v253 = vadd.f32 %v166, %v252
    %v254 = vpop.f32.mrb[0].mxu0
    %255 = vmatprep.mubr.bf16.mxu0 0
    %256 = vmatmul.mubr.bf16.gmra.mrb[0].mxu0 %v139
    %v257 = vpop.f32.mrb[0].mxu0
    %v258 = vadd.f32 %v166, %v257
    %v259 = vpop.f32.mrb[0].mxu0
    %v260 = vpop.f32.mrb[0].mxu0
    %v261 = vadd.f32 %v166, %v260
    %v262 = vpop.f32.mrb[0].mxu0
    %263 = vmatprep.mubr.bf16.mxu0 0
    %264 = vmatmul.mubr.bf16.gmra.mrb[0].mxu0 %v140
    %v265 = vpop.f32.mrb[0].mxu0
    %v266 = vadd.f32 %v166, %v265
    %v267 = vpop.f32.mrb[0].mxu0
    %v268 = vpop.f32.mrb[0].mxu0
    %v269 = vadd.f32 %v166, %v268
    %v270 = vpop.f32.mrb[0].mxu0
    %271 = vmatprep.mubr.bf16.mxu0 0
    %272 = vmatmul.mubr.bf16.gmra.mrb[0].mxu0 %v141
    %v273 = vpop.f32.mrb[0].mxu0
    %v274 = vadd.f32 %v166, %v273
    %v275 = vpop.f32.mrb[0].mxu0
    %v276 = vpop.f32.mrb[0].mxu0
    %v277 = vadd.f32 %v166, %v276
    %v278 = vpop.f32.mrb[0].mxu0
    %279 = vmatprep.mubr.bf16.mxu0 0
    %280 = vmatmul.mubr.bf16.gmra.mrb[0].mxu0 %v142
    %v281 = vpop.f32.mrb[0].mxu0
    %v282 = vadd.f32 %v166, %v281
    %v283 = vpop.f32.mrb[0].mxu0
    %v284 = vpop.f32.mrb[0].mxu0
    %v285 = vadd.f32 %v166, %v284
    %v286 = vpop.f32.mrb[0].mxu0
    %287 = vmatprep.mubr.bf16.mxu0 0
    %288 = vmatmul.mubr.bf16.gmra.mrb[0].mxu0 %v143
    %v289 = vpop.f32.mrb[0].mxu0
    %v290 = vadd.f32 %v166, %v289
    %v291 = vpop.f32.mrb[0].mxu0
    %v292 = vpop.f32.mrb[0].mxu0
    %v293 = vadd.f32 %v166, %v292
    %v294 = vpop.f32.mrb[0].mxu0
    %295 = vmatprep.mubr.bf16.mxu0 0
    %296 = vmatmul.mubr.bf16.gmra.mrb[0].mxu0 %v144
    %v297 = vpop.f32.mrb[0].mxu0
    %v298 = vadd.f32 %v166, %v297
    %v299 = vpop.f32.mrb[0].mxu0
    %v300 = vpop.f32.mrb[0].mxu0
    %v301 = vadd.f32 %v166, %v300
    %v302 = vpop.f32.mrb[0].mxu0
    %303 = vmatprep.mubr.bf16.mxu0 0
    %304 = vmatmul.mubr.bf16.gmra.mrb[0].mxu0 %v145
    %v305 = vpop.f32.mrb[0].mxu0
    %v306 = vadd.f32 %v166, %v305
    %v307 = vpop.f32.mrb[0].mxu0
    %v308 = vpop.f32.mrb[0].mxu0
    %v309 = vadd.f32 %v166, %v308
    %v310 = vpop.f32.mrb[0].mxu0
    %311 = vdwg.mxu0
    %v312 = vmul.f32 %v250, 0.5
    %v313 = vmul.f32 %v253, 0.5
    %v314 = vmul.f32 %v258, 0.5
    %v315 = vmul.f32 %v261, 0.5
    %v316 = vmul.f32 %v266, 0.5
    %v317 = vmul.f32 %v269, 0.5
    %v318 = vmul.f32 %v274, 0.5
    %v319 = vmul.f32 %v277, 0.5
    %v320 = vmul.f32 %v282, 0.5
    %v321 = vmul.f32 %v285, 0.5
    %v322 = vmul.f32 %v290, 0.5
    %v323 = vmul.f32 %v293, 0.5
    %v324 = vmul.f32 %v298, 0.5
    %v325 = vmul.f32 %v301, 0.5
    %v326 = vmul.f32 %v306, 0.5
    %v327 = vmul.f32 %v309, 0.5
    %v328 = vmul.f32 %v250, 0.70710677
    %v329 = vmul.f32 %v253, 0.70710677
    %v330 = vmul.f32 %v258, 0.70710677
    %v331 = vmul.f32 %v261, 0.70710677
    %v332 = vmul.f32 %v266, 0.70710677
    %v333 = vmul.f32 %v269, 0.70710677
    %v334 = vmul.f32 %v274, 0.70710677
    %v335 = vmul.f32 %v277, 0.70710677
    %v336 = vmul.f32 %v282, 0.70710677
    %v337 = vmul.f32 %v285, 0.70710677
    %v338 = vmul.f32 %v290, 0.70710677
    %v339 = vmul.f32 %v293, 0.70710677
    %v340 = vmul.f32 %v298, 0.70710677
    %v341 = vmul.f32 %v301, 0.70710677
    %v342 = vmul.f32 %v306, 0.70710677
    %v343 = vmul.f32 %v309, 0.70710677
    %v344 = verf.f32.pop %v328
    %v345 = verf.f32.pop %v329
    %v346 = verf.f32.pop %v330
    %v347 = verf.f32.pop %v331
    %v348 = verf.f32.pop %v332
    %v349 = verf.f32.pop %v333
    %v350 = verf.f32.pop %v334
    %v351 = verf.f32.pop %v335
    %v352 = verf.f32.pop %v336
    %v353 = verf.f32.pop %v337
    %v354 = verf.f32.pop %v338
    %v355 = verf.f32.pop %v339
    %v356 = verf.f32.pop %v340
    %v357 = verf.f32.pop %v341
    %v358 = verf.f32.pop %v342
    %v359 = verf.f32.pop %v343
    %v360 = vadd.f32 %v344, 1.0
    %v361 = vadd.f32 %v345, 1.0
    %v362 = vadd.f32 %v346, 1.0
    %v363 = vadd.f32 %v347, 1.0
    %v364 = vadd.f32 %v348, 1.0
    %v365 = vadd.f32 %v349, 1.0
    %v366 = vadd.f32 %v350, 1.0
    %v367 = vadd.f32 %v351, 1.0
    %v368 = vadd.f32 %v352, 1.0
    %v369 = vadd.f32 %v353, 1.0
    %v370 = vadd.f32 %v354, 1.0
    %v371 = vadd.f32 %v355, 1.0
    %v372 = vadd.f32 %v356, 1.0
    %v373 = vadd.f32 %v357, 1.0
    %v374 = vadd.f32 %v358, 1.0
    %v375 = vadd.f32 %v359, 1.0
    %v376 = vmul.f32 %v312, %v360
    %v377 = vmul.f32 %v313, %v361
    %v378 = vmul.f32 %v314, %v362
    %v379 = vmul.f32 %v315, %v363
    %v380 = vmul.f32 %v316, %v364
    %v381 = vmul.f32 %v317, %v365
    %v382 = vmul.f32 %v318, %v366
    %v383 = vmul.f32 %v319, %v367
    %v384 = vmul.f32 %v320, %v368
    %v385 = vmul.f32 %v321, %v369
    %v386 = vmul.f32 %v322, %v370
    %v387 = vmul.f32 %v323, %v371
    %v388 = vmul.f32 %v324, %v372
    %v389 = vmul.f32 %v325, %v373
    %v390 = vmul.f32 %v326, %v374
    %v391 = vmul.f32 %v327, %v375
    %v392 = vpack.c.bf16 %v377, %v376
    %v393 = vpack.c.bf16 %v379, %v378
    %v394 = vpack.c.bf16 %v381, %v380
    %v395 = vpack.c.bf16 %v383, %v382
    %v396 = vpack.c.bf16 %v385, %v384
    %v397 = vpack.c.bf16 %v387, %v386
    %v398 = vpack.c.bf16 %v389, %v388
    %v399 = vpack.c.bf16 %v391, %v390
    %v416 = vunpack.c.l.b16 %v90
    %v417 = vunpack.c.l.b16 %v91
    %v418 = vunpack.c.l.b16 %v92
    %v419 = vunpack.c.l.b16 %v93
    %v420 = vunpack.c.l.b16 %v94
    %v421 = vunpack.c.l.b16 %v95
    %v422 = vunpack.c.l.b16 %v96
    %v423 = vunpack.c.l.b16 %v97
    %v424 = vunpack.c.l.b16 %v98
    %v425 = vunpack.c.l.b16 %v99
    %v426 = vunpack.c.l.b16 %v100
    %v427 = vunpack.c.l.b16 %v101
    %v428 = vunpack.c.l.b16 %v102
    %v429 = vunpack.c.l.b16 %v103
    %v430 = vunpack.c.l.b16 %v104
    %v431 = vunpack.c.l.b16 %v105
    %v432 = vpack.c.b16 %v417, %v416
    %v433 = vpack.c.b16 %v419, %v418
    %v434 = vpack.c.b16 %v421, %v420
    %v435 = vpack.c.b16 %v423, %v422
    %v436 = vpack.c.b16 %v425, %v424
    %v437 = vpack.c.b16 %v427, %v426
    %v438 = vpack.c.b16 %v429, %v428
    %v439 = vpack.c.b16 %v431, %v430
    %448 = vmatprep.subr.bf16.mxu0 0
    %449 = vmatpush1.bf16.msra.mxu0 %v392
    %450 = vmatprep.subr.bf16.mxu0 0
    %451 = vmatpush1.bf16.msra.mxu0 %v393
    %452 = vmatprep.subr.bf16.mxu0 0
    %453 = vmatpush1.bf16.msra.mxu0 %v394
    %454 = vmatprep.subr.bf16.mxu0 0
    %455 = vmatpush1.bf16.msra.mxu0 %v395
    %456 = vmatprep.subr.bf16.mxu0 0
    %457 = vmatpush1.bf16.msra.mxu0 %v396
    %458 = vmatprep.subr.bf16.mxu0 0
    %459 = vmatpush1.bf16.msra.mxu0 %v397
    %460 = vmatprep.subr.bf16.mxu0 0
    %461 = vmatpush1.bf16.msra.mxu0 %v398
    %462 = vmatprep.subr.bf16.mxu0 0
    %463 = vmatpush1.bf16.msra.mxu0 %v399
    %464 = vmatprep.subr.bf16.mxu0 0
    %465 = vmatpush1.bf16.msra.mxu0 0
    %466 = vmatprep.subr.bf16.mxu0 0
    %467 = vmatpush1.bf16.msra.mxu0 0
    %468 = vmatprep.subr.bf16.mxu0 0
    %469 = vmatpush1.bf16.msra.mxu0 0
    %470 = vmatprep.subr.bf16.mxu0 0
    %471 = vmatpush1.bf16.msra.mxu0 0
    %472 = vmatprep.subr.bf16.mxu0 0
    %473 = vmatpush1.bf16.msra.mxu0 0
    %474 = vmatprep.subr.bf16.mxu0 0
    %475 = vmatpush1.bf16.msra.mxu0 0
    %476 = vmatprep.subr.bf16.mxu0 0
    %477 = vmatpush1.bf16.msra.mxu0 0
    %478 = vmatprep.subr.bf16.mxu0 0
    %479 = vmatpush1.bf16.msra.mxu0 0
    %480 = vmatprep.mubr.bf16.mxu0 0
    %481 = vmatmul.mubr.bf16.gmra.mrb[0].mxu0 %v432
    %v482 = vpop.f32.mrb[0].mxu0
    %v483 = vadd.f32 0.0, %v482
    %v484 = vpop.f32.mrb[0].mxu0
    %v485 = vpop.f32.mrb[0].mxu0
    %v486 = vadd.f32 0.0, %v485
    %v487 = vpop.f32.mrb[0].mxu0
    %488 = vmatprep.mubr.bf16.mxu0 0
    %489 = vmatmul.mubr.bf16.gmra.mrb[0].mxu0 %v433
    %v490 = vpop.f32.mrb[0].mxu0
    %v491 = vadd.f32 0.0, %v490
    %v492 = vpop.f32.mrb[0].mxu0
    %v493 = vpop.f32.mrb[0].mxu0
    %v494 = vadd.f32 0.0, %v493
    %v495 = vpop.f32.mrb[0].mxu0
    %496 = vmatprep.mubr.bf16.mxu0 0
    %497 = vmatmul.mubr.bf16.gmra.mrb[0].mxu0 %v434
    %v498 = vpop.f32.mrb[0].mxu0
    %v499 = vadd.f32 0.0, %v498
    %v500 = vpop.f32.mrb[0].mxu0
    %v501 = vpop.f32.mrb[0].mxu0
    %v502 = vadd.f32 0.0, %v501
    %v503 = vpop.f32.mrb[0].mxu0
    %504 = vmatprep.mubr.bf16.mxu0 0
    %505 = vmatmul.mubr.bf16.gmra.mrb[0].mxu0 %v435
    %v506 = vpop.f32.mrb[0].mxu0
    %v507 = vadd.f32 0.0, %v506
    %v508 = vpop.f32.mrb[0].mxu0
    %v509 = vpop.f32.mrb[0].mxu0
    %v510 = vadd.f32 0.0, %v509
    %v511 = vpop.f32.mrb[0].mxu0
    %512 = vmatprep.mubr.bf16.mxu0 0
    %513 = vmatmul.mubr.bf16.gmra.mrb[0].mxu0 %v436
    %v514 = vpop.f32.mrb[0].mxu0
    %v515 = vadd.f32 0.0, %v514
    %v516 = vpop.f32.mrb[0].mxu0
    %v517 = vpop.f32.mrb[0].mxu0
    %v518 = vadd.f32 0.0, %v517
    %v519 = vpop.f32.mrb[0].mxu0
    %520 = vmatprep.mubr.bf16.mxu0 0
    %521 = vmatmul.mubr.bf16.gmra.mrb[0].mxu0 %v437
    %v522 = vpop.f32.mrb[0].mxu0
    %v523 = vadd.f32 0.0, %v522
    %v524 = vpop.f32.mrb[0].mxu0
    %v525 = vpop.f32.mrb[0].mxu0
    %v526 = vadd.f32 0.0, %v525
    %v527 = vpop.f32.mrb[0].mxu0
    %528 = vmatprep.mubr.bf16.mxu0 0
    %529 = vmatmul.mubr.bf16.gmra.mrb[0].mxu0 %v438
    %v530 = vpop.f32.mrb[0].mxu0
    %v531 = vadd.f32 0.0, %v530
    %v532 = vpop.f32.mrb[0].mxu0
    %v533 = vpop.f32.mrb[0].mxu0
    %v534 = vadd.f32 0.0, %v533
    %v535 = vpop.f32.mrb[0].mxu0
    %536 = vmatprep.mubr.bf16.mxu0 0
    %537 = vmatmul.mubr.bf16.gmra.mrb[0].mxu0 %v439
    %v538 = vpop.f32.mrb[0].mxu0
    %v539 = vadd.f32 0.0, %v538
    %v540 = vpop.f32.mrb[0].mxu0
    %v541 = vpop.f32.mrb[0].mxu0
    %v542 = vadd.f32 0.0, %v541
    %v543 = vpop.f32.mrb[0].mxu0
    %544 = vdwg.mxu0
    %v545 = vpack.c.bf16 %v486, %v483
    %v546 = vpack.c.bf16 %v494, %v491
    %v547 = vpack.c.bf16 %v502, %v499
    %v548 = vpack.c.bf16 %v510, %v507
    %v549 = vpack.c.bf16 %v518, %v515
    %v550 = vpack.c.bf16 %v526, %v523
    %v551 = vpack.c.bf16 %v534, %v531
    %v552 = vpack.c.bf16 %v542, %v539
    %s553 = scalar_lea.vmem [#allocation8], 64
    %v554 = vld [vmem:[%s553] sm:$0xf]
    %v555 = vld [vmem:[%s553 + $0x4] sm:$0xf]
    %v556 = vld [vmem:[%s553 + $0x8] sm:$0xf]
    %v557 = vld [vmem:[%s553 + $0xc] sm:$0xf]
    %v558 = vld [vmem:[%s553 + $0x10] sm:$0xf]
    %v559 = vld [vmem:[%s553 + $0x14] sm:$0xf]
    %v560 = vld [vmem:[%s553 + $0x18] sm:$0xf]
    %v561 = vld [vmem:[%s553 + $0x1c] sm:$0xf]
    %v562 = vld [vmem:[%s553 + $0x20] sm:$0xf]
    %v563 = vld [vmem:[%s553 + $0x24] sm:$0xf]
    %v564 = vld [vmem:[%s553 + $0x28] sm:$0xf]
    %v565 = vld [vmem:[%s553 + $0x2c] sm:$0xf]
    %v566 = vld [vmem:[%s553 + $0x30] sm:$0xf]
    %v567 = vld [vmem:[%s553 + $0x34] sm:$0xf]
    %v568 = vld [vmem:[%s553 + $0x38] sm:$0xf]
    %v569 = vld [vmem:[%s553 + $0x3c] sm:$0xf]
    %v570 = vld [vmem:[#allocation10 + $0x1] sm:$0x1]
    %v571 = vlaneseq
    %v572 = vshrl.u32 %v571, 7
    %v573 = vsub.s32 0, %v572
    %v574 = vrot.slane %v570, %v573
    %v591 = vunpack.c.l.b16 %v554
    %v592 = vunpack.c.l.b16 %v555
    %v593 = vunpack.c.l.b16 %v556
    %v594 = vunpack.c.l.b16 %v557
    %v595 = vunpack.c.l.b16 %v558
    %v596 = vunpack.c.l.b16 %v559
    %v597 = vunpack.c.l.b16 %v560
    %v598 = vunpack.c.l.b16 %v561
    %v599 = vunpack.c.l.b16 %v562
    %v600 = vunpack.c.l.b16 %v563
    %v601 = vunpack.c.l.b16 %v564
    %v602 = vunpack.c.l.b16 %v565
    %v603 = vunpack.c.l.b16 %v566
    %v604 = vunpack.c.l.b16 %v567
    %v605 = vunpack.c.l.b16 %v568
    %v606 = vunpack.c.l.b16 %v569
    %v607 = vpack.c.b16 %v592, %v591
    %v608 = vpack.c.b16 %v594, %v593
    %v609 = vpack.c.b16 %v596, %v595
    %v610 = vpack.c.b16 %v598, %v597
    %v611 = vpack.c.b16 %v600, %v599
    %v612 = vpack.c.b16 %v602, %v601
    %v613 = vpack.c.b16 %v604, %v603
    %v614 = vpack.c.b16 %v606, %v605
    %623 = vmatprep.subr.bf16.mxu0 0
    %624 = vmatpush1.bf16.msra.mxu0 %v607
    %625 = vmatprep.subr.bf16.mxu0 0
    %626 = vmatpush1.bf16.msra.mxu0 %v608
    %627 = vmatprep.subr.bf16.mxu0 0
    %628 = vmatpush1.bf16.msra.mxu0 %v609
    %629 = vmatprep.subr.bf16.mxu0 0
    %630 = vmatpush1.bf16.msra.mxu0 %v610
    %631 = vmatprep.subr.bf16.mxu0 0
    %632 = vmatpush1.bf16.msra.mxu0 %v611
    %633 = vmatprep.subr.bf16.mxu0 0
    %634 = vmatpush1.bf16.msra.mxu0 %v612
    %635 = vmatprep.subr.bf16.mxu0 0
    %636 = vmatpush1.bf16.msra.mxu0 %v613
    %637 = vmatprep.subr.bf16.mxu0 0
    %638 = vmatpush1.bf16.msra.mxu0 %v614
    %639 = vmatprep.subr.bf16.mxu0 0
    %640 = vmatpush1.bf16.msra.mxu0 0
    %641 = vmatprep.subr.bf16.mxu0 0
    %642 = vmatpush1.bf16.msra.mxu0 0
    %643 = vmatprep.subr.bf16.mxu0 0
    %644 = vmatpush1.bf16.msra.mxu0 0
    %645 = vmatprep.subr.bf16.mxu0 0
    %646 = vmatpush1.bf16.msra.mxu0 0
    %647 = vmatprep.subr.bf16.mxu0 0
    %648 = vmatpush1.bf16.msra.mxu0 0
    %649 = vmatprep.subr.bf16.mxu0 0
    %650 = vmatpush1.bf16.msra.mxu0 0
    %651 = vmatprep.subr.bf16.mxu0 0
    %652 = vmatpush1.bf16.msra.mxu0 0
    %653 = vmatprep.subr.bf16.mxu0 0
    %654 = vmatpush1.bf16.msra.mxu0 0
    %655 = vmatprep.mubr.bf16.mxu0 0
    %656 = vmatmul.mubr.bf16.gmra.mrb[0].mxu0 %v545
    %v657 = vpop.f32.mrb[0].mxu0
    %v658 = vadd.f32 %v574, %v657
    %v659 = vpop.f32.mrb[0].mxu0
    %v660 = vpop.f32.mrb[0].mxu0
    %v661 = vadd.f32 %v574, %v660
    %v662 = vpop.f32.mrb[0].mxu0
    %663 = vmatprep.mubr.bf16.mxu0 0
    %664 = vmatmul.mubr.bf16.gmra.mrb[0].mxu0 %v546
    %v665 = vpop.f32.mrb[0].mxu0
    %v666 = vadd.f32 %v574, %v665
    %v667 = vpop.f32.mrb[0].mxu0
    %v668 = vpop.f32.mrb[0].mxu0
    %v669 = vadd.f32 %v574, %v668
    %v670 = vpop.f32.mrb[0].mxu0
    %671 = vmatprep.mubr.bf16.mxu0 0
    %672 = vmatmul.mubr.bf16.gmra.mrb[0].mxu0 %v547
    %v673 = vpop.f32.mrb[0].mxu0
    %v674 = vadd.f32 %v574, %v673
    %v675 = vpop.f32.mrb[0].mxu0
    %v676 = vpop.f32.mrb[0].mxu0
    %v677 = vadd.f32 %v574, %v676
    %v678 = vpop.f32.mrb[0].mxu0
    %679 = vmatprep.mubr.bf16.mxu0 0
    %680 = vmatmul.mubr.bf16.gmra.mrb[0].mxu0 %v548
    %v681 = vpop.f32.mrb[0].mxu0
    %v682 = vadd.f32 %v574, %v681
    %v683 = vpop.f32.mrb[0].mxu0
    %v684 = vpop.f32.mrb[0].mxu0
    %v685 = vadd.f32 %v574, %v684
    %v686 = vpop.f32.mrb[0].mxu0
    %687 = vmatprep.mubr.bf16.mxu0 0
    %688 = vmatmul.mubr.bf16.gmra.mrb[0].mxu0 %v549
    %v689 = vpop.f32.mrb[0].mxu0
    %v690 = vadd.f32 %v574, %v689
    %v691 = vpop.f32.mrb[0].mxu0
    %v692 = vpop.f32.mrb[0].mxu0
    %v693 = vadd.f32 %v574, %v692
    %v694 = vpop.f32.mrb[0].mxu0
    %695 = vmatprep.mubr.bf16.mxu0 0
    %696 = vmatmul.mubr.bf16.gmra.mrb[0].mxu0 %v550
    %v697 = vpop.f32.mrb[0].mxu0
    %v698 = vadd.f32 %v574, %v697
    %v699 = vpop.f32.mrb[0].mxu0
    %v700 = vpop.f32.mrb[0].mxu0
    %v701 = vadd.f32 %v574, %v700
    %v702 = vpop.f32.mrb[0].mxu0
    %703 = vmatprep.mubr.bf16.mxu0 0
    %704 = vmatmul.mubr.bf16.gmra.mrb[0].mxu0 %v551
    %v705 = vpop.f32.mrb[0].mxu0
    %v706 = vadd.f32 %v574, %v705
    %v707 = vpop.f32.mrb[0].mxu0
    %v708 = vpop.f32.mrb[0].mxu0
    %v709 = vadd.f32 %v574, %v708
    %v710 = vpop.f32.mrb[0].mxu0
    %711 = vmatprep.mubr.bf16.mxu0 0
    %712 = vmatmul.mubr.bf16.gmra.mrb[0].mxu0 %v552
    %v713 = vpop.f32.mrb[0].mxu0
    %v714 = vadd.f32 %v574, %v713
    %v715 = vpop.f32.mrb[0].mxu0
    %v716 = vpop.f32.mrb[0].mxu0
    %v717 = vadd.f32 %v574, %v716
    %v718 = vpop.f32.mrb[0].mxu0
    %719 = vdwg.mxu0
    %s720 = scalar_lea.vmem [#allocation8], 128
    %v721 = vld [vmem:[%s720] sm:$0xf]
    %v722 = vld [vmem:[%s720 + $0x4] sm:$0xf]
    %v723 = vld [vmem:[%s720 + $0x8] sm:$0xf]
    %v724 = vld [vmem:[%s720 + $0xc] sm:$0xf]
    %v725 = vld [vmem:[%s720 + $0x10] sm:$0xf]
    %v726 = vld [vmem:[%s720 + $0x14] sm:$0xf]
    %v727 = vld [vmem:[%s720 + $0x18] sm:$0xf]
    %v728 = vld [vmem:[%s720 + $0x1c] sm:$0xf]
    %v729 = vld [vmem:[%s720 + $0x20] sm:$0xf]
    %v730 = vld [vmem:[%s720 + $0x24] sm:$0xf]
    %v731 = vld [vmem:[%s720 + $0x28] sm:$0xf]
    %v732 = vld [vmem:[%s720 + $0x2c] sm:$0xf]
    %v733 = vld [vmem:[%s720 + $0x30] sm:$0xf]
    %v734 = vld [vmem:[%s720 + $0x34] sm:$0xf]
    %v735 = vld [vmem:[%s720 + $0x38] sm:$0xf]
    %v736 = vld [vmem:[%s720 + $0x3c] sm:$0xf]
    %v753 = vunpack.c.l.b16 %v721
    %v754 = vunpack.c.l.b16 %v722
    %v755 = vunpack.c.l.b16 %v723
    %v756 = vunpack.c.l.b16 %v724
    %v757 = vunpack.c.l.b16 %v725
    %v758 = vunpack.c.l.b16 %v726
    %v759 = vunpack.c.l.b16 %v727
    %v760 = vunpack.c.l.b16 %v728
    %v761 = vunpack.c.l.b16 %v729
    %v762 = vunpack.c.l.b16 %v730
    %v763 = vunpack.c.l.b16 %v731
    %v764 = vunpack.c.l.b16 %v732
    %v765 = vunpack.c.l.b16 %v733
    %v766 = vunpack.c.l.b16 %v734
    %v767 = vunpack.c.l.b16 %v735
    %v768 = vunpack.c.l.b16 %v736
    %v769 = vpack.c.b16 %v754, %v753
    %v770 = vpack.c.b16 %v756, %v755
    %v771 = vpack.c.b16 %v758, %v757
    %v772 = vpack.c.b16 %v760, %v759
    %v773 = vpack.c.b16 %v762, %v761
    %v774 = vpack.c.b16 %v764, %v763
    %v775 = vpack.c.b16 %v766, %v765
    %v776 = vpack.c.b16 %v768, %v767
    %785 = vmatprep.subr.bf16.mxu0 0
    %786 = vmatpush1.bf16.msra.mxu0 %v769
    %787 = vmatprep.subr.bf16.mxu0 0
    %788 = vmatpush1.bf16.msra.mxu0 %v770
    %789 = vmatprep.subr.bf16.mxu0 0
    %790 = vmatpush1.bf16.msra.mxu0 %v771
    %791 = vmatprep.subr.bf16.mxu0 0
    %792 = vmatpush1.bf16.msra.mxu0 %v772
    %793 = vmatprep.subr.bf16.mxu0 0
    %794 = vmatpush1.bf16.msra.mxu0 %v773
    %795 = vmatprep.subr.bf16.mxu0 0
    %796 = vmatpush1.bf16.msra.mxu0 %v774
    %797 = vmatprep.subr.bf16.mxu0 0
    %798 = vmatpush1.bf16.msra.mxu0 %v775
    %799 = vmatprep.subr.bf16.mxu0 0
    %800 = vmatpush1.bf16.msra.mxu0 %v776
    %801 = vmatprep.subr.bf16.mxu0 0
    %802 = vmatpush1.bf16.msra.mxu0 0
    %803 = vmatprep.subr.bf16.mxu0 0
    %804 = vmatpush1.bf16.msra.mxu0 0
    %805 = vmatprep.subr.bf16.mxu0 0
    %806 = vmatpush1.bf16.msra.mxu0 0
    %807 = vmatprep.subr.bf16.mxu0 0
    %808 = vmatpush1.bf16.msra.mxu0 0
    %809 = vmatprep.subr.bf16.mxu0 0
    %810 = vmatpush1.bf16.msra.mxu0 0
    %811 = vmatprep.subr.bf16.mxu0 0
    %812 = vmatpush1.bf16.msra.mxu0 0
    %813 = vmatprep.subr.bf16.mxu0 0
    %814 = vmatpush1.bf16.msra.mxu0 0
    %815 = vmatprep.subr.bf16.mxu0 0
    %816 = vmatpush1.bf16.msra.mxu0 0
    %817 = vmatprep.mubr.bf16.mxu0 0
    %818 = vmatmul.mubr.bf16.gmra.mrb[0].mxu0 %v392
    %v819 = vpop.f32.mrb[0].mxu0
    %v820 = vadd.f32 0.0, %v819
    %v821 = vpop.f32.mrb[0].mxu0
    %v822 = vpop.f32.mrb[0].mxu0
    %v823 = vadd.f32 0.0, %v822
    %v824 = vpop.f32.mrb[0].mxu0
    %825 = vmatprep.mubr.bf16.mxu0 0
    %826 = vmatmul.mubr.bf16.gmra.mrb[0].mxu0 %v393
    %v827 = vpop.f32.mrb[0].mxu0
    %v828 = vadd.f32 0.0, %v827
    %v829 = vpop.f32.mrb[0].mxu0
    %v830 = vpop.f32.mrb[0].mxu0
    %v831 = vadd.f32 0.0, %v830
    %v832 = vpop.f32.mrb[0].mxu0
    %833 = vmatprep.mubr.bf16.mxu0 0
    %834 = vmatmul.mubr.bf16.gmra.mrb[0].mxu0 %v394
    %v835 = vpop.f32.mrb[0].mxu0
    %v836 = vadd.f32 0.0, %v835
    %v837 = vpop.f32.mrb[0].mxu0
    %v838 = vpop.f32.mrb[0].mxu0
    %v839 = vadd.f32 0.0, %v838
    %v840 = vpop.f32.mrb[0].mxu0
    %841 = vmatprep.mubr.bf16.mxu0 0
    %842 = vmatmul.mubr.bf16.gmra.mrb[0].mxu0 %v395
    %v843 = vpop.f32.mrb[0].mxu0
    %v844 = vadd.f32 0.0, %v843
    %v845 = vpop.f32.mrb[0].mxu0
    %v846 = vpop.f32.mrb[0].mxu0
    %v847 = vadd.f32 0.0, %v846
    %v848 = vpop.f32.mrb[0].mxu0
    %849 = vmatprep.mubr.bf16.mxu0 0
    %850 = vmatmul.mubr.bf16.gmra.mrb[0].mxu0 %v396
    %v851 = vpop.f32.mrb[0].mxu0
    %v852 = vadd.f32 0.0, %v851
    %v853 = vpop.f32.mrb[0].mxu0
    %v854 = vpop.f32.mrb[0].mxu0
    %v855 = vadd.f32 0.0, %v854
    %v856 = vpop.f32.mrb[0].mxu0
    %857 = vmatprep.mubr.bf16.mxu0 0
    %858 = vmatmul.mubr.bf16.gmra.mrb[0].mxu0 %v397
    %v859 = vpop.f32.mrb[0].mxu0
    %v860 = vadd.f32 0.0, %v859
    %v861 = vpop.f32.mrb[0].mxu0
    %v862 = vpop.f32.mrb[0].mxu0
    %v863 = vadd.f32 0.0, %v862
    %v864 = vpop.f32.mrb[0].mxu0
    %865 = vmatprep.mubr.bf16.mxu0 0
    %866 = vmatmul.mubr.bf16.gmra.mrb[0].mxu0 %v398
    %v867 = vpop.f32.mrb[0].mxu0
    %v868 = vadd.f32 0.0, %v867
    %v869 = vpop.f32.mrb[0].mxu0
    %v870 = vpop.f32.mrb[0].mxu0
    %v871 = vadd.f32 0.0, %v870
    %v872 = vpop.f32.mrb[0].mxu0
    %873 = vmatprep.mubr.bf16.mxu0 0
    %874 = vmatmul.mubr.bf16.gmra.mrb[0].mxu0 %v399
    %v875 = vpop.f32.mrb[0].mxu0
    %v876 = vadd.f32 0.0, %v875
    %v877 = vpop.f32.mrb[0].mxu0
    %v878 = vpop.f32.mrb[0].mxu0
    %v879 = vadd.f32 0.0, %v878
    %v880 = vpop.f32.mrb[0].mxu0
    %881 = vdwg.mxu0
    %v882 = vadd.f32 %v658, %v820
    %v883 = vadd.f32 %v661, %v823
    %v884 = vadd.f32 %v666, %v828
    %v885 = vadd.f32 %v669, %v831
    %v886 = vadd.f32 %v674, %v836
    %v887 = vadd.f32 %v677, %v839
    %v888 = vadd.f32 %v682, %v844
    %v889 = vadd.f32 %v685, %v847
    %v890 = vadd.f32 %v690, %v852
    %v891 = vadd.f32 %v693, %v855
    %v892 = vadd.f32 %v698, %v860
    %v893 = vadd.f32 %v701, %v863
    %v894 = vadd.f32 %v706, %v868
    %v895 = vadd.f32 %v709, %v871
    %v896 = vadd.f32 %v714, %v876
    %v897 = vadd.f32 %v717, %v879
    %v898 = vadd.f32 %v882, %v376
    %v899 = vadd.f32 %v883, %v377
    %v900 = vadd.f32 %v884, %v378
    %v901 = vadd.f32 %v885, %v379
    %v902 = vadd.f32 %v886, %v380
    %v903 = vadd.f32 %v887, %v381
    %v904 = vadd.f32 %v888, %v382
    %v905 = vadd.f32 %v889, %v383
    %v906 = vadd.f32 %v890, %v384
    %v907 = vadd.f32 %v891, %v385
    %v908 = vadd.f32 %v892, %v386
    %v909 = vadd.f32 %v893, %v387
    %v910 = vadd.f32 %v894, %v388
    %v911 = vadd.f32 %v895, %v389
    %v912 = vadd.f32 %v896, %v390
    %v913 = vadd.f32 %v897, %v391
    %v914 = vld [vmem:[#allocation10 + $0x2] sm:$0x1]
    %v915 = vlaneseq
    %v916 = vshrl.u32 %v915, 7
    %v917 = vsub.s32 0, %v916
    %v918 = vrot.slane %v914, %v917
    %v919 = vmul.f32 %v898, %v918
    %v920 = vmul.f32 %v899, %v918
    %v921 = vmul.f32 %v900, %v918
    %v922 = vmul.f32 %v901, %v918
    %v923 = vmul.f32 %v902, %v918
    %v924 = vmul.f32 %v903, %v918
    %v925 = vmul.f32 %v904, %v918
    %v926 = vmul.f32 %v905, %v918
    %v927 = vmul.f32 %v906, %v918
    %v928 = vmul.f32 %v907, %v918
    %v929 = vmul.f32 %v908, %v918
    %v930 = vmul.f32 %v909, %v918
    %v931 = vmul.f32 %v910, %v918
    %v932 = vmul.f32 %v911, %v918
    %v933 = vmul.f32 %v912, %v918
    %v934 = vmul.f32 %v913, %v918
    %v935 = vld [vmem:[#allocation10 + $0x3] sm:$0x1]
    %v936 = vlaneseq
    %v937 = vshrl.u32 %v936, 7
    %v938 = vsub.s32 0, %v937
    %v939 = vrot.slane %v935, %v938
    %v940 = vadd.f32 %v919, %v939
    %v941 = vadd.f32 %v920, %v939
    %v942 = vadd.f32 %v921, %v939
    %v943 = vadd.f32 %v922, %v939
    %v944 = vadd.f32 %v923, %v939
    %v945 = vadd.f32 %v924, %v939
    %v946 = vadd.f32 %v925, %v939
    %v947 = vadd.f32 %v926, %v939
    %v948 = vadd.f32 %v927, %v939
    %v949 = vadd.f32 %v928, %v939
    %v950 = vadd.f32 %v929, %v939
    %v951 = vadd.f32 %v930, %v939
    %v952 = vadd.f32 %v931, %v939
    %v953 = vadd.f32 %v932, %v939
    %v954 = vadd.f32 %v933, %v939
    %v955 = vadd.f32 %v934, %v939
    %v956 = vpack.c.bf16 %v941, %v940
    %v957 = vpack.c.bf16 %v943, %v942
    %v958 = vpack.c.bf16 %v945, %v944
    %v959 = vpack.c.bf16 %v947, %v946
    %v960 = vpack.c.bf16 %v949, %v948
    %v961 = vpack.c.bf16 %v951, %v950
    %v962 = vpack.c.bf16 %v953, %v952
    %v963 = vpack.c.bf16 %v955, %v954
    %s964 = scalar_lea.vmem [#allocation8], 192
    %v965 = vld [vmem:[%s964] sm:$0xf]
    %v966 = vld [vmem:[%s964 + $0x4] sm:$0xf]
    %v967 = vld [vmem:[%s964 + $0x8] sm:$0xf]
    %v968 = vld [vmem:[%s964 + $0xc] sm:$0xf]
    %v969 = vld [vmem:[%s964 + $0x10] sm:$0xf]
    %v970 = vld [vmem:[%s964 + $0x14] sm:$0xf]
    %v971 = vld [vmem:[%s964 + $0x18] sm:$0xf]
    %v972 = vld [vmem:[%s964 + $0x1c] sm:$0xf]
    %v973 = vld [vmem:[%s964 + $0x20] sm:$0xf]
    %v974 = vld [vmem:[%s964 + $0x24] sm:$0xf]
    %v975 = vld [vmem:[%s964 + $0x28] sm:$0xf]
    %v976 = vld [vmem:[%s964 + $0x2c] sm:$0xf]
    %v977 = vld [vmem:[%s964 + $0x30] sm:$0xf]
    %v978 = vld [vmem:[%s964 + $0x34] sm:$0xf]
    %v979 = vld [vmem:[%s964 + $0x38] sm:$0xf]
    %v980 = vld [vmem:[%s964 + $0x3c] sm:$0xf]
    %v981 = vld [vmem:[#allocation10 + $0x4] sm:$0x1]
    %v982 = vlaneseq
    %v983 = vshrl.u32 %v982, 7
    %v984 = vsub.s32 0, %v983
    %v985 = vrot.slane %v981, %v984
    %v1002 = vunpack.c.l.b16 %v965
    %v1003 = vunpack.c.l.b16 %v966
    %v1004 = vunpack.c.l.b16 %v967
    %v1005 = vunpack.c.l.b16 %v968
    %v1006 = vunpack.c.l.b16 %v969
    %v1007 = vunpack.c.l.b16 %v970
    %v1008 = vunpack.c.l.b16 %v971
    %v1009 = vunpack.c.l.b16 %v972
    %v1010 = vunpack.c.l.b16 %v973
    %v1011 = vunpack.c.l.b16 %v974
    %v1012 = vunpack.c.l.b16 %v975
    %v1013 = vunpack.c.l.b16 %v976
    %v1014 = vunpack.c.l.b16 %v977
    %v1015 = vunpack.c.l.b16 %v978
    %v1016 = vunpack.c.l.b16 %v979
    %v1017 = vunpack.c.l.b16 %v980
    %v1018 = vpack.c.b16 %v1003, %v1002
    %v1019 = vpack.c.b16 %v1005, %v1004
    %v1020 = vpack.c.b16 %v1007, %v1006
    %v1021 = vpack.c.b16 %v1009, %v1008
    %v1022 = vpack.c.b16 %v1011, %v1010
    %v1023 = vpack.c.b16 %v1013, %v1012
    %v1024 = vpack.c.b16 %v1015, %v1014
    %v1025 = vpack.c.b16 %v1017, %v1016
    %1034 = vmatprep.subr.bf16.mxu0 0
    %1035 = vmatpush1.bf16.msra.mxu0 %v1018
    %1036 = vmatprep.subr.bf16.mxu0 0
    %1037 = vmatpush1.bf16.msra.mxu0 %v1019
    %1038 = vmatprep.subr.bf16.mxu0 0
    %1039 = vmatpush1.bf16.msra.mxu0 %v1020
    %1040 = vmatprep.subr.bf16.mxu0 0
    %1041 = vmatpush1.bf16.msra.mxu0 %v1021
    %1042 = vmatprep.subr.bf16.mxu0 0
    %1043 = vmatpush1.bf16.msra.mxu0 %v1022
    %1044 = vmatprep.subr.bf16.mxu0 0
    %1045 = vmatpush1.bf16.msra.mxu0 %v1023
    %1046 = vmatprep.subr.bf16.mxu0 0
    %1047 = vmatpush1.bf16.msra.mxu0 %v1024
    %1048 = vmatprep.subr.bf16.mxu0 0
    %1049 = vmatpush1.bf16.msra.mxu0 %v1025
    %1050 = vmatprep.subr.bf16.mxu0 0
    %1051 = vmatpush1.bf16.msra.mxu0 0
    %1052 = vmatprep.subr.bf16.mxu0 0
    %1053 = vmatpush1.bf16.msra.mxu0 0
    %1054 = vmatprep.subr.bf16.mxu0 0
    %1055 = vmatpush1.bf16.msra.mxu0 0
    %1056 = vmatprep.subr.bf16.mxu0 0
    %1057 = vmatpush1.bf16.msra.mxu0 0
    %1058 = vmatprep.subr.bf16.mxu0 0
    %1059 = vmatpush1.bf16.msra.mxu0 0
    %1060 = vmatprep.subr.bf16.mxu0 0
    %1061 = vmatpush1.bf16.msra.mxu0 0
    %1062 = vmatprep.subr.bf16.mxu0 0
    %1063 = vmatpush1.bf16.msra.mxu0 0
    %1064 = vmatprep.subr.bf16.mxu0 0
    %1065 = vmatpush1.bf16.msra.mxu0 0
    %1066 = vmatprep.mubr.bf16.mxu0 0
    %1067 = vmatmul.mubr.bf16.gmra.mrb[0].mxu0 %v956
    %v1068 = vpop.f32.mrb[0].mxu0
    %v1069 = vadd.f32 %v985, %v1068
    %v1070 = vpop.f32.mrb[0].mxu0
    %v1071 = vpop.f32.mrb[0].mxu0
    %v1072 = vadd.f32 %v985, %v1071
    %v1073 = vpop.f32.mrb[0].mxu0
    %1074 = vmatprep.mubr.bf16.mxu0 0
    %1075 = vmatmul.mubr.bf16.gmra.mrb[0].mxu0 %v957
    %v1076 = vpop.f32.mrb[0].mxu0
    %v1077 = vadd.f32 %v985, %v1076
    %v1078 = vpop.f32.mrb[0].mxu0
    %v1079 = vpop.f32.mrb[0].mxu0
    %v1080 = vadd.f32 %v985, %v1079
    %v1081 = vpop.f32.mrb[0].mxu0
    %1082 = vmatprep.mubr.bf16.mxu0 0
    %1083 = vmatmul.mubr.bf16.gmra.mrb[0].mxu0 %v958
    %v1084 = vpop.f32.mrb[0].mxu0
    %v1085 = vadd.f32 %v985, %v1084
    %v1086 = vpop.f32.mrb[0].mxu0
    %v1087 = vpop.f32.mrb[0].mxu0
    %v1088 = vadd.f32 %v985, %v1087
    %v1089 = vpop.f32.mrb[0].mxu0
    %1090 = vmatprep.mubr.bf16.mxu0 0
    %1091 = vmatmul.mubr.bf16.gmra.mrb[0].mxu0 %v959
    %v1092 = vpop.f32.mrb[0].mxu0
    %v1093 = vadd.f32 %v985, %v1092
    %v1094 = vpop.f32.mrb[0].mxu0
    %v1095 = vpop.f32.mrb[0].mxu0
    %v1096 = vadd.f32 %v985, %v1095
    %v1097 = vpop.f32.mrb[0].mxu0
    %1098 = vmatprep.mubr.bf16.mxu0 0
    %1099 = vmatmul.mubr.bf16.gmra.mrb[0].mxu0 %v960
    %v1100 = vpop.f32.mrb[0].mxu0
    %v1101 = vadd.f32 %v985, %v1100
    %v1102 = vpop.f32.mrb[0].mxu0
    %v1103 = vpop.f32.mrb[0].mxu0
    %v1104 = vadd.f32 %v985, %v1103
    %v1105 = vpop.f32.mrb[0].mxu0
    %1106 = vmatprep.mubr.bf16.mxu0 0
    %1107 = vmatmul.mubr.bf16.gmra.mrb[0].mxu0 %v961
    %v1108 = vpop.f32.mrb[0].mxu0
    %v1109 = vadd.f32 %v985, %v1108
    %v1110 = vpop.f32.mrb[0].mxu0
    %v1111 = vpop.f32.mrb[0].mxu0
    %v1112 = vadd.f32 %v985, %v1111
    %v1113 = vpop.f32.mrb[0].mxu0
    %1114 = vmatprep.mubr.bf16.mxu0 0
    %1115 = vmatmul.mubr.bf16.gmra.mrb[0].mxu0 %v962
    %v1116 = vpop.f32.mrb[0].mxu0
    %v1117 = vadd.f32 %v985, %v1116
    %v1118 = vpop.f32.mrb[0].mxu0
    %v1119 = vpop.f32.mrb[0].mxu0
    %v1120 = vadd.f32 %v985, %v1119
    %v1121 = vpop.f32.mrb[0].mxu0
    %1122 = vmatprep.mubr.bf16.mxu0 0
    %1123 = vmatmul.mubr.bf16.gmra.mrb[0].mxu0 %v963
    %v1124 = vpop.f32.mrb[0].mxu0
    %v1125 = vadd.f32 %v985, %v1124
    %v1126 = vpop.f32.mrb[0].mxu0
    %v1127 = vpop.f32.mrb[0].mxu0
    %v1128 = vadd.f32 %v985, %v1127
    %v1129 = vpop.f32.mrb[0].mxu0
    %1130 = vdwg.mxu0
    %v1131 = vmul.f32 %v1069, 0.5
    %v1132 = vmul.f32 %v1072, 0.5
    %v1133 = vmul.f32 %v1077, 0.5
    %v1134 = vmul.f32 %v1080, 0.5
    %v1135 = vmul.f32 %v1085, 0.5
    %v1136 = vmul.f32 %v1088, 0.5
    %v1137 = vmul.f32 %v1093, 0.5
    %v1138 = vmul.f32 %v1096, 0.5
    %v1139 = vmul.f32 %v1101, 0.5
    %v1140 = vmul.f32 %v1104, 0.5
    %v1141 = vmul.f32 %v1109, 0.5
    %v1142 = vmul.f32 %v1112, 0.5
    %v1143 = vmul.f32 %v1117, 0.5
    %v1144 = vmul.f32 %v1120, 0.5
    %v1145 = vmul.f32 %v1125, 0.5
    %v1146 = vmul.f32 %v1128, 0.5
    %v1147 = vmul.f32 %v1069, 0.70710677
    %v1148 = vmul.f32 %v1072, 0.70710677
    %v1149 = vmul.f32 %v1077, 0.70710677
    %v1150 = vmul.f32 %v1080, 0.70710677
    %v1151 = vmul.f32 %v1085, 0.70710677
    %v1152 = vmul.f32 %v1088, 0.70710677
    %v1153 = vmul.f32 %v1093, 0.70710677
    %v1154 = vmul.f32 %v1096, 0.70710677
    %v1155 = vmul.f32 %v1101, 0.70710677
    %v1156 = vmul.f32 %v1104, 0.70710677
    %v1157 = vmul.f32 %v1109, 0.70710677
    %v1158 = vmul.f32 %v1112, 0.70710677
    %v1159 = vmul.f32 %v1117, 0.70710677
    %v1160 = vmul.f32 %v1120, 0.70710677
    %v1161 = vmul.f32 %v1125, 0.70710677
    %v1162 = vmul.f32 %v1128, 0.70710677
    %v1163 = verf.f32.pop %v1147
    %v1164 = verf.f32.pop %v1148
    %v1165 = verf.f32.pop %v1149
    %v1166 = verf.f32.pop %v1150
    %v1167 = verf.f32.pop %v1151
    %v1168 = verf.f32.pop %v1152
    %v1169 = verf.f32.pop %v1153
    %v1170 = verf.f32.pop %v1154
    %v1171 = verf.f32.pop %v1155
    %v1172 = verf.f32.pop %v1156
    %v1173 = verf.f32.pop %v1157
    %v1174 = verf.f32.pop %v1158
    %v1175 = verf.f32.pop %v1159
    %v1176 = verf.f32.pop %v1160
    %v1177 = verf.f32.pop %v1161
    %v1178 = verf.f32.pop %v1162
    %v1179 = vadd.f32 %v1163, 1.0
    %v1180 = vadd.f32 %v1164, 1.0
    %v1181 = vadd.f32 %v1165, 1.0
    %v1182 = vadd.f32 %v1166, 1.0
    %v1183 = vadd.f32 %v1167, 1.0
    %v1184 = vadd.f32 %v1168, 1.0
    %v1185 = vadd.f32 %v1169, 1.0
    %v1186 = vadd.f32 %v1170, 1.0
    %v1187 = vadd.f32 %v1171, 1.0
    %v1188 = vadd.f32 %v1172, 1.0
    %v1189 = vadd.f32 %v1173, 1.0
    %v1190 = vadd.f32 %v1174, 1.0
    %v1191 = vadd.f32 %v1175, 1.0
    %v1192 = vadd.f32 %v1176, 1.0
    %v1193 = vadd.f32 %v1177, 1.0
    %v1194 = vadd.f32 %v1178, 1.0
    %v1195 = vmul.f32 %v1131, %v1179
    %v1196 = vmul.f32 %v1132, %v1180
    %v1197 = vmul.f32 %v1133, %v1181
    %v1198 = vmul.f32 %v1134, %v1182
    %v1199 = vmul.f32 %v1135, %v1183
    %v1200 = vmul.f32 %v1136, %v1184
    %v1201 = vmul.f32 %v1137, %v1185
    %v1202 = vmul.f32 %v1138, %v1186
    %v1203 = vmul.f32 %v1139, %v1187
    %v1204 = vmul.f32 %v1140, %v1188
    %v1205 = vmul.f32 %v1141, %v1189
    %v1206 = vmul.f32 %v1142, %v1190
    %v1207 = vmul.f32 %v1143, %v1191
    %v1208 = vmul.f32 %v1144, %v1192
    %v1209 = vmul.f32 %v1145, %v1193
    %v1210 = vmul.f32 %v1146, %v1194
    %v1211 = vpack.c.bf16 %v1196, %v1195
    %v1212 = vpack.c.bf16 %v1198, %v1197
    %v1213 = vpack.c.bf16 %v1200, %v1199
    %v1214 = vpack.c.bf16 %v1202, %v1201
    %v1215 = vpack.c.bf16 %v1204, %v1203
    %v1216 = vpack.c.bf16 %v1206, %v1205
    %v1217 = vpack.c.bf16 %v1208, %v1207
    %v1218 = vpack.c.bf16 %v1210, %v1209
    %s1219 = scalar_lea.vmem [#allocation8], 256
    %v1220 = vld [vmem:[%s1219] sm:$0xf]
    %v1221 = vld [vmem:[%s1219 + $0x4] sm:$0xf]
    %v1222 = vld [vmem:[%s1219 + $0x8] sm:$0xf]
    %v1223 = vld [vmem:[%s1219 + $0xc] sm:$0xf]
    %v1224 = vld [vmem:[%s1219 + $0x10] sm:$0xf]
    %v1225 = vld [vmem:[%s1219 + $0x14] sm:$0xf]
    %v1226 = vld [vmem:[%s1219 + $0x18] sm:$0xf]
    %v1227 = vld [vmem:[%s1219 + $0x1c] sm:$0xf]
    %v1228 = vld [vmem:[%s1219 + $0x20] sm:$0xf]
    %v1229 = vld [vmem:[%s1219 + $0x24] sm:$0xf]
    %v1230 = vld [vmem:[%s1219 + $0x28] sm:$0xf]
    %v1231 = vld [vmem:[%s1219 + $0x2c] sm:$0xf]
    %v1232 = vld [vmem:[%s1219 + $0x30] sm:$0xf]
    %v1233 = vld [vmem:[%s1219 + $0x34] sm:$0xf]
    %v1234 = vld [vmem:[%s1219 + $0x38] sm:$0xf]
    %v1235 = vld [vmem:[%s1219 + $0x3c] sm:$0xf]
    %v1236 = vld [vmem:[#allocation10 + $0x5] sm:$0x1]
    %v1237 = vlaneseq
    %v1238 = vshrl.u32 %v1237, 7
    %v1239 = vsub.s32 0, %v1238
    %v1240 = vrot.slane %v1236, %v1239
    %v1257 = vunpack.c.l.b16 %v1220
    %v1258 = vunpack.c.l.b16 %v1221
    %v1259 = vunpack.c.l.b16 %v1222
    %v1260 = vunpack.c.l.b16 %v1223
    %v1261 = vunpack.c.l.b16 %v1224
    %v1262 = vunpack.c.l.b16 %v1225
    %v1263 = vunpack.c.l.b16 %v1226
    %v1264 = vunpack.c.l.b16 %v1227
    %v1265 = vunpack.c.l.b16 %v1228
    %v1266 = vunpack.c.l.b16 %v1229
    %v1267 = vunpack.c.l.b16 %v1230
    %v1268 = vunpack.c.l.b16 %v1231
    %v1269 = vunpack.c.l.b16 %v1232
    %v1270 = vunpack.c.l.b16 %v1233
    %v1271 = vunpack.c.l.b16 %v1234
    %v1272 = vunpack.c.l.b16 %v1235
    %v1273 = vpack.c.b16 %v1258, %v1257
    %v1274 = vpack.c.b16 %v1260, %v1259
    %v1275 = vpack.c.b16 %v1262, %v1261
    %v1276 = vpack.c.b16 %v1264, %v1263
    %v1277 = vpack.c.b16 %v1266, %v1265
    %v1278 = vpack.c.b16 %v1268, %v1267
    %v1279 = vpack.c.b16 %v1270, %v1269
    %v1280 = vpack.c.b16 %v1272, %v1271
    %1289 = vmatprep.subr.bf16.mxu0 0
    %1290 = vmatpush1.bf16.msra.mxu0 %v1273
    %1291 = vmatprep.subr.bf16.mxu0 0
    %1292 = vmatpush1.bf16.msra.mxu0 %v1274
    %1293 = vmatprep.subr.bf16.mxu0 0
    %1294 = vmatpush1.bf16.msra.mxu0 %v1275
    %1295 = vmatprep.subr.bf16.mxu0 0
    %1296 = vmatpush1.bf16.msra.mxu0 %v1276
    %1297 = vmatprep.subr.bf16.mxu0 0
    %1298 = vmatpush1.bf16.msra.mxu0 %v1277
    %1299 = vmatprep.subr.bf16.mxu0 0
    %1300 = vmatpush1.bf16.msra.mxu0 %v1278
    %1301 = vmatprep.subr.bf16.mxu0 0
    %1302 = vmatpush1.bf16.msra.mxu0 %v1279
    %1303 = vmatprep.subr.bf16.mxu0 0
    %1304 = vmatpush1.bf16.msra.mxu0 %v1280
    %1305 = vmatprep.subr.bf16.mxu0 0
    %1306 = vmatpush1.bf16.msra.mxu0 0
    %1307 = vmatprep.subr.bf16.mxu0 0
    %1308 = vmatpush1.bf16.msra.mxu0 0
    %1309 = vmatprep.subr.bf16.mxu0 0
    %1310 = vmatpush1.bf16.msra.mxu0 0
    %1311 = vmatprep.subr.bf16.mxu0 0
    %1312 = vmatpush1.bf16.msra.mxu0 0
    %1313 = vmatprep.subr.bf16.mxu0 0
    %1314 = vmatpush1.bf16.msra.mxu0 0
    %1315 = vmatprep.subr.bf16.mxu0 0
    %1316 = vmatpush1.bf16.msra.mxu0 0
    %1317 = vmatprep.subr.bf16.mxu0 0
    %1318 = vmatpush1.bf16.msra.mxu0 0
    %1319 = vmatprep.subr.bf16.mxu0 0
    %1320 = vmatpush1.bf16.msra.mxu0 0
    %1321 = vmatprep.mubr.bf16.mxu0 0
    %1322 = vmatmul.mubr.bf16.gmra.mrb[0].mxu0 %v1211
    %v1323 = vpop.f32.mrb[0].mxu0
    %v1324 = vadd.f32 %v1240, %v1323
    %v1325 = vpop.f32.mrb[0].mxu0
    %v1326 = vpop.f32.mrb[0].mxu0
    %v1327 = vadd.f32 %v1240, %v1326
    %v1328 = vpop.f32.mrb[0].mxu0
    %1329 = vmatprep.mubr.bf16.mxu0 0
    %1330 = vmatmul.mubr.bf16.gmra.mrb[0].mxu0 %v1212
    %v1331 = vpop.f32.mrb[0].mxu0
    %v1332 = vadd.f32 %v1240, %v1331
    %v1333 = vpop.f32.mrb[0].mxu0
    %v1334 = vpop.f32.mrb[0].mxu0
    %v1335 = vadd.f32 %v1240, %v1334
    %v1336 = vpop.f32.mrb[0].mxu0
    %1337 = vmatprep.mubr.bf16.mxu0 0
    %1338 = vmatmul.mubr.bf16.gmra.mrb[0].mxu0 %v1213
    %v1339 = vpop.f32.mrb[0].mxu0
    %v1340 = vadd.f32 %v1240, %v1339
    %v1341 = vpop.f32.mrb[0].mxu0
    %v1342 = vpop.f32.mrb[0].mxu0
    %v1343 = vadd.f32 %v1240, %v1342
    %v1344 = vpop.f32.mrb[0].mxu0
    %1345 = vmatprep.mubr.bf16.mxu0 0
    %1346 = vmatmul.mubr.bf16.gmra.mrb[0].mxu0 %v1214
    %v1347 = vpop.f32.mrb[0].mxu0
    %v1348 = vadd.f32 %v1240, %v1347
    %v1349 = vpop.f32.mrb[0].mxu0
    %v1350 = vpop.f32.mrb[0].mxu0
    %v1351 = vadd.f32 %v1240, %v1350
    %v1352 = vpop.f32.mrb[0].mxu0
    %1353 = vmatprep.mubr.bf16.mxu0 0
    %1354 = vmatmul.mubr.bf16.gmra.mrb[0].mxu0 %v1215
    %v1355 = vpop.f32.mrb[0].mxu0
    %v1356 = vadd.f32 %v1240, %v1355
    %v1357 = vpop.f32.mrb[0].mxu0
    %v1358 = vpop.f32.mrb[0].mxu0
    %v1359 = vadd.f32 %v1240, %v1358
    %v1360 = vpop.f32.mrb[0].mxu0
    %1361 = vmatprep.mubr.bf16.mxu0 0
    %1362 = vmatmul.mubr.bf16.gmra.mrb[0].mxu0 %v1216
    %v1363 = vpop.f32.mrb[0].mxu0
    %v1364 = vadd.f32 %v1240, %v1363
    %v1365 = vpop.f32.mrb[0].mxu0
    %v1366 = vpop.f32.mrb[0].mxu0
    %v1367 = vadd.f32 %v1240, %v1366
    %v1368 = vpop.f32.mrb[0].mxu0
    %1369 = vmatprep.mubr.bf16.mxu0 0
    %1370 = vmatmul.mubr.bf16.gmra.mrb[0].mxu0 %v1217
    %v1371 = vpop.f32.mrb[0].mxu0
    %v1372 = vadd.f32 %v1240, %v1371
    %v1373 = vpop.f32.mrb[0].mxu0
    %v1374 = vpop.f32.mrb[0].mxu0
    %v1375 = vadd.f32 %v1240, %v1374
    %v1376 = vpop.f32.mrb[0].mxu0
    %1377 = vmatprep.mubr.bf16.mxu0 0
    %1378 = vmatmul.mubr.bf16.gmra.mrb[0].mxu0 %v1218
    %v1379 = vpop.f32.mrb[0].mxu0
    %v1380 = vadd.f32 %v1240, %v1379
    %v1381 = vpop.f32.mrb[0].mxu0
    %v1382 = vpop.f32.mrb[0].mxu0
    %v1383 = vadd.f32 %v1240, %v1382
    %v1384 = vpop.f32.mrb[0].mxu0
    %1385 = vdwg.mxu0
    %v1386 = vadd.f32 %v940, %v1324
    %v1387 = vadd.f32 %v941, %v1327
    %v1388 = vadd.f32 %v942, %v1332
    %v1389 = vadd.f32 %v943, %v1335
    %v1390 = vadd.f32 %v944, %v1340
    %v1391 = vadd.f32 %v945, %v1343
    %v1392 = vadd.f32 %v946, %v1348
    %v1393 = vadd.f32 %v947, %v1351
    %v1394 = vadd.f32 %v948, %v1356
    %v1395 = vadd.f32 %v949, %v1359
    %v1396 = vadd.f32 %v950, %v1364
    %v1397 = vadd.f32 %v951, %v1367
    %v1398 = vadd.f32 %v952, %v1372
    %v1399 = vadd.f32 %v953, %v1375
    %v1400 = vadd.f32 %v954, %v1380
    %v1401 = vadd.f32 %v955, %v1383
    %v1402 = vld [vmem:[#allocation10 + $0x6] sm:$0x1]
    %v1403 = vlaneseq
    %v1404 = vshrl.u32 %v1403, 7
    %v1405 = vsub.s32 0, %v1404
    %v1406 = vrot.slane %v1402, %v1405
    %v1407 = vmul.f32 %v1386, %v1406
    %v1408 = vmul.f32 %v1387, %v1406
    %v1409 = vmul.f32 %v1388, %v1406
    %v1410 = vmul.f32 %v1389, %v1406
    %v1411 = vmul.f32 %v1390, %v1406
    %v1412 = vmul.f32 %v1391, %v1406
    %v1413 = vmul.f32 %v1392, %v1406
    %v1414 = vmul.f32 %v1393, %v1406
    %v1415 = vmul.f32 %v1394, %v1406
    %v1416 = vmul.f32 %v1395, %v1406
    %v1417 = vmul.f32 %v1396, %v1406
    %v1418 = vmul.f32 %v1397, %v1406
    %v1419 = vmul.f32 %v1398, %v1406
    %v1420 = vmul.f32 %v1399, %v1406
    %v1421 = vmul.f32 %v1400, %v1406
    %v1422 = vmul.f32 %v1401, %v1406
    %v1423 = vld [vmem:[#allocation10 + $0x7] sm:$0x1]
    %v1424 = vlaneseq
    %v1425 = vshrl.u32 %v1424, 7
    %v1426 = vsub.s32 0, %v1425
    %v1427 = vrot.slane %v1423, %v1426
    %v1428 = vadd.f32 %v1407, %v1427
    %v1429 = vadd.f32 %v1408, %v1427
    %v1430 = vadd.f32 %v1409, %v1427
    %v1431 = vadd.f32 %v1410, %v1427
    %v1432 = vadd.f32 %v1411, %v1427
    %v1433 = vadd.f32 %v1412, %v1427
    %v1434 = vadd.f32 %v1413, %v1427
    %v1435 = vadd.f32 %v1414, %v1427
    %v1436 = vadd.f32 %v1415, %v1427
    %v1437 = vadd.f32 %v1416, %v1427
    %v1438 = vadd.f32 %v1417, %v1427
    %v1439 = vadd.f32 %v1418, %v1427
    %v1440 = vadd.f32 %v1419, %v1427
    %v1441 = vadd.f32 %v1420, %v1427
    %v1442 = vadd.f32 %v1421, %v1427
    %v1443 = vadd.f32 %v1422, %v1427
    %v1444 = vpack.c.bf16 %v1429, %v1428
    %v1445 = vpack.c.bf16 %v1431, %v1430
    %v1446 = vpack.c.bf16 %v1433, %v1432
    %v1447 = vpack.c.bf16 %v1435, %v1434
    %v1448 = vpack.c.bf16 %v1437, %v1436
    %v1449 = vpack.c.bf16 %v1439, %v1438
    %v1450 = vpack.c.bf16 %v1441, %v1440
    %v1451 = vpack.c.bf16 %v1443, %v1442
    %s1452 = scalar_lea.vmem [#allocation8], 320
    %v1453 = vld [vmem:[%s1452] sm:$0xf]
    %v1454 = vld [vmem:[%s1452 + $0x4] sm:$0xf]
    %v1455 = vld [vmem:[%s1452 + $0x8] sm:$0xf]
    %v1456 = vld [vmem:[%s1452 + $0xc] sm:$0xf]
    %v1457 = vld [vmem:[%s1452 + $0x10] sm:$0xf]
    %v1458 = vld [vmem:[%s1452 + $0x14] sm:$0xf]
    %v1459 = vld [vmem:[%s1452 + $0x18] sm:$0xf]
    %v1460 = vld [vmem:[%s1452 + $0x1c] sm:$0xf]
    %v1461 = vld [vmem:[%s1452 + $0x20] sm:$0xf]
    %v1462 = vld [vmem:[%s1452 + $0x24] sm:$0xf]
    %v1463 = vld [vmem:[%s1452 + $0x28] sm:$0xf]
    %v1464 = vld [vmem:[%s1452 + $0x2c] sm:$0xf]
    %v1465 = vld [vmem:[%s1452 + $0x30] sm:$0xf]
    %v1466 = vld [vmem:[%s1452 + $0x34] sm:$0xf]
    %v1467 = vld [vmem:[%s1452 + $0x38] sm:$0xf]
    %v1468 = vld [vmem:[%s1452 + $0x3c] sm:$0xf]
    %v1485 = vunpack.c.l.b16 %v1453
    %v1486 = vunpack.c.l.b16 %v1454
    %v1487 = vunpack.c.l.b16 %v1455
    %v1488 = vunpack.c.l.b16 %v1456
    %v1489 = vunpack.c.l.b16 %v1457
    %v1490 = vunpack.c.l.b16 %v1458
    %v1491 = vunpack.c.l.b16 %v1459
    %v1492 = vunpack.c.l.b16 %v1460
    %v1493 = vunpack.c.l.b16 %v1461
    %v1494 = vunpack.c.l.b16 %v1462
    %v1495 = vunpack.c.l.b16 %v1463
    %v1496 = vunpack.c.l.b16 %v1464
    %v1497 = vunpack.c.l.b16 %v1465
    %v1498 = vunpack.c.l.b16 %v1466
    %v1499 = vunpack.c.l.b16 %v1467
    %v1500 = vunpack.c.l.b16 %v1468
    %v1501 = vpack.c.b16 %v1486, %v1485
    %v1502 = vpack.c.b16 %v1488, %v1487
    %v1503 = vpack.c.b16 %v1490, %v1489
    %v1504 = vpack.c.b16 %v1492, %v1491
    %v1505 = vpack.c.b16 %v1494, %v1493
    %v1506 = vpack.c.b16 %v1496, %v1495
    %v1507 = vpack.c.b16 %v1498, %v1497
    %v1508 = vpack.c.b16 %v1500, %v1499
    %1517 = vmatprep.subr.bf16.mxu0 0
    %1518 = vmatpush1.bf16.msra.mxu0 %v1501
    %1519 = vmatprep.subr.bf16.mxu0 0
    %1520 = vmatpush1.bf16.msra.mxu0 %v1502
    %1521 = vmatprep.subr.bf16.mxu0 0
    %1522 = vmatpush1.bf16.msra.mxu0 %v1503
    %1523 = vmatprep.subr.bf16.mxu0 0
    %1524 = vmatpush1.bf16.msra.mxu0 %v1504
    %1525 = vmatprep.subr.bf16.mxu0 0
    %1526 = vmatpush1.bf16.msra.mxu0 %v1505
    %1527 = vmatprep.subr.bf16.mxu0 0
    %1528 = vmatpush1.bf16.msra.mxu0 %v1506
    %1529 = vmatprep.subr.bf16.mxu0 0
    %1530 = vmatpush1.bf16.msra.mxu0 %v1507
    %1531 = vmatprep.subr.bf16.mxu0 0
    %1532 = vmatpush1.bf16.msra.mxu0 %v1508
    %1533 = vmatprep.subr.bf16.mxu0 0
    %1534 = vmatpush1.bf16.msra.mxu0 0
    %1535 = vmatprep.subr.bf16.mxu0 0
    %1536 = vmatpush1.bf16.msra.mxu0 0
    %1537 = vmatprep.subr.bf16.mxu0 0
    %1538 = vmatpush1.bf16.msra.mxu0 0
    %1539 = vmatprep.subr.bf16.mxu0 0
    %1540 = vmatpush1.bf16.msra.mxu0 0
    %1541 = vmatprep.subr.bf16.mxu0 0
    %1542 = vmatpush1.bf16.msra.mxu0 0
    %1543 = vmatprep.subr.bf16.mxu0 0
    %1544 = vmatpush1.bf16.msra.mxu0 0
    %1545 = vmatprep.subr.bf16.mxu0 0
    %1546 = vmatpush1.bf16.msra.mxu0 0
    %1547 = vmatprep.subr.bf16.mxu0 0
    %1548 = vmatpush1.bf16.msra.mxu0 0
    %1549 = vmatprep.mubr.bf16.mxu0 0
    %1550 = vmatmul.mubr.bf16.gmra.mrb[0].mxu0 %v1444
    %v1551 = vpop.f32.mrb[0].mxu0
    %v1552 = vadd.f32 0.0, %v1551
    %v1553 = vpop.f32.mrb[0].mxu0
    %v1554 = vpop.f32.mrb[0].mxu0
    %v1555 = vadd.f32 0.0, %v1554
    %v1556 = vpop.f32.mrb[0].mxu0
    %1557 = vmatprep.mubr.bf16.mxu0 0
    %1558 = vmatmul.mubr.bf16.gmra.mrb[0].mxu0 %v1445
    %v1559 = vpop.f32.mrb[0].mxu0
    %v1560 = vadd.f32 0.0, %v1559
    %v1561 = vpop.f32.mrb[0].mxu0
    %v1562 = vpop.f32.mrb[0].mxu0
    %v1563 = vadd.f32 0.0, %v1562
    %v1564 = vpop.f32.mrb[0].mxu0
    %1565 = vmatprep.mubr.bf16.mxu0 0
    %1566 = vmatmul.mubr.bf16.gmra.mrb[0].mxu0 %v1446
    %v1567 = vpop.f32.mrb[0].mxu0
    %v1568 = vadd.f32 0.0, %v1567
    %v1569 = vpop.f32.mrb[0].mxu0
    %v1570 = vpop.f32.mrb[0].mxu0
    %v1571 = vadd.f32 0.0, %v1570
    %v1572 = vpop.f32.mrb[0].mxu0
    %1573 = vmatprep.mubr.bf16.mxu0 0
    %1574 = vmatmul.mubr.bf16.gmra.mrb[0].mxu0 %v1447
    %v1575 = vpop.f32.mrb[0].mxu0
    %v1576 = vadd.f32 0.0, %v1575
    %v1577 = vpop.f32.mrb[0].mxu0
    %v1578 = vpop.f32.mrb[0].mxu0
    %v1579 = vadd.f32 0.0, %v1578
    %v1580 = vpop.f32.mrb[0].mxu0
    %1581 = vmatprep.mubr.bf16.mxu0 0
    %1582 = vmatmul.mubr.bf16.gmra.mrb[0].mxu0 %v1448
    %v1583 = vpop.f32.mrb[0].mxu0
    %v1584 = vadd.f32 0.0, %v1583
    %v1585 = vpop.f32.mrb[0].mxu0
    %v1586 = vpop.f32.mrb[0].mxu0
    %v1587 = vadd.f32 0.0, %v1586
    %v1588 = vpop.f32.mrb[0].mxu0
    %1589 = vmatprep.mubr.bf16.mxu0 0
    %1590 = vmatmul.mubr.bf16.gmra.mrb[0].mxu0 %v1449
    %v1591 = vpop.f32.mrb[0].mxu0
    %v1592 = vadd.f32 0.0, %v1591
    %v1593 = vpop.f32.mrb[0].mxu0
    %v1594 = vpop.f32.mrb[0].mxu0
    %v1595 = vadd.f32 0.0, %v1594
    %v1596 = vpop.f32.mrb[0].mxu0
    %1597 = vmatprep.mubr.bf16.mxu0 0
    %1598 = vmatmul.mubr.bf16.gmra.mrb[0].mxu0 %v1450
    %v1599 = vpop.f32.mrb[0].mxu0
    %v1600 = vadd.f32 0.0, %v1599
    %v1601 = vpop.f32.mrb[0].mxu0
    %v1602 = vpop.f32.mrb[0].mxu0
    %v1603 = vadd.f32 0.0, %v1602
    %v1604 = vpop.f32.mrb[0].mxu0
    %1605 = vmatprep.mubr.bf16.mxu0 0
    %1606 = vmatmul.mubr.bf16.gmra.mrb[0].mxu0 %v1451
    %v1607 = vpop.f32.mrb[0].mxu0
    %v1608 = vadd.f32 0.0, %v1607
    %v1609 = vpop.f32.mrb[0].mxu0
    %v1610 = vpop.f32.mrb[0].mxu0
    %v1611 = vadd.f32 0.0, %v1610
    %v1612 = vpop.f32.mrb[0].mxu0
    %1613 = vdwg.mxu0
    %v1614 = vpack.c.bf16 %v1555, %v1552
    %v1615 = vpack.c.bf16 %v1563, %v1560
    %v1616 = vpack.c.bf16 %v1571, %v1568
    %v1617 = vpack.c.bf16 %v1579, %v1576
    %v1618 = vpack.c.bf16 %v1587, %v1584
    %v1619 = vpack.c.bf16 %v1595, %v1592
    %v1620 = vpack.c.bf16 %v1603, %v1600
    %v1621 = vpack.c.bf16 %v1611, %v1608
    %v1622 = vld [vmem:[#allocation10 + $0x8] sm:$0x1]
    %v1623 = vlaneseq
    %v1624 = vshrl.u32 %v1623, 7
    %v1625 = vsub.s32 0, %v1624
    %v1626 = vrot.slane %v1622, %v1625
    %v1643 = vunpack.c.l.b16 %v106
    %v1644 = vunpack.c.l.b16 %v107
    %v1645 = vunpack.c.l.b16 %v108
    %v1646 = vunpack.c.l.b16 %v109
    %v1647 = vunpack.c.l.b16 %v110
    %v1648 = vunpack.c.l.b16 %v111
    %v1649 = vunpack.c.l.b16 %v112
    %v1650 = vunpack.c.l.b16 %v113
    %v1651 = vunpack.c.l.b16 %v114
    %v1652 = vunpack.c.l.b16 %v115
    %v1653 = vunpack.c.l.b16 %v116
    %v1654 = vunpack.c.l.b16 %v117
    %v1655 = vunpack.c.l.b16 %v118
    %v1656 = vunpack.c.l.b16 %v119
    %v1657 = vunpack.c.l.b16 %v120
    %v1658 = vunpack.c.l.b16 %v121
    %v1659 = vpack.c.b16 %v1644, %v1643
    %v1660 = vpack.c.b16 %v1646, %v1645
    %v1661 = vpack.c.b16 %v1648, %v1647
    %v1662 = vpack.c.b16 %v1650, %v1649
    %v1663 = vpack.c.b16 %v1652, %v1651
    %v1664 = vpack.c.b16 %v1654, %v1653
    %v1665 = vpack.c.b16 %v1656, %v1655
    %v1666 = vpack.c.b16 %v1658, %v1657
    %1675 = vmatprep.subr.bf16.mxu0 0
    %1676 = vmatpush1.bf16.msra.mxu0 %v1614
    %1677 = vmatprep.subr.bf16.mxu0 0
    %1678 = vmatpush1.bf16.msra.mxu0 %v1615
    %1679 = vmatprep.subr.bf16.mxu0 0
    %1680 = vmatpush1.bf16.msra.mxu0 %v1616
    %1681 = vmatprep.subr.bf16.mxu0 0
    %1682 = vmatpush1.bf16.msra.mxu0 %v1617
    %1683 = vmatprep.subr.bf16.mxu0 0
    %1684 = vmatpush1.bf16.msra.mxu0 %v1618
    %1685 = vmatprep.subr.bf16.mxu0 0
    %1686 = vmatpush1.bf16.msra.mxu0 %v1619
    %1687 = vmatprep.subr.bf16.mxu0 0
    %1688 = vmatpush1.bf16.msra.mxu0 %v1620
    %1689 = vmatprep.subr.bf16.mxu0 0
    %1690 = vmatpush1.bf16.msra.mxu0 %v1621
    %1691 = vmatprep.subr.bf16.mxu0 0
    %1692 = vmatpush1.bf16.msra.mxu0 0
    %1693 = vmatprep.subr.bf16.mxu0 0
    %1694 = vmatpush1.bf16.msra.mxu0 0
    %1695 = vmatprep.subr.bf16.mxu0 0
    %1696 = vmatpush1.bf16.msra.mxu0 0
    %1697 = vmatprep.subr.bf16.mxu0 0
    %1698 = vmatpush1.bf16.msra.mxu0 0
    %1699 = vmatprep.subr.bf16.mxu0 0
    %1700 = vmatpush1.bf16.msra.mxu0 0
    %1701 = vmatprep.subr.bf16.mxu0 0
    %1702 = vmatpush1.bf16.msra.mxu0 0
    %1703 = vmatprep.subr.bf16.mxu0 0
    %1704 = vmatpush1.bf16.msra.mxu0 0
    %1705 = vmatprep.subr.bf16.mxu0 0
    %1706 = vmatpush1.bf16.msra.mxu0 0
    %1707 = vmatprep.mubr.bf16.mxu0 0
    %1708 = vmatmul.mubr.bf16.gmra.mrb[0].mxu0 %v1659
    %v1709 = vpop.f32.mrb[0].mxu0
    %v1710 = vadd.f32 %v1626, %v1709
    %v1711 = vpop.f32.mrb[0].mxu0
    %v1712 = vpop.f32.mrb[0].mxu0
    %v1713 = vadd.f32 %v1626, %v1712
    %v1714 = vpop.f32.mrb[0].mxu0
    %1715 = vmatprep.mubr.bf16.mxu0 0
    %1716 = vmatmul.mubr.bf16.gmra.mrb[0].mxu0 %v1660
    %v1717 = vpop.f32.mrb[0].mxu0
    %v1718 = vadd.f32 %v1626, %v1717
    %v1719 = vpop.f32.mrb[0].mxu0
    %v1720 = vpop.f32.mrb[0].mxu0
    %v1721 = vadd.f32 %v1626, %v1720
    %v1722 = vpop.f32.mrb[0].mxu0
    %1723 = vmatprep.mubr.bf16.mxu0 0
    %1724 = vmatmul.mubr.bf16.gmra.mrb[0].mxu0 %v1661
    %v1725 = vpop.f32.mrb[0].mxu0
    %v1726 = vadd.f32 %v1626, %v1725
    %v1727 = vpop.f32.mrb[0].mxu0
    %v1728 = vpop.f32.mrb[0].mxu0
    %v1729 = vadd.f32 %v1626, %v1728
    %v1730 = vpop.f32.mrb[0].mxu0
    %1731 = vmatprep.mubr.bf16.mxu0 0
    %1732 = vmatmul.mubr.bf16.gmra.mrb[0].mxu0 %v1662
    %v1733 = vpop.f32.mrb[0].mxu0
    %v1734 = vadd.f32 %v1626, %v1733
    %v1735 = vpop.f32.mrb[0].mxu0
    %v1736 = vpop.f32.mrb[0].mxu0
    %v1737 = vadd.f32 %v1626, %v1736
    %v1738 = vpop.f32.mrb[0].mxu0
    %1739 = vmatprep.mubr.bf16.mxu0 0
    %1740 = vmatmul.mubr.bf16.gmra.mrb[0].mxu0 %v1663
    %v1741 = vpop.f32.mrb[0].mxu0
    %v1742 = vadd.f32 %v1626, %v1741
    %v1743 = vpop.f32.mrb[0].mxu0
    %v1744 = vpop.f32.mrb[0].mxu0
    %v1745 = vadd.f32 %v1626, %v1744
    %v1746 = vpop.f32.mrb[0].mxu0
    %1747 = vmatprep.mubr.bf16.mxu0 0
    %1748 = vmatmul.mubr.bf16.gmra.mrb[0].mxu0 %v1664
    %v1749 = vpop.f32.mrb[0].mxu0
    %v1750 = vadd.f32 %v1626, %v1749
    %v1751 = vpop.f32.mrb[0].mxu0
    %v1752 = vpop.f32.mrb[0].mxu0
    %v1753 = vadd.f32 %v1626, %v1752
    %v1754 = vpop.f32.mrb[0].mxu0
    %1755 = vmatprep.mubr.bf16.mxu0 0
    %1756 = vmatmul.mubr.bf16.gmra.mrb[0].mxu0 %v1665
    %v1757 = vpop.f32.mrb[0].mxu0
    %v1758 = vadd.f32 %v1626, %v1757
    %v1759 = vpop.f32.mrb[0].mxu0
    %v1760 = vpop.f32.mrb[0].mxu0
    %v1761 = vadd.f32 %v1626, %v1760
    %v1762 = vpop.f32.mrb[0].mxu0
    %1763 = vmatprep.mubr.bf16.mxu0 0
    %1764 = vmatmul.mubr.bf16.gmra.mrb[0].mxu0 %v1666
    %v1765 = vpop.f32.mrb[0].mxu0
    %v1766 = vadd.f32 %v1626, %v1765
    %v1767 = vpop.f32.mrb[0].mxu0
    %v1768 = vpop.f32.mrb[0].mxu0
    %v1769 = vadd.f32 %v1626, %v1768
    %v1770 = vpop.f32.mrb[0].mxu0
    %1771 = vdwg.mxu0
    %s1772 = scalar_lea.vmem [#allocation8], 384
    %v1773 = vld [vmem:[%s1772] sm:$0xf]
    %v1774 = vld [vmem:[%s1772 + $0x4] sm:$0xf]
    %v1775 = vld [vmem:[%s1772 + $0x8] sm:$0xf]
    %v1776 = vld [vmem:[%s1772 + $0xc] sm:$0xf]
    %v1777 = vld [vmem:[%s1772 + $0x10] sm:$0xf]
    %v1778 = vld [vmem:[%s1772 + $0x14] sm:$0xf]
    %v1779 = vld [vmem:[%s1772 + $0x18] sm:$0xf]
    %v1780 = vld [vmem:[%s1772 + $0x1c] sm:$0xf]
    %v1781 = vld [vmem:[%s1772 + $0x20] sm:$0xf]
    %v1782 = vld [vmem:[%s1772 + $0x24] sm:$0xf]
    %v1783 = vld [vmem:[%s1772 + $0x28] sm:$0xf]
    %v1784 = vld [vmem:[%s1772 + $0x2c] sm:$0xf]
    %v1785 = vld [vmem:[%s1772 + $0x30] sm:$0xf]
    %v1786 = vld [vmem:[%s1772 + $0x34] sm:$0xf]
    %v1787 = vld [vmem:[%s1772 + $0x38] sm:$0xf]
    %v1788 = vld [vmem:[%s1772 + $0x3c] sm:$0xf]
    %v1805 = vunpack.c.l.b16 %v1773
    %v1806 = vunpack.c.l.b16 %v1774
    %v1807 = vunpack.c.l.b16 %v1775
    %v1808 = vunpack.c.l.b16 %v1776
    %v1809 = vunpack.c.l.b16 %v1777
    %v1810 = vunpack.c.l.b16 %v1778
    %v1811 = vunpack.c.l.b16 %v1779
    %v1812 = vunpack.c.l.b16 %v1780
    %v1813 = vunpack.c.l.b16 %v1781
    %v1814 = vunpack.c.l.b16 %v1782
    %v1815 = vunpack.c.l.b16 %v1783
    %v1816 = vunpack.c.l.b16 %v1784
    %v1817 = vunpack.c.l.b16 %v1785
    %v1818 = vunpack.c.l.b16 %v1786
    %v1819 = vunpack.c.l.b16 %v1787
    %v1820 = vunpack.c.l.b16 %v1788
    %v1821 = vpack.c.b16 %v1806, %v1805
    %v1822 = vpack.c.b16 %v1808, %v1807
    %v1823 = vpack.c.b16 %v1810, %v1809
    %v1824 = vpack.c.b16 %v1812, %v1811
    %v1825 = vpack.c.b16 %v1814, %v1813
    %v1826 = vpack.c.b16 %v1816, %v1815
    %v1827 = vpack.c.b16 %v1818, %v1817
    %v1828 = vpack.c.b16 %v1820, %v1819
    %1837 = vmatprep.subr.bf16.mxu0 0
    %1838 = vmatpush1.bf16.msra.mxu0 %v1821
    %1839 = vmatprep.subr.bf16.mxu0 0
    %1840 = vmatpush1.bf16.msra.mxu0 %v1822
    %1841 = vmatprep.subr.bf16.mxu0 0
    %1842 = vmatpush1.bf16.msra.mxu0 %v1823
    %1843 = vmatprep.subr.bf16.mxu0 0
    %1844 = vmatpush1.bf16.msra.mxu0 %v1824
    %1845 = vmatprep.subr.bf16.mxu0 0
    %1846 = vmatpush1.bf16.msra.mxu0 %v1825
    %1847 = vmatprep.subr.bf16.mxu0 0
    %1848 = vmatpush1.bf16.msra.mxu0 %v1826
    %1849 = vmatprep.subr.bf16.mxu0 0
    %1850 = vmatpush1.bf16.msra.mxu0 %v1827
    %1851 = vmatprep.subr.bf16.mxu0 0
    %1852 = vmatpush1.bf16.msra.mxu0 %v1828
    %1853 = vmatprep.subr.bf16.mxu0 0
    %1854 = vmatpush1.bf16.msra.mxu0 0
    %1855 = vmatprep.subr.bf16.mxu0 0
    %1856 = vmatpush1.bf16.msra.mxu0 0
    %1857 = vmatprep.subr.bf16.mxu0 0
    %1858 = vmatpush1.bf16.msra.mxu0 0
    %1859 = vmatprep.subr.bf16.mxu0 0
    %1860 = vmatpush1.bf16.msra.mxu0 0
    %1861 = vmatprep.subr.bf16.mxu0 0
    %1862 = vmatpush1.bf16.msra.mxu0 0
    %1863 = vmatprep.subr.bf16.mxu0 0
    %1864 = vmatpush1.bf16.msra.mxu0 0
    %1865 = vmatprep.subr.bf16.mxu0 0
    %1866 = vmatpush1.bf16.msra.mxu0 0
    %1867 = vmatprep.subr.bf16.mxu0 0
    %1868 = vmatpush1.bf16.msra.mxu0 0
    %1869 = vmatprep.mubr.bf16.mxu0 0
    %1870 = vmatmul.mubr.bf16.gmra.mrb[0].mxu0 %v1444
    %v1871 = vpop.f32.mrb[0].mxu0
    %v1872 = vadd.f32 0.0, %v1871
    %v1873 = vpop.f32.mrb[0].mxu0
    %v1874 = vpop.f32.mrb[0].mxu0
    %v1875 = vadd.f32 0.0, %v1874
    %v1876 = vpop.f32.mrb[0].mxu0
    %1877 = vmatprep.mubr.bf16.mxu0 0
    %1878 = vmatmul.mubr.bf16.gmra.mrb[0].mxu0 %v1445
    %v1879 = vpop.f32.mrb[0].mxu0
    %v1880 = vadd.f32 0.0, %v1879
    %v1881 = vpop.f32.mrb[0].mxu0
    %v1882 = vpop.f32.mrb[0].mxu0
    %v1883 = vadd.f32 0.0, %v1882
    %v1884 = vpop.f32.mrb[0].mxu0
    %1885 = vmatprep.mubr.bf16.mxu0 0
    %1886 = vmatmul.mubr.bf16.gmra.mrb[0].mxu0 %v1446
    %v1887 = vpop.f32.mrb[0].mxu0
    %v1888 = vadd.f32 0.0, %v1887
    %v1889 = vpop.f32.mrb[0].mxu0
    %v1890 = vpop.f32.mrb[0].mxu0
    %v1891 = vadd.f32 0.0, %v1890
    %v1892 = vpop.f32.mrb[0].mxu0
    %1893 = vmatprep.mubr.bf16.mxu0 0
    %1894 = vmatmul.mubr.bf16.gmra.mrb[0].mxu0 %v1447
    %v1895 = vpop.f32.mrb[0].mxu0
    %v1896 = vadd.f32 0.0, %v1895
    %v1897 = vpop.f32.mrb[0].mxu0
    %v1898 = vpop.f32.mrb[0].mxu0
    %v1899 = vadd.f32 0.0, %v1898
    %v1900 = vpop.f32.mrb[0].mxu0
    %1901 = vmatprep.mubr.bf16.mxu0 0
    %1902 = vmatmul.mubr.bf16.gmra.mrb[0].mxu0 %v1448
    %v1903 = vpop.f32.mrb[0].mxu0
    %v1904 = vadd.f32 0.0, %v1903
    %v1905 = vpop.f32.mrb[0].mxu0
    %v1906 = vpop.f32.mrb[0].mxu0
    %v1907 = vadd.f32 0.0, %v1906
    %v1908 = vpop.f32.mrb[0].mxu0
    %1909 = vmatprep.mubr.bf16.mxu0 0
    %1910 = vmatmul.mubr.bf16.gmra.mrb[0].mxu0 %v1449
    %v1911 = vpop.f32.mrb[0].mxu0
    %v1912 = vadd.f32 0.0, %v1911
    %v1913 = vpop.f32.mrb[0].mxu0
    %v1914 = vpop.f32.mrb[0].mxu0
    %v1915 = vadd.f32 0.0, %v1914
    %v1916 = vpop.f32.mrb[0].mxu0
    %1917 = vmatprep.mubr.bf16.mxu0 0
    %1918 = vmatmul.mubr.bf16.gmra.mrb[0].mxu0 %v1450
    %v1919 = vpop.f32.mrb[0].mxu0
    %v1920 = vadd.f32 0.0, %v1919
    %v1921 = vpop.f32.mrb[0].mxu0
    %v1922 = vpop.f32.mrb[0].mxu0
    %v1923 = vadd.f32 0.0, %v1922
    %v1924 = vpop.f32.mrb[0].mxu0
    %1925 = vmatprep.mubr.bf16.mxu0 0
    %1926 = vmatmul.mubr.bf16.gmra.mrb[0].mxu0 %v1451
    %v1927 = vpop.f32.mrb[0].mxu0
    %v1928 = vadd.f32 0.0, %v1927
    %v1929 = vpop.f32.mrb[0].mxu0
    %v1930 = vpop.f32.mrb[0].mxu0
    %v1931 = vadd.f32 0.0, %v1930
    %v1932 = vpop.f32.mrb[0].mxu0
    %1933 = vdwg.mxu0
    %v1934 = vadd.f32 %v1710, %v1872
    %v1935 = vadd.f32 %v1713, %v1875
    %v1936 = vadd.f32 %v1718, %v1880
    %v1937 = vadd.f32 %v1721, %v1883
    %v1938 = vadd.f32 %v1726, %v1888
    %v1939 = vadd.f32 %v1729, %v1891
    %v1940 = vadd.f32 %v1734, %v1896
    %v1941 = vadd.f32 %v1737, %v1899
    %v1942 = vadd.f32 %v1742, %v1904
    %v1943 = vadd.f32 %v1745, %v1907
    %v1944 = vadd.f32 %v1750, %v1912
    %v1945 = vadd.f32 %v1753, %v1915
    %v1946 = vadd.f32 %v1758, %v1920
    %v1947 = vadd.f32 %v1761, %v1923
    %v1948 = vadd.f32 %v1766, %v1928
    %v1949 = vadd.f32 %v1769, %v1931
    %v1950 = vld [vmem:[#allocation10 + $0x9] sm:$0x1]
    %v1951 = vlaneseq
    %v1952 = vshrl.u32 %v1951, 7
    %v1953 = vsub.s32 0, %v1952
    %v1954 = vrot.slane %v1950, %v1953
    %v1955 = vadd.f32 %v1934, %v1954
    %v1956 = vadd.f32 %v1935, %v1954
    %v1957 = vadd.f32 %v1936, %v1954
    %v1958 = vadd.f32 %v1937, %v1954
    %v1959 = vadd.f32 %v1938, %v1954
    %v1960 = vadd.f32 %v1939, %v1954
    %v1961 = vadd.f32 %v1940, %v1954
    %v1962 = vadd.f32 %v1941, %v1954
    %v1963 = vadd.f32 %v1942, %v1954
    %v1964 = vadd.f32 %v1943, %v1954
    %v1965 = vadd.f32 %v1944, %v1954
    %v1966 = vadd.f32 %v1945, %v1954
    %v1967 = vadd.f32 %v1946, %v1954
    %v1968 = vadd.f32 %v1947, %v1954
    %v1969 = vadd.f32 %v1948, %v1954
    %v1970 = vadd.f32 %v1949, %v1954
    %v1971 = vld [vmem:[#allocation10 + $0xa] sm:$0x1]
    %v1972 = vlaneseq
    %v1973 = vshrl.u32 %v1972, 7
    %v1974 = vsub.s32 0, %v1973
    %v1975 = vrot.slane %v1971, %v1974
    %v1976 = vmul.f32 %v1955, %v1975
    %v1977 = vmul.f32 %v1956, %v1975
    %v1978 = vmul.f32 %v1957, %v1975
    %v1979 = vmul.f32 %v1958, %v1975
    %v1980 = vmul.f32 %v1959, %v1975
    %v1981 = vmul.f32 %v1960, %v1975
    %v1982 = vmul.f32 %v1961, %v1975
    %v1983 = vmul.f32 %v1962, %v1975
    %v1984 = vmul.f32 %v1963, %v1975
    %v1985 = vmul.f32 %v1964, %v1975
    %v1986 = vmul.f32 %v1965, %v1975
    %v1987 = vmul.f32 %v1966, %v1975
    %v1988 = vmul.f32 %v1967, %v1975
    %v1989 = vmul.f32 %v1968, %v1975
    %v1990 = vmul.f32 %v1969, %v1975
    %v1991 = vmul.f32 %v1970, %v1975
    %v1992 = vld [vmem:[#allocation10 + $0xb] sm:$0x1]
    %v1993 = vlaneseq
    %v1994 = vshrl.u32 %v1993, 7
    %v1995 = vsub.s32 0, %v1994
    %v1996 = vrot.slane %v1992, %v1995
    %v1997 = vadd.f32 %v1976, %v1996
    %v1998 = vadd.f32 %v1977, %v1996
    %v1999 = vadd.f32 %v1978, %v1996
    %v2000 = vadd.f32 %v1979, %v1996
    %v2001 = vadd.f32 %v1980, %v1996
    %v2002 = vadd.f32 %v1981, %v1996
    %v2003 = vadd.f32 %v1982, %v1996
    %v2004 = vadd.f32 %v1983, %v1996
    %v2005 = vadd.f32 %v1984, %v1996
    %v2006 = vadd.f32 %v1985, %v1996
    %v2007 = vadd.f32 %v1986, %v1996
    %v2008 = vadd.f32 %v1987, %v1996
    %v2009 = vadd.f32 %v1988, %v1996
    %v2010 = vadd.f32 %v1989, %v1996
    %v2011 = vadd.f32 %v1990, %v1996
    %v2012 = vadd.f32 %v1991, %v1996
    %v2013 = vpack.c.bf16 %v1998, %v1997
    %v2014 = vpack.c.bf16 %v2000, %v1999
    %v2015 = vpack.c.bf16 %v2002, %v2001
    %v2016 = vpack.c.bf16 %v2004, %v2003
    %v2017 = vpack.c.bf16 %v2006, %v2005
    %v2018 = vpack.c.bf16 %v2008, %v2007
    %v2019 = vpack.c.bf16 %v2010, %v2009
    %v2020 = vpack.c.bf16 %v2012, %v2011
    %s2021 = scalar_lea.vmem [#allocation8], 448
    %v2022 = vld [vmem:[%s2021] sm:$0xf]
    %v2023 = vld [vmem:[%s2021 + $0x4] sm:$0xf]
    %v2024 = vld [vmem:[%s2021 + $0x8] sm:$0xf]
    %v2025 = vld [vmem:[%s2021 + $0xc] sm:$0xf]
    %v2026 = vld [vmem:[%s2021 + $0x10] sm:$0xf]
    %v2027 = vld [vmem:[%s2021 + $0x14] sm:$0xf]
    %v2028 = vld [vmem:[%s2021 + $0x18] sm:$0xf]
    %v2029 = vld [vmem:[%s2021 + $0x1c] sm:$0xf]
    %v2030 = vld [vmem:[%s2021 + $0x20] sm:$0xf]
    %v2031 = vld [vmem:[%s2021 + $0x24] sm:$0xf]
    %v2032 = vld [vmem:[%s2021 + $0x28] sm:$0xf]
    %v2033 = vld [vmem:[%s2021 + $0x2c] sm:$0xf]
    %v2034 = vld [vmem:[%s2021 + $0x30] sm:$0xf]
    %v2035 = vld [vmem:[%s2021 + $0x34] sm:$0xf]
    %v2036 = vld [vmem:[%s2021 + $0x38] sm:$0xf]
    %v2037 = vld [vmem:[%s2021 + $0x3c] sm:$0xf]
    %v2038 = vld [vmem:[#allocation10 + $0xc] sm:$0x1]
    %v2039 = vlaneseq
    %v2040 = vshrl.u32 %v2039, 7
    %v2041 = vsub.s32 0, %v2040
    %v2042 = vrot.slane %v2038, %v2041
    %v2059 = vunpack.c.l.b16 %v2022
    %v2060 = vunpack.c.l.b16 %v2023
    %v2061 = vunpack.c.l.b16 %v2024
    %v2062 = vunpack.c.l.b16 %v2025
    %v2063 = vunpack.c.l.b16 %v2026
    %v2064 = vunpack.c.l.b16 %v2027
    %v2065 = vunpack.c.l.b16 %v2028
    %v2066 = vunpack.c.l.b16 %v2029
    %v2067 = vunpack.c.l.b16 %v2030
    %v2068 = vunpack.c.l.b16 %v2031
    %v2069 = vunpack.c.l.b16 %v2032
    %v2070 = vunpack.c.l.b16 %v2033
    %v2071 = vunpack.c.l.b16 %v2034
    %v2072 = vunpack.c.l.b16 %v2035
    %v2073 = vunpack.c.l.b16 %v2036
    %v2074 = vunpack.c.l.b16 %v2037
    %v2075 = vpack.c.b16 %v2060, %v2059
    %v2076 = vpack.c.b16 %v2062, %v2061
    %v2077 = vpack.c.b16 %v2064, %v2063
    %v2078 = vpack.c.b16 %v2066, %v2065
    %v2079 = vpack.c.b16 %v2068, %v2067
    %v2080 = vpack.c.b16 %v2070, %v2069
    %v2081 = vpack.c.b16 %v2072, %v2071
    %v2082 = vpack.c.b16 %v2074, %v2073
    %2091 = vmatprep.subr.bf16.mxu0 0
    %2092 = vmatpush1.bf16.msra.mxu0 %v2075
    %2093 = vmatprep.subr.bf16.mxu0 0
    %2094 = vmatpush1.bf16.msra.mxu0 %v2076
    %2095 = vmatprep.subr.bf16.mxu0 0
    %2096 = vmatpush1.bf16.msra.mxu0 %v2077
    %2097 = vmatprep.subr.bf16.mxu0 0
    %2098 = vmatpush1.bf16.msra.mxu0 %v2078
    %2099 = vmatprep.subr.bf16.mxu0 0
    %2100 = vmatpush1.bf16.msra.mxu0 %v2079
    %2101 = vmatprep.subr.bf16.mxu0 0
    %2102 = vmatpush1.bf16.msra.mxu0 %v2080
    %2103 = vmatprep.subr.bf16.mxu0 0
    %2104 = vmatpush1.bf16.msra.mxu0 %v2081
    %2105 = vmatprep.subr.bf16.mxu0 0
    %2106 = vmatpush1.bf16.msra.mxu0 %v2082
    %2107 = vmatprep.subr.bf16.mxu0 0
    %2108 = vmatpush1.bf16.msra.mxu0 0
    %2109 = vmatprep.subr.bf16.mxu0 0
    %2110 = vmatpush1.bf16.msra.mxu0 0
    %2111 = vmatprep.subr.bf16.mxu0 0
    %2112 = vmatpush1.bf16.msra.mxu0 0
    %2113 = vmatprep.subr.bf16.mxu0 0
    %2114 = vmatpush1.bf16.msra.mxu0 0
    %2115 = vmatprep.subr.bf16.mxu0 0
    %2116 = vmatpush1.bf16.msra.mxu0 0
    %2117 = vmatprep.subr.bf16.mxu0 0
    %2118 = vmatpush1.bf16.msra.mxu0 0
    %2119 = vmatprep.subr.bf16.mxu0 0
    %2120 = vmatpush1.bf16.msra.mxu0 0
    %2121 = vmatprep.subr.bf16.mxu0 0
    %2122 = vmatpush1.bf16.msra.mxu0 0
    %2123 = vmatprep.mubr.bf16.mxu0 0
    %2124 = vmatmul.mubr.bf16.gmra.mrb[0].mxu0 %v2013
    %v2125 = vpop.f32.mrb[0].mxu0
    %v2126 = vadd.f32 %v2042, %v2125
    %v2127 = vpop.f32.mrb[0].mxu0
    %v2128 = vpop.f32.mrb[0].mxu0
    %v2129 = vadd.f32 %v2042, %v2128
    %v2130 = vpop.f32.mrb[0].mxu0
    %2131 = vmatprep.mubr.bf16.mxu0 0
    %2132 = vmatmul.mubr.bf16.gmra.mrb[0].mxu0 %v2014
    %v2133 = vpop.f32.mrb[0].mxu0
    %v2134 = vadd.f32 %v2042, %v2133
    %v2135 = vpop.f32.mrb[0].mxu0
    %v2136 = vpop.f32.mrb[0].mxu0
    %v2137 = vadd.f32 %v2042, %v2136
    %v2138 = vpop.f32.mrb[0].mxu0
    %2139 = vmatprep.mubr.bf16.mxu0 0
    %2140 = vmatmul.mubr.bf16.gmra.mrb[0].mxu0 %v2015
    %v2141 = vpop.f32.mrb[0].mxu0
    %v2142 = vadd.f32 %v2042, %v2141
    %v2143 = vpop.f32.mrb[0].mxu0
    %v2144 = vpop.f32.mrb[0].mxu0
    %v2145 = vadd.f32 %v2042, %v2144
    %v2146 = vpop.f32.mrb[0].mxu0
    %2147 = vmatprep.mubr.bf16.mxu0 0
    %2148 = vmatmul.mubr.bf16.gmra.mrb[0].mxu0 %v2016
    %v2149 = vpop.f32.mrb[0].mxu0
    %v2150 = vadd.f32 %v2042, %v2149
    %v2151 = vpop.f32.mrb[0].mxu0
    %v2152 = vpop.f32.mrb[0].mxu0
    %v2153 = vadd.f32 %v2042, %v2152
    %v2154 = vpop.f32.mrb[0].mxu0
    %2155 = vmatprep.mubr.bf16.mxu0 0
    %2156 = vmatmul.mubr.bf16.gmra.mrb[0].mxu0 %v2017
    %v2157 = vpop.f32.mrb[0].mxu0
    %v2158 = vadd.f32 %v2042, %v2157
    %v2159 = vpop.f32.mrb[0].mxu0
    %v2160 = vpop.f32.mrb[0].mxu0
    %v2161 = vadd.f32 %v2042, %v2160
    %v2162 = vpop.f32.mrb[0].mxu0
    %2163 = vmatprep.mubr.bf16.mxu0 0
    %2164 = vmatmul.mubr.bf16.gmra.mrb[0].mxu0 %v2018
    %v2165 = vpop.f32.mrb[0].mxu0
    %v2166 = vadd.f32 %v2042, %v2165
    %v2167 = vpop.f32.mrb[0].mxu0
    %v2168 = vpop.f32.mrb[0].mxu0
    %v2169 = vadd.f32 %v2042, %v2168
    %v2170 = vpop.f32.mrb[0].mxu0
    %2171 = vmatprep.mubr.bf16.mxu0 0
    %2172 = vmatmul.mubr.bf16.gmra.mrb[0].mxu0 %v2019
    %v2173 = vpop.f32.mrb[0].mxu0
    %v2174 = vadd.f32 %v2042, %v2173
    %v2175 = vpop.f32.mrb[0].mxu0
    %v2176 = vpop.f32.mrb[0].mxu0
    %v2177 = vadd.f32 %v2042, %v2176
    %v2178 = vpop.f32.mrb[0].mxu0
    %2179 = vmatprep.mubr.bf16.mxu0 0
    %2180 = vmatmul.mubr.bf16.gmra.mrb[0].mxu0 %v2020
    %v2181 = vpop.f32.mrb[0].mxu0
    %v2182 = vadd.f32 %v2042, %v2181
    %v2183 = vpop.f32.mrb[0].mxu0
    %v2184 = vpop.f32.mrb[0].mxu0
    %v2185 = vadd.f32 %v2042, %v2184
    %v2186 = vpop.f32.mrb[0].mxu0
    %2187 = vdwg.mxu0
    %v2188 = vmul.f32 %v2126, 0.5
    %v2189 = vmul.f32 %v2129, 0.5
    %v2190 = vmul.f32 %v2134, 0.5
    %v2191 = vmul.f32 %v2137, 0.5
    %v2192 = vmul.f32 %v2142, 0.5
    %v2193 = vmul.f32 %v2145, 0.5
    %v2194 = vmul.f32 %v2150, 0.5
    %v2195 = vmul.f32 %v2153, 0.5
    %v2196 = vmul.f32 %v2158, 0.5
    %v2197 = vmul.f32 %v2161, 0.5
    %v2198 = vmul.f32 %v2166, 0.5
    %v2199 = vmul.f32 %v2169, 0.5
    %v2200 = vmul.f32 %v2174, 0.5
    %v2201 = vmul.f32 %v2177, 0.5
    %v2202 = vmul.f32 %v2182, 0.5
    %v2203 = vmul.f32 %v2185, 0.5
    %v2204 = vmul.f32 %v2126, 0.70710677
    %v2205 = vmul.f32 %v2129, 0.70710677
    %v2206 = vmul.f32 %v2134, 0.70710677
    %v2207 = vmul.f32 %v2137, 0.70710677
    %v2208 = vmul.f32 %v2142, 0.70710677
    %v2209 = vmul.f32 %v2145, 0.70710677
    %v2210 = vmul.f32 %v2150, 0.70710677
    %v2211 = vmul.f32 %v2153, 0.70710677
    %v2212 = vmul.f32 %v2158, 0.70710677
    %v2213 = vmul.f32 %v2161, 0.70710677
    %v2214 = vmul.f32 %v2166, 0.70710677
    %v2215 = vmul.f32 %v2169, 0.70710677
    %v2216 = vmul.f32 %v2174, 0.70710677
    %v2217 = vmul.f32 %v2177, 0.70710677
    %v2218 = vmul.f32 %v2182, 0.70710677
    %v2219 = vmul.f32 %v2185, 0.70710677
    %v2220 = verf.f32.pop %v2204
    %v2221 = verf.f32.pop %v2205
    %v2222 = verf.f32.pop %v2206
    %v2223 = verf.f32.pop %v2207
    %v2224 = verf.f32.pop %v2208
    %v2225 = verf.f32.pop %v2209
    %v2226 = verf.f32.pop %v2210
    %v2227 = verf.f32.pop %v2211
    %v2228 = verf.f32.pop %v2212
    %v2229 = verf.f32.pop %v2213
    %v2230 = verf.f32.pop %v2214
    %v2231 = verf.f32.pop %v2215
    %v2232 = verf.f32.pop %v2216
    %v2233 = verf.f32.pop %v2217
    %v2234 = verf.f32.pop %v2218
    %v2235 = verf.f32.pop %v2219
    %v2236 = vadd.f32 %v2220, 1.0
    %v2237 = vadd.f32 %v2221, 1.0
    %v2238 = vadd.f32 %v2222, 1.0
    %v2239 = vadd.f32 %v2223, 1.0
    %v2240 = vadd.f32 %v2224, 1.0
    %v2241 = vadd.f32 %v2225, 1.0
    %v2242 = vadd.f32 %v2226, 1.0
    %v2243 = vadd.f32 %v2227, 1.0
    %v2244 = vadd.f32 %v2228, 1.0
    %v2245 = vadd.f32 %v2229, 1.0
    %v2246 = vadd.f32 %v2230, 1.0
    %v2247 = vadd.f32 %v2231, 1.0
    %v2248 = vadd.f32 %v2232, 1.0
    %v2249 = vadd.f32 %v2233, 1.0
    %v2250 = vadd.f32 %v2234, 1.0
    %v2251 = vadd.f32 %v2235, 1.0
    %v2252 = vmul.f32 %v2188, %v2236
    %v2253 = vmul.f32 %v2189, %v2237
    %v2254 = vmul.f32 %v2190, %v2238
    %v2255 = vmul.f32 %v2191, %v2239
    %v2256 = vmul.f32 %v2192, %v2240
    %v2257 = vmul.f32 %v2193, %v2241
    %v2258 = vmul.f32 %v2194, %v2242
    %v2259 = vmul.f32 %v2195, %v2243
    %v2260 = vmul.f32 %v2196, %v2244
    %v2261 = vmul.f32 %v2197, %v2245
    %v2262 = vmul.f32 %v2198, %v2246
    %v2263 = vmul.f32 %v2199, %v2247
    %v2264 = vmul.f32 %v2200, %v2248
    %v2265 = vmul.f32 %v2201, %v2249
    %v2266 = vmul.f32 %v2202, %v2250
    %v2267 = vmul.f32 %v2203, %v2251
    %v2268 = vpack.c.bf16 %v2253, %v2252
    %v2269 = vpack.c.bf16 %v2255, %v2254
    %v2270 = vpack.c.bf16 %v2257, %v2256
    %v2271 = vpack.c.bf16 %v2259, %v2258
    %v2272 = vpack.c.bf16 %v2261, %v2260
    %v2273 = vpack.c.bf16 %v2263, %v2262
    %v2274 = vpack.c.bf16 %v2265, %v2264
    %v2275 = vpack.c.bf16 %v2267, %v2266
    %s2276 = scalar_lea.vmem [#allocation8], 512
    %v2277 = vld [vmem:[%s2276] sm:$0xf]
    %v2278 = vld [vmem:[%s2276 + $0x4] sm:$0xf]
    %v2279 = vld [vmem:[%s2276 + $0x8] sm:$0xf]
    %v2280 = vld [vmem:[%s2276 + $0xc] sm:$0xf]
    %v2281 = vld [vmem:[%s2276 + $0x10] sm:$0xf]
    %v2282 = vld [vmem:[%s2276 + $0x14] sm:$0xf]
    %v2283 = vld [vmem:[%s2276 + $0x18] sm:$0xf]
    %v2284 = vld [vmem:[%s2276 + $0x1c] sm:$0xf]
    %v2285 = vld [vmem:[%s2276 + $0x20] sm:$0xf]
    %v2286 = vld [vmem:[%s2276 + $0x24] sm:$0xf]
    %v2287 = vld [vmem:[%s2276 + $0x28] sm:$0xf]
    %v2288 = vld [vmem:[%s2276 + $0x2c] sm:$0xf]
    %v2289 = vld [vmem:[%s2276 + $0x30] sm:$0xf]
    %v2290 = vld [vmem:[%s2276 + $0x34] sm:$0xf]
    %v2291 = vld [vmem:[%s2276 + $0x38] sm:$0xf]
    %v2292 = vld [vmem:[%s2276 + $0x3c] sm:$0xf]
    %v2293 = vld [vmem:[#allocation10 + $0xd] sm:$0x1]
    %v2294 = vlaneseq
    %v2295 = vshrl.u32 %v2294, 7
    %v2296 = vsub.s32 0, %v2295
    %v2297 = vrot.slane %v2293, %v2296
    %v2314 = vunpack.c.l.b16 %v2277
    %v2315 = vunpack.c.l.b16 %v2278
    %v2316 = vunpack.c.l.b16 %v2279
    %v2317 = vunpack.c.l.b16 %v2280
    %v2318 = vunpack.c.l.b16 %v2281
    %v2319 = vunpack.c.l.b16 %v2282
    %v2320 = vunpack.c.l.b16 %v2283
    %v2321 = vunpack.c.l.b16 %v2284
    %v2322 = vunpack.c.l.b16 %v2285
    %v2323 = vunpack.c.l.b16 %v2286
    %v2324 = vunpack.c.l.b16 %v2287
    %v2325 = vunpack.c.l.b16 %v2288
    %v2326 = vunpack.c.l.b16 %v2289
    %v2327 = vunpack.c.l.b16 %v2290
    %v2328 = vunpack.c.l.b16 %v2291
    %v2329 = vunpack.c.l.b16 %v2292
    %v2330 = vpack.c.b16 %v2315, %v2314
    %v2331 = vpack.c.b16 %v2317, %v2316
    %v2332 = vpack.c.b16 %v2319, %v2318
    %v2333 = vpack.c.b16 %v2321, %v2320
    %v2334 = vpack.c.b16 %v2323, %v2322
    %v2335 = vpack.c.b16 %v2325, %v2324
    %v2336 = vpack.c.b16 %v2327, %v2326
    %v2337 = vpack.c.b16 %v2329, %v2328
    %2346 = vmatprep.subr.bf16.mxu0 0
    %2347 = vmatpush1.bf16.msra.mxu0 %v2330
    %2348 = vmatprep.subr.bf16.mxu0 0
    %2349 = vmatpush1.bf16.msra.mxu0 %v2331
    %2350 = vmatprep.subr.bf16.mxu0 0
    %2351 = vmatpush1.bf16.msra.mxu0 %v2332
    %2352 = vmatprep.subr.bf16.mxu0 0
    %2353 = vmatpush1.bf16.msra.mxu0 %v2333
    %2354 = vmatprep.subr.bf16.mxu0 0
    %2355 = vmatpush1.bf16.msra.mxu0 %v2334
    %2356 = vmatprep.subr.bf16.mxu0 0
    %2357 = vmatpush1.bf16.msra.mxu0 %v2335
    %2358 = vmatprep.subr.bf16.mxu0 0
    %2359 = vmatpush1.bf16.msra.mxu0 %v2336
    %2360 = vmatprep.subr.bf16.mxu0 0
    %2361 = vmatpush1.bf16.msra.mxu0 %v2337
    %2362 = vmatprep.subr.bf16.mxu0 0
    %2363 = vmatpush1.bf16.msra.mxu0 0
    %2364 = vmatprep.subr.bf16.mxu0 0
    %2365 = vmatpush1.bf16.msra.mxu0 0
    %2366 = vmatprep.subr.bf16.mxu0 0
    %2367 = vmatpush1.bf16.msra.mxu0 0
    %2368 = vmatprep.subr.bf16.mxu0 0
    %2369 = vmatpush1.bf16.msra.mxu0 0
    %2370 = vmatprep.subr.bf16.mxu0 0
    %2371 = vmatpush1.bf16.msra.mxu0 0
    %2372 = vmatprep.subr.bf16.mxu0 0
    %2373 = vmatpush1.bf16.msra.mxu0 0
    %2374 = vmatprep.subr.bf16.mxu0 0
    %2375 = vmatpush1.bf16.msra.mxu0 0
    %2376 = vmatprep.subr.bf16.mxu0 0
    %2377 = vmatpush1.bf16.msra.mxu0 0
    %2378 = vmatprep.mubr.bf16.mxu0 0
    %2379 = vmatmul.mubr.bf16.gmra.mrb[0].mxu0 %v2268
    %v2380 = vpop.f32.mrb[0].mxu0
    %v2381 = vadd.f32 %v2297, %v2380
    %v2382 = vpop.f32.mrb[0].mxu0
    %v2383 = vpop.f32.mrb[0].mxu0
    %v2384 = vadd.f32 %v2297, %v2383
    %v2385 = vpop.f32.mrb[0].mxu0
    %2386 = vmatprep.mubr.bf16.mxu0 0
    %2387 = vmatmul.mubr.bf16.gmra.mrb[0].mxu0 %v2269
    %v2388 = vpop.f32.mrb[0].mxu0
    %v2389 = vadd.f32 %v2297, %v2388
    %v2390 = vpop.f32.mrb[0].mxu0
    %v2391 = vpop.f32.mrb[0].mxu0
    %v2392 = vadd.f32 %v2297, %v2391
    %v2393 = vpop.f32.mrb[0].mxu0
    %2394 = vmatprep.mubr.bf16.mxu0 0
    %2395 = vmatmul.mubr.bf16.gmra.mrb[0].mxu0 %v2270
    %v2396 = vpop.f32.mrb[0].mxu0
    %v2397 = vadd.f32 %v2297, %v2396
    %v2398 = vpop.f32.mrb[0].mxu0
    %v2399 = vpop.f32.mrb[0].mxu0
    %v2400 = vadd.f32 %v2297, %v2399
    %v2401 = vpop.f32.mrb[0].mxu0
    %2402 = vmatprep.mubr.bf16.mxu0 0
    %2403 = vmatmul.mubr.bf16.gmra.mrb[0].mxu0 %v2271
    %v2404 = vpop.f32.mrb[0].mxu0
    %v2405 = vadd.f32 %v2297, %v2404
    %v2406 = vpop.f32.mrb[0].mxu0
    %v2407 = vpop.f32.mrb[0].mxu0
    %v2408 = vadd.f32 %v2297, %v2407
    %v2409 = vpop.f32.mrb[0].mxu0
    %2410 = vmatprep.mubr.bf16.mxu0 0
    %2411 = vmatmul.mubr.bf16.gmra.mrb[0].mxu0 %v2272
    %v2412 = vpop.f32.mrb[0].mxu0
    %v2413 = vadd.f32 %v2297, %v2412
    %v2414 = vpop.f32.mrb[0].mxu0
    %v2415 = vpop.f32.mrb[0].mxu0
    %v2416 = vadd.f32 %v2297, %v2415
    %v2417 = vpop.f32.mrb[0].mxu0
    %2418 = vmatprep.mubr.bf16.mxu0 0
    %2419 = vmatmul.mubr.bf16.gmra.mrb[0].mxu0 %v2273
    %v2420 = vpop.f32.mrb[0].mxu0
    %v2421 = vadd.f32 %v2297, %v2420
    %v2422 = vpop.f32.mrb[0].mxu0
    %v2423 = vpop.f32.mrb[0].mxu0
    %v2424 = vadd.f32 %v2297, %v2423
    %v2425 = vpop.f32.mrb[0].mxu0
    %2426 = vmatprep.mubr.bf16.mxu0 0
    %2427 = vmatmul.mubr.bf16.gmra.mrb[0].mxu0 %v2274
    %v2428 = vpop.f32.mrb[0].mxu0
    %v2429 = vadd.f32 %v2297, %v2428
    %v2430 = vpop.f32.mrb[0].mxu0
    %v2431 = vpop.f32.mrb[0].mxu0
    %v2432 = vadd.f32 %v2297, %v2431
    %v2433 = vpop.f32.mrb[0].mxu0
    %2434 = vmatprep.mubr.bf16.mxu0 0
    %2435 = vmatmul.mubr.bf16.gmra.mrb[0].mxu0 %v2275
    %v2436 = vpop.f32.mrb[0].mxu0
    %v2437 = vadd.f32 %v2297, %v2436
    %v2438 = vpop.f32.mrb[0].mxu0
    %v2439 = vpop.f32.mrb[0].mxu0
    %v2440 = vadd.f32 %v2297, %v2439
    %v2441 = vpop.f32.mrb[0].mxu0
    %2442 = vdwg.mxu0
    %v2443 = vadd.f32 %v1997, %v2381
    %v2444 = vadd.f32 %v1998, %v2384
    %v2445 = vadd.f32 %v1999, %v2389
    %v2446 = vadd.f32 %v2000, %v2392
    %v2447 = vadd.f32 %v2001, %v2397
    %v2448 = vadd.f32 %v2002, %v2400
    %v2449 = vadd.f32 %v2003, %v2405
    %v2450 = vadd.f32 %v2004, %v2408
    %v2451 = vadd.f32 %v2005, %v2413
    %v2452 = vadd.f32 %v2006, %v2416
    %v2453 = vadd.f32 %v2007, %v2421
    %v2454 = vadd.f32 %v2008, %v2424
    %v2455 = vadd.f32 %v2009, %v2429
    %v2456 = vadd.f32 %v2010, %v2432
    %v2457 = vadd.f32 %v2011, %v2437
    %v2458 = vadd.f32 %v2012, %v2440
    %v2459 = vld [vmem:[#allocation10 + $0xe] sm:$0x1]
    %v2460 = vlaneseq
    %v2461 = vshrl.u32 %v2460, 7
    %v2462 = vsub.s32 0, %v2461
    %v2463 = vrot.slane %v2459, %v2462
    %v2464 = vmul.f32 %v2443, %v2463
    %v2465 = vmul.f32 %v2444, %v2463
    %v2466 = vmul.f32 %v2445, %v2463
    %v2467 = vmul.f32 %v2446, %v2463
    %v2468 = vmul.f32 %v2447, %v2463
    %v2469 = vmul.f32 %v2448, %v2463
    %v2470 = vmul.f32 %v2449, %v2463
    %v2471 = vmul.f32 %v2450, %v2463
    %v2472 = vmul.f32 %v2451, %v2463
    %v2473 = vmul.f32 %v2452, %v2463
    %v2474 = vmul.f32 %v2453, %v2463
    %v2475 = vmul.f32 %v2454, %v2463
    %v2476 = vmul.f32 %v2455, %v2463
    %v2477 = vmul.f32 %v2456, %v2463
    %v2478 = vmul.f32 %v2457, %v2463
    %v2479 = vmul.f32 %v2458, %v2463
    %v2480 = vld [vmem:[#allocation10 + $0xf] sm:$0x1]
    %v2481 = vlaneseq
    %v2482 = vshrl.u32 %v2481, 7
    %v2483 = vsub.s32 0, %v2482
    %v2484 = vrot.slane %v2480, %v2483
    %v2485 = vadd.f32 %v2464, %v2484
    %v2486 = vadd.f32 %v2465, %v2484
    %v2487 = vadd.f32 %v2466, %v2484
    %v2488 = vadd.f32 %v2467, %v2484
    %v2489 = vadd.f32 %v2468, %v2484
    %v2490 = vadd.f32 %v2469, %v2484
    %v2491 = vadd.f32 %v2470, %v2484
    %v2492 = vadd.f32 %v2471, %v2484
    %v2493 = vadd.f32 %v2472, %v2484
    %v2494 = vadd.f32 %v2473, %v2484
    %v2495 = vadd.f32 %v2474, %v2484
    %v2496 = vadd.f32 %v2475, %v2484
    %v2497 = vadd.f32 %v2476, %v2484
    %v2498 = vadd.f32 %v2477, %v2484
    %v2499 = vadd.f32 %v2478, %v2484
    %v2500 = vadd.f32 %v2479, %v2484
    %v2501 = vpack.c.bf16 %v2486, %v2485
    %v2502 = vpack.c.bf16 %v2488, %v2487
    %v2503 = vpack.c.bf16 %v2490, %v2489
    %v2504 = vpack.c.bf16 %v2492, %v2491
    %v2505 = vpack.c.bf16 %v2494, %v2493
    %v2506 = vpack.c.bf16 %v2496, %v2495
    %v2507 = vpack.c.bf16 %v2498, %v2497
    %v2508 = vpack.c.bf16 %v2500, %v2499
    %2509 = vmatprep.subr.bf16.mxu0 0
    %2510 = vmatpush1.bf16.msra.mxu0 %v2501
    %2511 = vmatprep.subr.bf16.mxu0 0
    %2512 = vmatpush1.bf16.msra.mxu0 %v2502
    %2513 = vmatprep.subr.bf16.mxu0 0
    %2514 = vmatpush1.bf16.msra.mxu0 %v2503
    %2515 = vmatprep.subr.bf16.mxu0 0
    %2516 = vmatpush1.bf16.msra.mxu0 %v2504
    %2517 = vmatprep.subr.bf16.mxu0 0
    %2518 = vmatpush1.bf16.msra.mxu0 %v2505
    %2519 = vmatprep.subr.bf16.mxu0 0
    %2520 = vmatpush1.bf16.msra.mxu0 %v2506
    %2521 = vmatprep.subr.bf16.mxu0 0
    %2522 = vmatpush1.bf16.msra.mxu0 %v2507
    %2523 = vmatprep.subr.bf16.mxu0 0
    %2524 = vmatpush1.bf16.msra.mxu0 %v2508
    %2525 = vmatprep.subr.bf16.mxu0 0
    %2526 = vmatpush1.bf16.msra.mxu0 0
    %2527 = vmatprep.subr.bf16.mxu0 0
    %2528 = vmatpush1.bf16.msra.mxu0 0
    %2529 = vmatprep.subr.bf16.mxu0 0
    %2530 = vmatpush1.bf16.msra.mxu0 0
    %2531 = vmatprep.subr.bf16.mxu0 0
    %2532 = vmatpush1.bf16.msra.mxu0 0
    %2533 = vmatprep.subr.bf16.mxu0 0
    %2534 = vmatpush1.bf16.msra.mxu0 0
    %2535 = vmatprep.subr.bf16.mxu0 0
    %2536 = vmatpush1.bf16.msra.mxu0 0
    %2537 = vmatprep.subr.bf16.mxu0 0
    %2538 = vmatpush1.bf16.msra.mxu0 0
    %2539 = vmatprep.subr.bf16.mxu0 0
    %2540 = vmatpush1.bf16.msra.mxu0 0
    %2541 = vmatprep.mubr.bf16.mxu0 0
    %2542 = vmatmul.mubr.bf16.gmra.mrb[0].mxu0 %v432
    %v2543 = vpop.f32.mrb[0].mxu0
    %v2544 = vadd.f32 0.0, %v2543
    %v2545 = vpop.f32.mrb[0].mxu0
    %v2546 = vpop.f32.mrb[0].mxu0
    %v2547 = vadd.f32 0.0, %v2546
    %v2548 = vpop.f32.mrb[0].mxu0
    %2549 = vmatprep.mubr.bf16.mxu0 0
    %2550 = vmatmul.mubr.bf16.gmra.mrb[0].mxu0 %v433
    %v2551 = vpop.f32.mrb[0].mxu0
    %v2552 = vadd.f32 0.0, %v2551
    %v2553 = vpop.f32.mrb[0].mxu0
    %v2554 = vpop.f32.mrb[0].mxu0
    %v2555 = vadd.f32 0.0, %v2554
    %v2556 = vpop.f32.mrb[0].mxu0
    %2557 = vmatprep.mubr.bf16.mxu0 0
    %2558 = vmatmul.mubr.bf16.gmra.mrb[0].mxu0 %v434
    %v2559 = vpop.f32.mrb[0].mxu0
    %v2560 = vadd.f32 0.0, %v2559
    %v2561 = vpop.f32.mrb[0].mxu0
    %v2562 = vpop.f32.mrb[0].mxu0
    %v2563 = vadd.f32 0.0, %v2562
    %v2564 = vpop.f32.mrb[0].mxu0
    %2565 = vmatprep.mubr.bf16.mxu0 0
    %2566 = vmatmul.mubr.bf16.gmra.mrb[0].mxu0 %v435
    %v2567 = vpop.f32.mrb[0].mxu0
    %v2568 = vadd.f32 0.0, %v2567
    %v2569 = vpop.f32.mrb[0].mxu0
    %v2570 = vpop.f32.mrb[0].mxu0
    %v2571 = vadd.f32 0.0, %v2570
    %v2572 = vpop.f32.mrb[0].mxu0
    %2573 = vmatprep.mubr.bf16.mxu0 0
    %2574 = vmatmul.mubr.bf16.gmra.mrb[0].mxu0 %v436
    %v2575 = vpop.f32.mrb[0].mxu0
    %v2576 = vadd.f32 0.0, %v2575
    %v2577 = vpop.f32.mrb[0].mxu0
    %v2578 = vpop.f32.mrb[0].mxu0
    %v2579 = vadd.f32 0.0, %v2578
    %v2580 = vpop.f32.mrb[0].mxu0
    %2581 = vmatprep.mubr.bf16.mxu0 0
    %2582 = vmatmul.mubr.bf16.gmra.mrb[0].mxu0 %v437
    %v2583 = vpop.f32.mrb[0].mxu0
    %v2584 = vadd.f32 0.0, %v2583
    %v2585 = vpop.f32.mrb[0].mxu0
    %v2586 = vpop.f32.mrb[0].mxu0
    %v2587 = vadd.f32 0.0, %v2586
    %v2588 = vpop.f32.mrb[0].mxu0
    %2589 = vmatprep.mubr.bf16.mxu0 0
    %2590 = vmatmul.mubr.bf16.gmra.mrb[0].mxu0 %v438
    %v2591 = vpop.f32.mrb[0].mxu0
    %v2592 = vadd.f32 0.0, %v2591
    %v2593 = vpop.f32.mrb[0].mxu0
    %v2594 = vpop.f32.mrb[0].mxu0
    %v2595 = vadd.f32 0.0, %v2594
    %v2596 = vpop.f32.mrb[0].mxu0
    %2597 = vmatprep.mubr.bf16.mxu0 0
    %2598 = vmatmul.mubr.bf16.gmra.mrb[0].mxu0 %v439
    %v2599 = vpop.f32.mrb[0].mxu0
    %v2600 = vadd.f32 0.0, %v2599
    %v2601 = vpop.f32.mrb[0].mxu0
    %v2602 = vpop.f32.mrb[0].mxu0
    %v2603 = vadd.f32 0.0, %v2602
    %v2604 = vpop.f32.mrb[0].mxu0
    %2605 = vdwg.mxu0
    %v2606 = vpack.c.bf16 %v2547, %v2544
    %v2607 = vpack.c.bf16 %v2555, %v2552
    %v2608 = vpack.c.bf16 %v2563, %v2560
    %v2609 = vpack.c.bf16 %v2571, %v2568
    %v2610 = vpack.c.bf16 %v2579, %v2576
    %v2611 = vpack.c.bf16 %v2587, %v2584
    %v2612 = vpack.c.bf16 %v2595, %v2592
    %v2613 = vpack.c.bf16 %v2603, %v2600
    %s2614 = scalar_lea.vmem [#allocation8], 576
    %v2615 = vld [vmem:[%s2614] sm:$0xf]
    %v2616 = vld [vmem:[%s2614 + $0x4] sm:$0xf]
    %v2617 = vld [vmem:[%s2614 + $0x8] sm:$0xf]
    %v2618 = vld [vmem:[%s2614 + $0xc] sm:$0xf]
    %v2619 = vld [vmem:[%s2614 + $0x10] sm:$0xf]
    %v2620 = vld [vmem:[%s2614 + $0x14] sm:$0xf]
    %v2621 = vld [vmem:[%s2614 + $0x18] sm:$0xf]
    %v2622 = vld [vmem:[%s2614 + $0x1c] sm:$0xf]
    %v2623 = vld [vmem:[%s2614 + $0x20] sm:$0xf]
    %v2624 = vld [vmem:[%s2614 + $0x24] sm:$0xf]
    %v2625 = vld [vmem:[%s2614 + $0x28] sm:$0xf]
    %v2626 = vld [vmem:[%s2614 + $0x2c] sm:$0xf]
    %v2627 = vld [vmem:[%s2614 + $0x30] sm:$0xf]
    %v2628 = vld [vmem:[%s2614 + $0x34] sm:$0xf]
    %v2629 = vld [vmem:[%s2614 + $0x38] sm:$0xf]
    %v2630 = vld [vmem:[%s2614 + $0x3c] sm:$0xf]
    %v2631 = vld [vmem:[#allocation10 + $0x10] sm:$0x1]
    %v2632 = vlaneseq
    %v2633 = vshrl.u32 %v2632, 7
    %v2634 = vsub.s32 0, %v2633
    %v2635 = vrot.slane %v2631, %v2634
    %v2652 = vunpack.c.l.b16 %v2615
    %v2653 = vunpack.c.l.b16 %v2616
    %v2654 = vunpack.c.l.b16 %v2617
    %v2655 = vunpack.c.l.b16 %v2618
    %v2656 = vunpack.c.l.b16 %v2619
    %v2657 = vunpack.c.l.b16 %v2620
    %v2658 = vunpack.c.l.b16 %v2621
    %v2659 = vunpack.c.l.b16 %v2622
    %v2660 = vunpack.c.l.b16 %v2623
    %v2661 = vunpack.c.l.b16 %v2624
    %v2662 = vunpack.c.l.b16 %v2625
    %v2663 = vunpack.c.l.b16 %v2626
    %v2664 = vunpack.c.l.b16 %v2627
    %v2665 = vunpack.c.l.b16 %v2628
    %v2666 = vunpack.c.l.b16 %v2629
    %v2667 = vunpack.c.l.b16 %v2630
    %v2668 = vpack.c.b16 %v2653, %v2652
    %v2669 = vpack.c.b16 %v2655, %v2654
    %v2670 = vpack.c.b16 %v2657, %v2656
    %v2671 = vpack.c.b16 %v2659, %v2658
    %v2672 = vpack.c.b16 %v2661, %v2660
    %v2673 = vpack.c.b16 %v2663, %v2662
    %v2674 = vpack.c.b16 %v2665, %v2664
    %v2675 = vpack.c.b16 %v2667, %v2666
    %2684 = vmatprep.subr.bf16.mxu0 0
    %2685 = vmatpush1.bf16.msra.mxu0 %v2668
    %2686 = vmatprep.subr.bf16.mxu0 0
    %2687 = vmatpush1.bf16.msra.mxu0 %v2669
    %2688 = vmatprep.subr.bf16.mxu0 0
    %2689 = vmatpush1.bf16.msra.mxu0 %v2670
    %2690 = vmatprep.subr.bf16.mxu0 0
    %2691 = vmatpush1.bf16.msra.mxu0 %v2671
    %2692 = vmatprep.subr.bf16.mxu0 0
    %2693 = vmatpush1.bf16.msra.mxu0 %v2672
    %2694 = vmatprep.subr.bf16.mxu0 0
    %2695 = vmatpush1.bf16.msra.mxu0 %v2673
    %2696 = vmatprep.subr.bf16.mxu0 0
    %2697 = vmatpush1.bf16.msra.mxu0 %v2674
    %2698 = vmatprep.subr.bf16.mxu0 0
    %2699 = vmatpush1.bf16.msra.mxu0 %v2675
    %2700 = vmatprep.subr.bf16.mxu0 0
    %2701 = vmatpush1.bf16.msra.mxu0 0
    %2702 = vmatprep.subr.bf16.mxu0 0
    %2703 = vmatpush1.bf16.msra.mxu0 0
    %2704 = vmatprep.subr.bf16.mxu0 0
    %2705 = vmatpush1.bf16.msra.mxu0 0
    %2706 = vmatprep.subr.bf16.mxu0 0
    %2707 = vmatpush1.bf16.msra.mxu0 0
    %2708 = vmatprep.subr.bf16.mxu0 0
    %2709 = vmatpush1.bf16.msra.mxu0 0
    %2710 = vmatprep.subr.bf16.mxu0 0
    %2711 = vmatpush1.bf16.msra.mxu0 0
    %2712 = vmatprep.subr.bf16.mxu0 0
    %2713 = vmatpush1.bf16.msra.mxu0 0
    %2714 = vmatprep.subr.bf16.mxu0 0
    %2715 = vmatpush1.bf16.msra.mxu0 0
    %2716 = vmatprep.mubr.bf16.mxu0 0
    %2717 = vmatmul.mubr.bf16.gmra.mrb[0].mxu0 %v2606
    %v2718 = vpop.f32.mrb[0].mxu0
    %v2719 = vadd.f32 %v2635, %v2718
    %v2720 = vpop.f32.mrb[0].mxu0
    %v2721 = vpop.f32.mrb[0].mxu0
    %v2722 = vadd.f32 %v2635, %v2721
    %v2723 = vpop.f32.mrb[0].mxu0
    %2724 = vmatprep.mubr.bf16.mxu0 0
    %2725 = vmatmul.mubr.bf16.gmra.mrb[0].mxu0 %v2607
    %v2726 = vpop.f32.mrb[0].mxu0
    %v2727 = vadd.f32 %v2635, %v2726
    %v2728 = vpop.f32.mrb[0].mxu0
    %v2729 = vpop.f32.mrb[0].mxu0
    %v2730 = vadd.f32 %v2635, %v2729
    %v2731 = vpop.f32.mrb[0].mxu0
    %2732 = vmatprep.mubr.bf16.mxu0 0
    %2733 = vmatmul.mubr.bf16.gmra.mrb[0].mxu0 %v2608
    %v2734 = vpop.f32.mrb[0].mxu0
    %v2735 = vadd.f32 %v2635, %v2734
    %v2736 = vpop.f32.mrb[0].mxu0
    %v2737 = vpop.f32.mrb[0].mxu0
    %v2738 = vadd.f32 %v2635, %v2737
    %v2739 = vpop.f32.mrb[0].mxu0
    %2740 = vmatprep.mubr.bf16.mxu0 0
    %2741 = vmatmul.mubr.bf16.gmra.mrb[0].mxu0 %v2609
    %v2742 = vpop.f32.mrb[0].mxu0
    %v2743 = vadd.f32 %v2635, %v2742
    %v2744 = vpop.f32.mrb[0].mxu0
    %v2745 = vpop.f32.mrb[0].mxu0
    %v2746 = vadd.f32 %v2635, %v2745
    %v2747 = vpop.f32.mrb[0].mxu0
    %2748 = vmatprep.mubr.bf16.mxu0 0
    %2749 = vmatmul.mubr.bf16.gmra.mrb[0].mxu0 %v2610
    %v2750 = vpop.f32.mrb[0].mxu0
    %v2751 = vadd.f32 %v2635, %v2750
    %v2752 = vpop.f32.mrb[0].mxu0
    %v2753 = vpop.f32.mrb[0].mxu0
    %v2754 = vadd.f32 %v2635, %v2753
    %v2755 = vpop.f32.mrb[0].mxu0
    %2756 = vmatprep.mubr.bf16.mxu0 0
    %2757 = vmatmul.mubr.bf16.gmra.mrb[0].mxu0 %v2611
    %v2758 = vpop.f32.mrb[0].mxu0
    %v2759 = vadd.f32 %v2635, %v2758
    %v2760 = vpop.f32.mrb[0].mxu0
    %v2761 = vpop.f32.mrb[0].mxu0
    %v2762 = vadd.f32 %v2635, %v2761
    %v2763 = vpop.f32.mrb[0].mxu0
    %2764 = vmatprep.mubr.bf16.mxu0 0
    %2765 = vmatmul.mubr.bf16.gmra.mrb[0].mxu0 %v2612
    %v2766 = vpop.f32.mrb[0].mxu0
    %v2767 = vadd.f32 %v2635, %v2766
    %v2768 = vpop.f32.mrb[0].mxu0
    %v2769 = vpop.f32.mrb[0].mxu0
    %v2770 = vadd.f32 %v2635, %v2769
    %v2771 = vpop.f32.mrb[0].mxu0
    %2772 = vmatprep.mubr.bf16.mxu0 0
    %2773 = vmatmul.mubr.bf16.gmra.mrb[0].mxu0 %v2613
    %v2774 = vpop.f32.mrb[0].mxu0
    %v2775 = vadd.f32 %v2635, %v2774
    %v2776 = vpop.f32.mrb[0].mxu0
    %v2777 = vpop.f32.mrb[0].mxu0
    %v2778 = vadd.f32 %v2635, %v2777
    %v2779 = vpop.f32.mrb[0].mxu0
    %2780 = vdwg.mxu0
    %s2781 = scalar_lea.vmem [#allocation8], 640
    %v2782 = vld [vmem:[%s2781] sm:$0xf]
    %v2783 = vld [vmem:[%s2781 + $0x4] sm:$0xf]
    %v2784 = vld [vmem:[%s2781 + $0x8] sm:$0xf]
    %v2785 = vld [vmem:[%s2781 + $0xc] sm:$0xf]
    %v2786 = vld [vmem:[%s2781 + $0x10] sm:$0xf]
    %v2787 = vld [vmem:[%s2781 + $0x14] sm:$0xf]
    %v2788 = vld [vmem:[%s2781 + $0x18] sm:$0xf]
    %v2789 = vld [vmem:[%s2781 + $0x1c] sm:$0xf]
    %v2790 = vld [vmem:[%s2781 + $0x20] sm:$0xf]
    %v2791 = vld [vmem:[%s2781 + $0x24] sm:$0xf]
    %v2792 = vld [vmem:[%s2781 + $0x28] sm:$0xf]
    %v2793 = vld [vmem:[%s2781 + $0x2c] sm:$0xf]
    %v2794 = vld [vmem:[%s2781 + $0x30] sm:$0xf]
    %v2795 = vld [vmem:[%s2781 + $0x34] sm:$0xf]
    %v2796 = vld [vmem:[%s2781 + $0x38] sm:$0xf]
    %v2797 = vld [vmem:[%s2781 + $0x3c] sm:$0xf]
    %v2814 = vunpack.c.l.b16 %v2782
    %v2815 = vunpack.c.l.b16 %v2783
    %v2816 = vunpack.c.l.b16 %v2784
    %v2817 = vunpack.c.l.b16 %v2785
    %v2818 = vunpack.c.l.b16 %v2786
    %v2819 = vunpack.c.l.b16 %v2787
    %v2820 = vunpack.c.l.b16 %v2788
    %v2821 = vunpack.c.l.b16 %v2789
    %v2822 = vunpack.c.l.b16 %v2790
    %v2823 = vunpack.c.l.b16 %v2791
    %v2824 = vunpack.c.l.b16 %v2792
    %v2825 = vunpack.c.l.b16 %v2793
    %v2826 = vunpack.c.l.b16 %v2794
    %v2827 = vunpack.c.l.b16 %v2795
    %v2828 = vunpack.c.l.b16 %v2796
    %v2829 = vunpack.c.l.b16 %v2797
    %v2830 = vpack.c.b16 %v2815, %v2814
    %v2831 = vpack.c.b16 %v2817, %v2816
    %v2832 = vpack.c.b16 %v2819, %v2818
    %v2833 = vpack.c.b16 %v2821, %v2820
    %v2834 = vpack.c.b16 %v2823, %v2822
    %v2835 = vpack.c.b16 %v2825, %v2824
    %v2836 = vpack.c.b16 %v2827, %v2826
    %v2837 = vpack.c.b16 %v2829, %v2828
    %2846 = vmatprep.subr.bf16.mxu0 0
    %2847 = vmatpush1.bf16.msra.mxu0 %v2830
    %2848 = vmatprep.subr.bf16.mxu0 0
    %2849 = vmatpush1.bf16.msra.mxu0 %v2831
    %2850 = vmatprep.subr.bf16.mxu0 0
    %2851 = vmatpush1.bf16.msra.mxu0 %v2832
    %2852 = vmatprep.subr.bf16.mxu0 0
    %2853 = vmatpush1.bf16.msra.mxu0 %v2833
    %2854 = vmatprep.subr.bf16.mxu0 0
    %2855 = vmatpush1.bf16.msra.mxu0 %v2834
    %2856 = vmatprep.subr.bf16.mxu0 0
    %2857 = vmatpush1.bf16.msra.mxu0 %v2835
    %2858 = vmatprep.subr.bf16.mxu0 0
    %2859 = vmatpush1.bf16.msra.mxu0 %v2836
    %2860 = vmatprep.subr.bf16.mxu0 0
    %2861 = vmatpush1.bf16.msra.mxu0 %v2837
    %2862 = vmatprep.subr.bf16.mxu0 0
    %2863 = vmatpush1.bf16.msra.mxu0 0
    %2864 = vmatprep.subr.bf16.mxu0 0
    %2865 = vmatpush1.bf16.msra.mxu0 0
    %2866 = vmatprep.subr.bf16.mxu0 0
    %2867 = vmatpush1.bf16.msra.mxu0 0
    %2868 = vmatprep.subr.bf16.mxu0 0
    %2869 = vmatpush1.bf16.msra.mxu0 0
    %2870 = vmatprep.subr.bf16.mxu0 0
    %2871 = vmatpush1.bf16.msra.mxu0 0
    %2872 = vmatprep.subr.bf16.mxu0 0
    %2873 = vmatpush1.bf16.msra.mxu0 0
    %2874 = vmatprep.subr.bf16.mxu0 0
    %2875 = vmatpush1.bf16.msra.mxu0 0
    %2876 = vmatprep.subr.bf16.mxu0 0
    %2877 = vmatpush1.bf16.msra.mxu0 0
    %2878 = vmatprep.mubr.bf16.mxu0 0
    %2879 = vmatmul.mubr.bf16.gmra.mrb[0].mxu0 %v2501
    %v2880 = vpop.f32.mrb[0].mxu0
    %v2881 = vadd.f32 0.0, %v2880
    %v2882 = vpop.f32.mrb[0].mxu0
    %v2883 = vpop.f32.mrb[0].mxu0
    %v2884 = vadd.f32 0.0, %v2883
    %v2885 = vpop.f32.mrb[0].mxu0
    %2886 = vmatprep.mubr.bf16.mxu0 0
    %2887 = vmatmul.mubr.bf16.gmra.mrb[0].mxu0 %v2502
    %v2888 = vpop.f32.mrb[0].mxu0
    %v2889 = vadd.f32 0.0, %v2888
    %v2890 = vpop.f32.mrb[0].mxu0
    %v2891 = vpop.f32.mrb[0].mxu0
    %v2892 = vadd.f32 0.0, %v2891
    %v2893 = vpop.f32.mrb[0].mxu0
    %2894 = vmatprep.mubr.bf16.mxu0 0
    %2895 = vmatmul.mubr.bf16.gmra.mrb[0].mxu0 %v2503
    %v2896 = vpop.f32.mrb[0].mxu0
    %v2897 = vadd.f32 0.0, %v2896
    %v2898 = vpop.f32.mrb[0].mxu0
    %v2899 = vpop.f32.mrb[0].mxu0
    %v2900 = vadd.f32 0.0, %v2899
    %v2901 = vpop.f32.mrb[0].mxu0
    %2902 = vmatprep.mubr.bf16.mxu0 0
    %2903 = vmatmul.mubr.bf16.gmra.mrb[0].mxu0 %v2504
    %v2904 = vpop.f32.mrb[0].mxu0
    %v2905 = vadd.f32 0.0, %v2904
    %v2906 = vpop.f32.mrb[0].mxu0
    %v2907 = vpop.f32.mrb[0].mxu0
    %v2908 = vadd.f32 0.0, %v2907
    %v2909 = vpop.f32.mrb[0].mxu0
    %2910 = vmatprep.mubr.bf16.mxu0 0
    %2911 = vmatmul.mubr.bf16.gmra.mrb[0].mxu0 %v2505
    %v2912 = vpop.f32.mrb[0].mxu0
    %v2913 = vadd.f32 0.0, %v2912
    %v2914 = vpop.f32.mrb[0].mxu0
    %v2915 = vpop.f32.mrb[0].mxu0
    %v2916 = vadd.f32 0.0, %v2915
    %v2917 = vpop.f32.mrb[0].mxu0
    %2918 = vmatprep.mubr.bf16.mxu0 0
    %2919 = vmatmul.mubr.bf16.gmra.mrb[0].mxu0 %v2506
    %v2920 = vpop.f32.mrb[0].mxu0
    %v2921 = vadd.f32 0.0, %v2920
    %v2922 = vpop.f32.mrb[0].mxu0
    %v2923 = vpop.f32.mrb[0].mxu0
    %v2924 = vadd.f32 0.0, %v2923
    %v2925 = vpop.f32.mrb[0].mxu0
    %2926 = vmatprep.mubr.bf16.mxu0 0
    %2927 = vmatmul.mubr.bf16.gmra.mrb[0].mxu0 %v2507
    %v2928 = vpop.f32.mrb[0].mxu0
    %v2929 = vadd.f32 0.0, %v2928
    %v2930 = vpop.f32.mrb[0].mxu0
    %v2931 = vpop.f32.mrb[0].mxu0
    %v2932 = vadd.f32 0.0, %v2931
    %v2933 = vpop.f32.mrb[0].mxu0
    %2934 = vmatprep.mubr.bf16.mxu0 0
    %2935 = vmatmul.mubr.bf16.gmra.mrb[0].mxu0 %v2508
    %v2936 = vpop.f32.mrb[0].mxu0
    %v2937 = vadd.f32 0.0, %v2936
    %v2938 = vpop.f32.mrb[0].mxu0
    %v2939 = vpop.f32.mrb[0].mxu0
    %v2940 = vadd.f32 0.0, %v2939
    %v2941 = vpop.f32.mrb[0].mxu0
    %2942 = vdwg.mxu0
    %v2943 = vadd.f32 %v2719, %v2881
    %v2944 = vadd.f32 %v2722, %v2884
    %v2945 = vadd.f32 %v2727, %v2889
    %v2946 = vadd.f32 %v2730, %v2892
    %v2947 = vadd.f32 %v2735, %v2897
    %v2948 = vadd.f32 %v2738, %v2900
    %v2949 = vadd.f32 %v2743, %v2905
    %v2950 = vadd.f32 %v2746, %v2908
    %v2951 = vadd.f32 %v2751, %v2913
    %v2952 = vadd.f32 %v2754, %v2916
    %v2953 = vadd.f32 %v2759, %v2921
    %v2954 = vadd.f32 %v2762, %v2924
    %v2955 = vadd.f32 %v2767, %v2929
    %v2956 = vadd.f32 %v2770, %v2932
    %v2957 = vadd.f32 %v2775, %v2937
    %v2958 = vadd.f32 %v2778, %v2940
    %v2959 = vld [vmem:[#allocation10 + $0x11] sm:$0x1]
    %v2960 = vlaneseq
    %v2961 = vshrl.u32 %v2960, 7
    %v2962 = vsub.s32 0, %v2961
    %v2963 = vrot.slane %v2959, %v2962
    %v2964 = vmul.f32 %v2943, %v2963
    %v2965 = vmul.f32 %v2944, %v2963
    %v2966 = vmul.f32 %v2945, %v2963
    %v2967 = vmul.f32 %v2946, %v2963
    %v2968 = vmul.f32 %v2947, %v2963
    %v2969 = vmul.f32 %v2948, %v2963
    %v2970 = vmul.f32 %v2949, %v2963
    %v2971 = vmul.f32 %v2950, %v2963
    %v2972 = vmul.f32 %v2951, %v2963
    %v2973 = vmul.f32 %v2952, %v2963
    %v2974 = vmul.f32 %v2953, %v2963
    %v2975 = vmul.f32 %v2954, %v2963
    %v2976 = vmul.f32 %v2955, %v2963
    %v2977 = vmul.f32 %v2956, %v2963
    %v2978 = vmul.f32 %v2957, %v2963
    %v2979 = vmul.f32 %v2958, %v2963
    %v2980 = vld [vmem:[#allocation10 + $0x12] sm:$0x1]
    %v2981 = vlaneseq
    %v2982 = vshrl.u32 %v2981, 7
    %v2983 = vsub.s32 0, %v2982
    %v2984 = vrot.slane %v2980, %v2983
    %v2985 = vadd.f32 %v2964, %v2984
    %v2986 = vadd.f32 %v2965, %v2984
    %v2987 = vadd.f32 %v2966, %v2984
    %v2988 = vadd.f32 %v2967, %v2984
    %v2989 = vadd.f32 %v2968, %v2984
    %v2990 = vadd.f32 %v2969, %v2984
    %v2991 = vadd.f32 %v2970, %v2984
    %v2992 = vadd.f32 %v2971, %v2984
    %v2993 = vadd.f32 %v2972, %v2984
    %v2994 = vadd.f32 %v2973, %v2984
    %v2995 = vadd.f32 %v2974, %v2984
    %v2996 = vadd.f32 %v2975, %v2984
    %v2997 = vadd.f32 %v2976, %v2984
    %v2998 = vadd.f32 %v2977, %v2984
    %v2999 = vadd.f32 %v2978, %v2984
    %v3000 = vadd.f32 %v2979, %v2984
    %v3001 = vpack.c.bf16 %v2986, %v2985
    %v3002 = vpack.c.bf16 %v2988, %v2987
    %v3003 = vpack.c.bf16 %v2990, %v2989
    %v3004 = vpack.c.bf16 %v2992, %v2991
    %v3005 = vpack.c.bf16 %v2994, %v2993
    %v3006 = vpack.c.bf16 %v2996, %v2995
    %v3007 = vpack.c.bf16 %v2998, %v2997
    %v3008 = vpack.c.bf16 %v3000, %v2999
    %s3009 = scalar_lea.vmem [#allocation8], 704
    %v3010 = vld [vmem:[%s3009] sm:$0xf]
    %v3011 = vld [vmem:[%s3009 + $0x4] sm:$0xf]
    %v3012 = vld [vmem:[%s3009 + $0x8] sm:$0xf]
    %v3013 = vld [vmem:[%s3009 + $0xc] sm:$0xf]
    %v3014 = vld [vmem:[%s3009 + $0x10] sm:$0xf]
    %v3015 = vld [vmem:[%s3009 + $0x14] sm:$0xf]
    %v3016 = vld [vmem:[%s3009 + $0x18] sm:$0xf]
    %v3017 = vld [vmem:[%s3009 + $0x1c] sm:$0xf]
    %v3018 = vld [vmem:[%s3009 + $0x20] sm:$0xf]
    %v3019 = vld [vmem:[%s3009 + $0x24] sm:$0xf]
    %v3020 = vld [vmem:[%s3009 + $0x28] sm:$0xf]
    %v3021 = vld [vmem:[%s3009 + $0x2c] sm:$0xf]
    %v3022 = vld [vmem:[%s3009 + $0x30] sm:$0xf]
    %v3023 = vld [vmem:[%s3009 + $0x34] sm:$0xf]
    %v3024 = vld [vmem:[%s3009 + $0x38] sm:$0xf]
    %v3025 = vld [vmem:[%s3009 + $0x3c] sm:$0xf]
    %v3026 = vld [vmem:[#allocation10 + $0x13] sm:$0x1]
    %v3027 = vlaneseq
    %v3028 = vshrl.u32 %v3027, 7
    %v3029 = vsub.s32 0, %v3028
    %v3030 = vrot.slane %v3026, %v3029
    %v3047 = vunpack.c.l.b16 %v3010
    %v3048 = vunpack.c.l.b16 %v3011
    %v3049 = vunpack.c.l.b16 %v3012
    %v3050 = vunpack.c.l.b16 %v3013
    %v3051 = vunpack.c.l.b16 %v3014
    %v3052 = vunpack.c.l.b16 %v3015
    %v3053 = vunpack.c.l.b16 %v3016
    %v3054 = vunpack.c.l.b16 %v3017
    %v3055 = vunpack.c.l.b16 %v3018
    %v3056 = vunpack.c.l.b16 %v3019
    %v3057 = vunpack.c.l.b16 %v3020
    %v3058 = vunpack.c.l.b16 %v3021
    %v3059 = vunpack.c.l.b16 %v3022
    %v3060 = vunpack.c.l.b16 %v3023
    %v3061 = vunpack.c.l.b16 %v3024
    %v3062 = vunpack.c.l.b16 %v3025
    %v3063 = vpack.c.b16 %v3048, %v3047
    %v3064 = vpack.c.b16 %v3050, %v3049
    %v3065 = vpack.c.b16 %v3052, %v3051
    %v3066 = vpack.c.b16 %v3054, %v3053
    %v3067 = vpack.c.b16 %v3056, %v3055
    %v3068 = vpack.c.b16 %v3058, %v3057
    %v3069 = vpack.c.b16 %v3060, %v3059
    %v3070 = vpack.c.b16 %v3062, %v3061
    %3079 = vmatprep.subr.bf16.mxu0 0
    %3080 = vmatpush1.bf16.msra.mxu0 %v3063
    %3081 = vmatprep.subr.bf16.mxu0 0
    %3082 = vmatpush1.bf16.msra.mxu0 %v3064
    %3083 = vmatprep.subr.bf16.mxu0 0
    %3084 = vmatpush1.bf16.msra.mxu0 %v3065
    %3085 = vmatprep.subr.bf16.mxu0 0
    %3086 = vmatpush1.bf16.msra.mxu0 %v3066
    %3087 = vmatprep.subr.bf16.mxu0 0
    %3088 = vmatpush1.bf16.msra.mxu0 %v3067
    %3089 = vmatprep.subr.bf16.mxu0 0
    %3090 = vmatpush1.bf16.msra.mxu0 %v3068
    %3091 = vmatprep.subr.bf16.mxu0 0
    %3092 = vmatpush1.bf16.msra.mxu0 %v3069
    %3093 = vmatprep.subr.bf16.mxu0 0
    %3094 = vmatpush1.bf16.msra.mxu0 %v3070
    %3095 = vmatprep.subr.bf16.mxu0 0
    %3096 = vmatpush1.bf16.msra.mxu0 0
    %3097 = vmatprep.subr.bf16.mxu0 0
    %3098 = vmatpush1.bf16.msra.mxu0 0
    %3099 = vmatprep.subr.bf16.mxu0 0
    %3100 = vmatpush1.bf16.msra.mxu0 0
    %3101 = vmatprep.subr.bf16.mxu0 0
    %3102 = vmatpush1.bf16.msra.mxu0 0
    %3103 = vmatprep.subr.bf16.mxu0 0
    %3104 = vmatpush1.bf16.msra.mxu0 0
    %3105 = vmatprep.subr.bf16.mxu0 0
    %3106 = vmatpush1.bf16.msra.mxu0 0
    %3107 = vmatprep.subr.bf16.mxu0 0
    %3108 = vmatpush1.bf16.msra.mxu0 0
    %3109 = vmatprep.subr.bf16.mxu0 0
    %3110 = vmatpush1.bf16.msra.mxu0 0
    %3111 = vmatprep.mubr.bf16.mxu0 0
    %3112 = vmatmul.mubr.bf16.gmra.mrb[0].mxu0 %v3001
    %v3113 = vpop.f32.mrb[0].mxu0
    %v3114 = vadd.f32 %v3030, %v3113
    %v3115 = vpop.f32.mrb[0].mxu0
    %v3116 = vpop.f32.mrb[0].mxu0
    %v3117 = vadd.f32 %v3030, %v3116
    %v3118 = vpop.f32.mrb[0].mxu0
    %3119 = vmatprep.mubr.bf16.mxu0 0
    %3120 = vmatmul.mubr.bf16.gmra.mrb[0].mxu0 %v3002
    %v3121 = vpop.f32.mrb[0].mxu0
    %v3122 = vadd.f32 %v3030, %v3121
    %v3123 = vpop.f32.mrb[0].mxu0
    %v3124 = vpop.f32.mrb[0].mxu0
    %v3125 = vadd.f32 %v3030, %v3124
    %v3126 = vpop.f32.mrb[0].mxu0
    %3127 = vmatprep.mubr.bf16.mxu0 0
    %3128 = vmatmul.mubr.bf16.gmra.mrb[0].mxu0 %v3003
    %v3129 = vpop.f32.mrb[0].mxu0
    %v3130 = vadd.f32 %v3030, %v3129
    %v3131 = vpop.f32.mrb[0].mxu0
    %v3132 = vpop.f32.mrb[0].mxu0
    %v3133 = vadd.f32 %v3030, %v3132
    %v3134 = vpop.f32.mrb[0].mxu0
    %3135 = vmatprep.mubr.bf16.mxu0 0
    %3136 = vmatmul.mubr.bf16.gmra.mrb[0].mxu0 %v3004
    %v3137 = vpop.f32.mrb[0].mxu0
    %v3138 = vadd.f32 %v3030, %v3137
    %v3139 = vpop.f32.mrb[0].mxu0
    %v3140 = vpop.f32.mrb[0].mxu0
    %v3141 = vadd.f32 %v3030, %v3140
    %v3142 = vpop.f32.mrb[0].mxu0
    %3143 = vmatprep.mubr.bf16.mxu0 0
    %3144 = vmatmul.mubr.bf16.gmra.mrb[0].mxu0 %v3005
    %v3145 = vpop.f32.mrb[0].mxu0
    %v3146 = vadd.f32 %v3030, %v3145
    %v3147 = vpop.f32.mrb[0].mxu0
    %v3148 = vpop.f32.mrb[0].mxu0
    %v3149 = vadd.f32 %v3030, %v3148
    %v3150 = vpop.f32.mrb[0].mxu0
    %3151 = vmatprep.mubr.bf16.mxu0 0
    %3152 = vmatmul.mubr.bf16.gmra.mrb[0].mxu0 %v3006
    %v3153 = vpop.f32.mrb[0].mxu0
    %v3154 = vadd.f32 %v3030, %v3153
    %v3155 = vpop.f32.mrb[0].mxu0
    %v3156 = vpop.f32.mrb[0].mxu0
    %v3157 = vadd.f32 %v3030, %v3156
    %v3158 = vpop.f32.mrb[0].mxu0
    %3159 = vmatprep.mubr.bf16.mxu0 0
    %3160 = vmatmul.mubr.bf16.gmra.mrb[0].mxu0 %v3007
    %v3161 = vpop.f32.mrb[0].mxu0
    %v3162 = vadd.f32 %v3030, %v3161
    %v3163 = vpop.f32.mrb[0].mxu0
    %v3164 = vpop.f32.mrb[0].mxu0
    %v3165 = vadd.f32 %v3030, %v3164
    %v3166 = vpop.f32.mrb[0].mxu0
    %3167 = vmatprep.mubr.bf16.mxu0 0
    %3168 = vmatmul.mubr.bf16.gmra.mrb[0].mxu0 %v3008
    %v3169 = vpop.f32.mrb[0].mxu0
    %v3170 = vadd.f32 %v3030, %v3169
    %v3171 = vpop.f32.mrb[0].mxu0
    %v3172 = vpop.f32.mrb[0].mxu0
    %v3173 = vadd.f32 %v3030, %v3172
    %v3174 = vpop.f32.mrb[0].mxu0
    %3175 = vdwg.mxu0
    %v3176 = vmul.f32 %v3114, 0.5
    %v3177 = vmul.f32 %v3117, 0.5
    %v3178 = vmul.f32 %v3122, 0.5
    %v3179 = vmul.f32 %v3125, 0.5
    %v3180 = vmul.f32 %v3130, 0.5
    %v3181 = vmul.f32 %v3133, 0.5
    %v3182 = vmul.f32 %v3138, 0.5
    %v3183 = vmul.f32 %v3141, 0.5
    %v3184 = vmul.f32 %v3146, 0.5
    %v3185 = vmul.f32 %v3149, 0.5
    %v3186 = vmul.f32 %v3154, 0.5
    %v3187 = vmul.f32 %v3157, 0.5
    %v3188 = vmul.f32 %v3162, 0.5
    %v3189 = vmul.f32 %v3165, 0.5
    %v3190 = vmul.f32 %v3170, 0.5
    %v3191 = vmul.f32 %v3173, 0.5
    %v3192 = vmul.f32 %v3114, 0.70710677
    %v3193 = vmul.f32 %v3117, 0.70710677
    %v3194 = vmul.f32 %v3122, 0.70710677
    %v3195 = vmul.f32 %v3125, 0.70710677
    %v3196 = vmul.f32 %v3130, 0.70710677
    %v3197 = vmul.f32 %v3133, 0.70710677
    %v3198 = vmul.f32 %v3138, 0.70710677
    %v3199 = vmul.f32 %v3141, 0.70710677
    %v3200 = vmul.f32 %v3146, 0.70710677
    %v3201 = vmul.f32 %v3149, 0.70710677
    %v3202 = vmul.f32 %v3154, 0.70710677
    %v3203 = vmul.f32 %v3157, 0.70710677
    %v3204 = vmul.f32 %v3162, 0.70710677
    %v3205 = vmul.f32 %v3165, 0.70710677
    %v3206 = vmul.f32 %v3170, 0.70710677
    %v3207 = vmul.f32 %v3173, 0.70710677
    %v3208 = verf.f32.pop %v3192
    %v3209 = verf.f32.pop %v3193
    %v3210 = verf.f32.pop %v3194
    %v3211 = verf.f32.pop %v3195
    %v3212 = verf.f32.pop %v3196
    %v3213 = verf.f32.pop %v3197
    %v3214 = verf.f32.pop %v3198
    %v3215 = verf.f32.pop %v3199
    %v3216 = verf.f32.pop %v3200
    %v3217 = verf.f32.pop %v3201
    %v3218 = verf.f32.pop %v3202
    %v3219 = verf.f32.pop %v3203
    %v3220 = verf.f32.pop %v3204
    %v3221 = verf.f32.pop %v3205
    %v3222 = verf.f32.pop %v3206
    %v3223 = verf.f32.pop %v3207
    %v3224 = vadd.f32 %v3208, 1.0
    %v3225 = vadd.f32 %v3209, 1.0
    %v3226 = vadd.f32 %v3210, 1.0
    %v3227 = vadd.f32 %v3211, 1.0
    %v3228 = vadd.f32 %v3212, 1.0
    %v3229 = vadd.f32 %v3213, 1.0
    %v3230 = vadd.f32 %v3214, 1.0
    %v3231 = vadd.f32 %v3215, 1.0
    %v3232 = vadd.f32 %v3216, 1.0
    %v3233 = vadd.f32 %v3217, 1.0
    %v3234 = vadd.f32 %v3218, 1.0
    %v3235 = vadd.f32 %v3219, 1.0
    %v3236 = vadd.f32 %v3220, 1.0
    %v3237 = vadd.f32 %v3221, 1.0
    %v3238 = vadd.f32 %v3222, 1.0
    %v3239 = vadd.f32 %v3223, 1.0
    %v3240 = vmul.f32 %v3176, %v3224
    %v3241 = vmul.f32 %v3177, %v3225
    %v3242 = vmul.f32 %v3178, %v3226
    %v3243 = vmul.f32 %v3179, %v3227
    %v3244 = vmul.f32 %v3180, %v3228
    %v3245 = vmul.f32 %v3181, %v3229
    %v3246 = vmul.f32 %v3182, %v3230
    %v3247 = vmul.f32 %v3183, %v3231
    %v3248 = vmul.f32 %v3184, %v3232
    %v3249 = vmul.f32 %v3185, %v3233
    %v3250 = vmul.f32 %v3186, %v3234
    %v3251 = vmul.f32 %v3187, %v3235
    %v3252 = vmul.f32 %v3188, %v3236
    %v3253 = vmul.f32 %v3189, %v3237
    %v3254 = vmul.f32 %v3190, %v3238
    %v3255 = vmul.f32 %v3191, %v3239
    %v3256 = vpack.c.bf16 %v3241, %v3240
    %v3257 = vpack.c.bf16 %v3243, %v3242
    %v3258 = vpack.c.bf16 %v3245, %v3244
    %v3259 = vpack.c.bf16 %v3247, %v3246
    %v3260 = vpack.c.bf16 %v3249, %v3248
    %v3261 = vpack.c.bf16 %v3251, %v3250
    %v3262 = vpack.c.bf16 %v3253, %v3252
    %v3263 = vpack.c.bf16 %v3255, %v3254
    %s3264 = scalar_lea.vmem [#allocation8], 768
    %v3265 = vld [vmem:[%s3264] sm:$0xf]
    %v3266 = vld [vmem:[%s3264 + $0x4] sm:$0xf]
    %v3267 = vld [vmem:[%s3264 + $0x8] sm:$0xf]
    %v3268 = vld [vmem:[%s3264 + $0xc] sm:$0xf]
    %v3269 = vld [vmem:[%s3264 + $0x10] sm:$0xf]
    %v3270 = vld [vmem:[%s3264 + $0x14] sm:$0xf]
    %v3271 = vld [vmem:[%s3264 + $0x18] sm:$0xf]
    %v3272 = vld [vmem:[%s3264 + $0x1c] sm:$0xf]
    %v3273 = vld [vmem:[%s3264 + $0x20] sm:$0xf]
    %v3274 = vld [vmem:[%s3264 + $0x24] sm:$0xf]
    %v3275 = vld [vmem:[%s3264 + $0x28] sm:$0xf]
    %v3276 = vld [vmem:[%s3264 + $0x2c] sm:$0xf]
    %v3277 = vld [vmem:[%s3264 + $0x30] sm:$0xf]
    %v3278 = vld [vmem:[%s3264 + $0x34] sm:$0xf]
    %v3279 = vld [vmem:[%s3264 + $0x38] sm:$0xf]
    %v3280 = vld [vmem:[%s3264 + $0x3c] sm:$0xf]
    %v3281 = vld [vmem:[#allocation10 + $0x14] sm:$0x1]
    %v3282 = vlaneseq
    %v3283 = vshrl.u32 %v3282, 7
    %v3284 = vsub.s32 0, %v3283
    %v3285 = vrot.slane %v3281, %v3284
    %v3302 = vunpack.c.l.b16 %v3265
    %v3303 = vunpack.c.l.b16 %v3266
    %v3304 = vunpack.c.l.b16 %v3267
    %v3305 = vunpack.c.l.b16 %v3268
    %v3306 = vunpack.c.l.b16 %v3269
    %v3307 = vunpack.c.l.b16 %v3270
    %v3308 = vunpack.c.l.b16 %v3271
    %v3309 = vunpack.c.l.b16 %v3272
    %v3310 = vunpack.c.l.b16 %v3273
    %v3311 = vunpack.c.l.b16 %v3274
    %v3312 = vunpack.c.l.b16 %v3275
    %v3313 = vunpack.c.l.b16 %v3276
    %v3314 = vunpack.c.l.b16 %v3277
    %v3315 = vunpack.c.l.b16 %v3278
    %v3316 = vunpack.c.l.b16 %v3279
    %v3317 = vunpack.c.l.b16 %v3280
    %v3318 = vpack.c.b16 %v3303, %v3302
    %v3319 = vpack.c.b16 %v3305, %v3304
    %v3320 = vpack.c.b16 %v3307, %v3306
    %v3321 = vpack.c.b16 %v3309, %v3308
    %v3322 = vpack.c.b16 %v3311, %v3310
    %v3323 = vpack.c.b16 %v3313, %v3312
    %v3324 = vpack.c.b16 %v3315, %v3314
    %v3325 = vpack.c.b16 %v3317, %v3316
    %3334 = vmatprep.subr.bf16.mxu0 0
    %3335 = vmatpush1.bf16.msra.mxu0 %v3318
    %3336 = vmatprep.subr.bf16.mxu0 0
    %3337 = vmatpush1.bf16.msra.mxu0 %v3319
    %3338 = vmatprep.subr.bf16.mxu0 0
    %3339 = vmatpush1.bf16.msra.mxu0 %v3320
    %3340 = vmatprep.subr.bf16.mxu0 0
    %3341 = vmatpush1.bf16.msra.mxu0 %v3321
    %3342 = vmatprep.subr.bf16.mxu0 0
    %3343 = vmatpush1.bf16.msra.mxu0 %v3322
    %3344 = vmatprep.subr.bf16.mxu0 0
    %3345 = vmatpush1.bf16.msra.mxu0 %v3323
    %3346 = vmatprep.subr.bf16.mxu0 0
    %3347 = vmatpush1.bf16.msra.mxu0 %v3324
    %3348 = vmatprep.subr.bf16.mxu0 0
    %3349 = vmatpush1.bf16.msra.mxu0 %v3325
    %3350 = vmatprep.subr.bf16.mxu0 0
    %3351 = vmatpush1.bf16.msra.mxu0 0
    %3352 = vmatprep.subr.bf16.mxu0 0
    %3353 = vmatpush1.bf16.msra.mxu0 0
    %3354 = vmatprep.subr.bf16.mxu0 0
    %3355 = vmatpush1.bf16.msra.mxu0 0
    %3356 = vmatprep.subr.bf16.mxu0 0
    %3357 = vmatpush1.bf16.msra.mxu0 0
    %3358 = vmatprep.subr.bf16.mxu0 0
    %3359 = vmatpush1.bf16.msra.mxu0 0
    %3360 = vmatprep.subr.bf16.mxu0 0
    %3361 = vmatpush1.bf16.msra.mxu0 0
    %3362 = vmatprep.subr.bf16.mxu0 0
    %3363 = vmatpush1.bf16.msra.mxu0 0
    %3364 = vmatprep.subr.bf16.mxu0 0
    %3365 = vmatpush1.bf16.msra.mxu0 0
    %3366 = vmatprep.mubr.bf16.mxu0 0
    %3367 = vmatmul.mubr.bf16.gmra.mrb[0].mxu0 %v3256
    %v3368 = vpop.f32.mrb[0].mxu0
    %v3369 = vadd.f32 %v3285, %v3368
    %v3370 = vpop.f32.mrb[0].mxu0
    %v3371 = vpop.f32.mrb[0].mxu0
    %v3372 = vadd.f32 %v3285, %v3371
    %v3373 = vpop.f32.mrb[0].mxu0
    %3374 = vmatprep.mubr.bf16.mxu0 0
    %3375 = vmatmul.mubr.bf16.gmra.mrb[0].mxu0 %v3257
    %v3376 = vpop.f32.mrb[0].mxu0
    %v3377 = vadd.f32 %v3285, %v3376
    %v3378 = vpop.f32.mrb[0].mxu0
    %v3379 = vpop.f32.mrb[0].mxu0
    %v3380 = vadd.f32 %v3285, %v3379
    %v3381 = vpop.f32.mrb[0].mxu0
    %3382 = vmatprep.mubr.bf16.mxu0 0
    %3383 = vmatmul.mubr.bf16.gmra.mrb[0].mxu0 %v3258
    %v3384 = vpop.f32.mrb[0].mxu0
    %v3385 = vadd.f32 %v3285, %v3384
    %v3386 = vpop.f32.mrb[0].mxu0
    %v3387 = vpop.f32.mrb[0].mxu0
    %v3388 = vadd.f32 %v3285, %v3387
    %v3389 = vpop.f32.mrb[0].mxu0
    %3390 = vmatprep.mubr.bf16.mxu0 0
    %3391 = vmatmul.mubr.bf16.gmra.mrb[0].mxu0 %v3259
    %v3392 = vpop.f32.mrb[0].mxu0
    %v3393 = vadd.f32 %v3285, %v3392
    %v3394 = vpop.f32.mrb[0].mxu0
    %v3395 = vpop.f32.mrb[0].mxu0
    %v3396 = vadd.f32 %v3285, %v3395
    %v3397 = vpop.f32.mrb[0].mxu0
    %3398 = vmatprep.mubr.bf16.mxu0 0
    %3399 = vmatmul.mubr.bf16.gmra.mrb[0].mxu0 %v3260
    %v3400 = vpop.f32.mrb[0].mxu0
    %v3401 = vadd.f32 %v3285, %v3400
    %v3402 = vpop.f32.mrb[0].mxu0
    %v3403 = vpop.f32.mrb[0].mxu0
    %v3404 = vadd.f32 %v3285, %v3403
    %v3405 = vpop.f32.mrb[0].mxu0
    %3406 = vmatprep.mubr.bf16.mxu0 0
    %3407 = vmatmul.mubr.bf16.gmra.mrb[0].mxu0 %v3261
    %v3408 = vpop.f32.mrb[0].mxu0
    %v3409 = vadd.f32 %v3285, %v3408
    %v3410 = vpop.f32.mrb[0].mxu0
    %v3411 = vpop.f32.mrb[0].mxu0
    %v3412 = vadd.f32 %v3285, %v3411
    %v3413 = vpop.f32.mrb[0].mxu0
    %3414 = vmatprep.mubr.bf16.mxu0 0
    %3415 = vmatmul.mubr.bf16.gmra.mrb[0].mxu0 %v3262
    %v3416 = vpop.f32.mrb[0].mxu0
    %v3417 = vadd.f32 %v3285, %v3416
    %v3418 = vpop.f32.mrb[0].mxu0
    %v3419 = vpop.f32.mrb[0].mxu0
    %v3420 = vadd.f32 %v3285, %v3419
    %v3421 = vpop.f32.mrb[0].mxu0
    %3422 = vmatprep.mubr.bf16.mxu0 0
    %3423 = vmatmul.mubr.bf16.gmra.mrb[0].mxu0 %v3263
    %v3424 = vpop.f32.mrb[0].mxu0
    %v3425 = vadd.f32 %v3285, %v3424
    %v3426 = vpop.f32.mrb[0].mxu0
    %v3427 = vpop.f32.mrb[0].mxu0
    %v3428 = vadd.f32 %v3285, %v3427
    %v3429 = vpop.f32.mrb[0].mxu0
    %3430 = vdwg.mxu0
    %v3431 = vadd.f32 %v2985, %v3369
    %v3432 = vadd.f32 %v2986, %v3372
    %v3433 = vadd.f32 %v2987, %v3377
    %v3434 = vadd.f32 %v2988, %v3380
    %v3435 = vadd.f32 %v2989, %v3385
    %v3436 = vadd.f32 %v2990, %v3388
    %v3437 = vadd.f32 %v2991, %v3393
    %v3438 = vadd.f32 %v2992, %v3396
    %v3439 = vadd.f32 %v2993, %v3401
    %v3440 = vadd.f32 %v2994, %v3404
    %v3441 = vadd.f32 %v2995, %v3409
    %v3442 = vadd.f32 %v2996, %v3412
    %v3443 = vadd.f32 %v2997, %v3417
    %v3444 = vadd.f32 %v2998, %v3420
    %v3445 = vadd.f32 %v2999, %v3425
    %v3446 = vadd.f32 %v3000, %v3428
    %v3447 = vld [vmem:[#allocation10 + $0x15] sm:$0x1]
    %v3448 = vlaneseq
    %v3449 = vshrl.u32 %v3448, 7
    %v3450 = vsub.s32 0, %v3449
    %v3451 = vrot.slane %v3447, %v3450
    %v3452 = vmul.f32 %v3431, %v3451
    %v3453 = vmul.f32 %v3432, %v3451
    %v3454 = vmul.f32 %v3433, %v3451
    %v3455 = vmul.f32 %v3434, %v3451
    %v3456 = vmul.f32 %v3435, %v3451
    %v3457 = vmul.f32 %v3436, %v3451
    %v3458 = vmul.f32 %v3437, %v3451
    %v3459 = vmul.f32 %v3438, %v3451
    %v3460 = vmul.f32 %v3439, %v3451
    %v3461 = vmul.f32 %v3440, %v3451
    %v3462 = vmul.f32 %v3441, %v3451
    %v3463 = vmul.f32 %v3442, %v3451
    %v3464 = vmul.f32 %v3443, %v3451
    %v3465 = vmul.f32 %v3444, %v3451
    %v3466 = vmul.f32 %v3445, %v3451
    %v3467 = vmul.f32 %v3446, %v3451
    %v3468 = vld [vmem:[#allocation10 + $0x16] sm:$0x1]
    %v3469 = vlaneseq
    %v3470 = vshrl.u32 %v3469, 7
    %v3471 = vsub.s32 0, %v3470
    %v3472 = vrot.slane %v3468, %v3471
    %v3473 = vadd.f32 %v3452, %v3472
    %v3474 = vadd.f32 %v3453, %v3472
    %v3475 = vadd.f32 %v3454, %v3472
    %v3476 = vadd.f32 %v3455, %v3472
    %v3477 = vadd.f32 %v3456, %v3472
    %v3478 = vadd.f32 %v3457, %v3472
    %v3479 = vadd.f32 %v3458, %v3472
    %v3480 = vadd.f32 %v3459, %v3472
    %v3481 = vadd.f32 %v3460, %v3472
    %v3482 = vadd.f32 %v3461, %v3472
    %v3483 = vadd.f32 %v3462, %v3472
    %v3484 = vadd.f32 %v3463, %v3472
    %v3485 = vadd.f32 %v3464, %v3472
    %v3486 = vadd.f32 %v3465, %v3472
    %v3487 = vadd.f32 %v3466, %v3472
    %v3488 = vadd.f32 %v3467, %v3472
    %v3489 = vpack.c.bf16 %v3474, %v3473
    %v3490 = vpack.c.bf16 %v3476, %v3475
    %v3491 = vpack.c.bf16 %v3478, %v3477
    %v3492 = vpack.c.bf16 %v3480, %v3479
    %v3493 = vpack.c.bf16 %v3482, %v3481
    %v3494 = vpack.c.bf16 %v3484, %v3483
    %v3495 = vpack.c.bf16 %v3486, %v3485
    %v3496 = vpack.c.bf16 %v3488, %v3487
    %3497 = vmatprep.subr.bf16.mxu0 0
    %3498 = vmatpush1.bf16.msra.mxu0 %v3489
    %3499 = vmatprep.subr.bf16.mxu0 0
    %3500 = vmatpush1.bf16.msra.mxu0 %v3490
    %3501 = vmatprep.subr.bf16.mxu0 0
    %3502 = vmatpush1.bf16.msra.mxu0 %v3491
    %3503 = vmatprep.subr.bf16.mxu0 0
    %3504 = vmatpush1.bf16.msra.mxu0 %v3492
    %3505 = vmatprep.subr.bf16.mxu0 0
    %3506 = vmatpush1.bf16.msra.mxu0 %v3493
    %3507 = vmatprep.subr.bf16.mxu0 0
    %3508 = vmatpush1.bf16.msra.mxu0 %v3494
    %3509 = vmatprep.subr.bf16.mxu0 0
    %3510 = vmatpush1.bf16.msra.mxu0 %v3495
    %3511 = vmatprep.subr.bf16.mxu0 0
    %3512 = vmatpush1.bf16.msra.mxu0 %v3496
    %3513 = vmatprep.subr.bf16.mxu0 0
    %3514 = vmatpush1.bf16.msra.mxu0 0
    %3515 = vmatprep.subr.bf16.mxu0 0
    %3516 = vmatpush1.bf16.msra.mxu0 0
    %3517 = vmatprep.subr.bf16.mxu0 0
    %3518 = vmatpush1.bf16.msra.mxu0 0
    %3519 = vmatprep.subr.bf16.mxu0 0
    %3520 = vmatpush1.bf16.msra.mxu0 0
    %3521 = vmatprep.subr.bf16.mxu0 0
    %3522 = vmatpush1.bf16.msra.mxu0 0
    %3523 = vmatprep.subr.bf16.mxu0 0
    %3524 = vmatpush1.bf16.msra.mxu0 0
    %3525 = vmatprep.subr.bf16.mxu0 0
    %3526 = vmatpush1.bf16.msra.mxu0 0
    %3527 = vmatprep.subr.bf16.mxu0 0
    %3528 = vmatpush1.bf16.msra.mxu0 0
    %3529 = vmatprep.mubr.bf16.mxu0 0
    %3530 = vmatmul.mubr.bf16.gmra.mrb[0].mxu0 %v432
    %v3531 = vpop.f32.mrb[0].mxu0
    %v3532 = vadd.f32 0.0, %v3531
    %v3533 = vpop.f32.mrb[0].mxu0
    %v3534 = vpop.f32.mrb[0].mxu0
    %v3535 = vadd.f32 0.0, %v3534
    %v3536 = vpop.f32.mrb[0].mxu0
    %3537 = vmatprep.mubr.bf16.mxu0 0
    %3538 = vmatmul.mubr.bf16.gmra.mrb[0].mxu0 %v433
    %v3539 = vpop.f32.mrb[0].mxu0
    %v3540 = vadd.f32 0.0, %v3539
    %v3541 = vpop.f32.mrb[0].mxu0
    %v3542 = vpop.f32.mrb[0].mxu0
    %v3543 = vadd.f32 0.0, %v3542
    %v3544 = vpop.f32.mrb[0].mxu0
    %3545 = vmatprep.mubr.bf16.mxu0 0
    %3546 = vmatmul.mubr.bf16.gmra.mrb[0].mxu0 %v434
    %v3547 = vpop.f32.mrb[0].mxu0
    %v3548 = vadd.f32 0.0, %v3547
    %v3549 = vpop.f32.mrb[0].mxu0
    %v3550 = vpop.f32.mrb[0].mxu0
    %v3551 = vadd.f32 0.0, %v3550
    %v3552 = vpop.f32.mrb[0].mxu0
    %3553 = vmatprep.mubr.bf16.mxu0 0
    %3554 = vmatmul.mubr.bf16.gmra.mrb[0].mxu0 %v435
    %v3555 = vpop.f32.mrb[0].mxu0
    %v3556 = vadd.f32 0.0, %v3555
    %v3557 = vpop.f32.mrb[0].mxu0
    %v3558 = vpop.f32.mrb[0].mxu0
    %v3559 = vadd.f32 0.0, %v3558
    %v3560 = vpop.f32.mrb[0].mxu0
    %3561 = vmatprep.mubr.bf16.mxu0 0
    %3562 = vmatmul.mubr.bf16.gmra.mrb[0].mxu0 %v436
    %v3563 = vpop.f32.mrb[0].mxu0
    %v3564 = vadd.f32 0.0, %v3563
    %v3565 = vpop.f32.mrb[0].mxu0
    %v3566 = vpop.f32.mrb[0].mxu0
    %v3567 = vadd.f32 0.0, %v3566
    %v3568 = vpop.f32.mrb[0].mxu0
    %3569 = vmatprep.mubr.bf16.mxu0 0
    %3570 = vmatmul.mubr.bf16.gmra.mrb[0].mxu0 %v437
    %v3571 = vpop.f32.mrb[0].mxu0
    %v3572 = vadd.f32 0.0, %v3571
    %v3573 = vpop.f32.mrb[0].mxu0
    %v3574 = vpop.f32.mrb[0].mxu0
    %v3575 = vadd.f32 0.0, %v3574
    %v3576 = vpop.f32.mrb[0].mxu0
    %3577 = vmatprep.mubr.bf16.mxu0 0
    %3578 = vmatmul.mubr.bf16.gmra.mrb[0].mxu0 %v438
    %v3579 = vpop.f32.mrb[0].mxu0
    %v3580 = vadd.f32 0.0, %v3579
    %v3581 = vpop.f32.mrb[0].mxu0
    %v3582 = vpop.f32.mrb[0].mxu0
    %v3583 = vadd.f32 0.0, %v3582
    %v3584 = vpop.f32.mrb[0].mxu0
    %3585 = vmatprep.mubr.bf16.mxu0 0
    %3586 = vmatmul.mubr.bf16.gmra.mrb[0].mxu0 %v439
    %v3587 = vpop.f32.mrb[0].mxu0
    %v3588 = vadd.f32 0.0, %v3587
    %v3589 = vpop.f32.mrb[0].mxu0
    %v3590 = vpop.f32.mrb[0].mxu0
    %v3591 = vadd.f32 0.0, %v3590
    %v3592 = vpop.f32.mrb[0].mxu0
    %3593 = vdwg.mxu0
    %v3594 = vpack.c.bf16 %v3535, %v3532
    %v3595 = vpack.c.bf16 %v3543, %v3540
    %v3596 = vpack.c.bf16 %v3551, %v3548
    %v3597 = vpack.c.bf16 %v3559, %v3556
    %v3598 = vpack.c.bf16 %v3567, %v3564
    %v3599 = vpack.c.bf16 %v3575, %v3572
    %v3600 = vpack.c.bf16 %v3583, %v3580
    %v3601 = vpack.c.bf16 %v3591, %v3588
    %s3602 = scalar_lea.vmem [#allocation8], 832
    %v3603 = vld [vmem:[%s3602] sm:$0xf]
    %v3604 = vld [vmem:[%s3602 + $0x4] sm:$0xf]
    %v3605 = vld [vmem:[%s3602 + $0x8] sm:$0xf]
    %v3606 = vld [vmem:[%s3602 + $0xc] sm:$0xf]
    %v3607 = vld [vmem:[%s3602 + $0x10] sm:$0xf]
    %v3608 = vld [vmem:[%s3602 + $0x14] sm:$0xf]
    %v3609 = vld [vmem:[%s3602 + $0x18] sm:$0xf]
    %v3610 = vld [vmem:[%s3602 + $0x1c] sm:$0xf]
    %v3611 = vld [vmem:[%s3602 + $0x20] sm:$0xf]
    %v3612 = vld [vmem:[%s3602 + $0x24] sm:$0xf]
    %v3613 = vld [vmem:[%s3602 + $0x28] sm:$0xf]
    %v3614 = vld [vmem:[%s3602 + $0x2c] sm:$0xf]
    %v3615 = vld [vmem:[%s3602 + $0x30] sm:$0xf]
    %v3616 = vld [vmem:[%s3602 + $0x34] sm:$0xf]
    %v3617 = vld [vmem:[%s3602 + $0x38] sm:$0xf]
    %v3618 = vld [vmem:[%s3602 + $0x3c] sm:$0xf]
    %v3619 = vld [vmem:[#allocation10 + $0x17] sm:$0x1]
    %v3620 = vlaneseq
    %v3621 = vshrl.u32 %v3620, 7
    %v3622 = vsub.s32 0, %v3621
    %v3623 = vrot.slane %v3619, %v3622
    %v3640 = vunpack.c.l.b16 %v3603
    %v3641 = vunpack.c.l.b16 %v3604
    %v3642 = vunpack.c.l.b16 %v3605
    %v3643 = vunpack.c.l.b16 %v3606
    %v3644 = vunpack.c.l.b16 %v3607
    %v3645 = vunpack.c.l.b16 %v3608
    %v3646 = vunpack.c.l.b16 %v3609
    %v3647 = vunpack.c.l.b16 %v3610
    %v3648 = vunpack.c.l.b16 %v3611
    %v3649 = vunpack.c.l.b16 %v3612
    %v3650 = vunpack.c.l.b16 %v3613
    %v3651 = vunpack.c.l.b16 %v3614
    %v3652 = vunpack.c.l.b16 %v3615
    %v3653 = vunpack.c.l.b16 %v3616
    %v3654 = vunpack.c.l.b16 %v3617
    %v3655 = vunpack.c.l.b16 %v3618
    %v3656 = vpack.c.b16 %v3641, %v3640
    %v3657 = vpack.c.b16 %v3643, %v3642
    %v3658 = vpack.c.b16 %v3645, %v3644
    %v3659 = vpack.c.b16 %v3647, %v3646
    %v3660 = vpack.c.b16 %v3649, %v3648
    %v3661 = vpack.c.b16 %v3651, %v3650
    %v3662 = vpack.c.b16 %v3653, %v3652
    %v3663 = vpack.c.b16 %v3655, %v3654
    %3672 = vmatprep.subr.bf16.mxu0 0
    %3673 = vmatpush1.bf16.msra.mxu0 %v3656
    %3674 = vmatprep.subr.bf16.mxu0 0
    %3675 = vmatpush1.bf16.msra.mxu0 %v3657
    %3676 = vmatprep.subr.bf16.mxu0 0
    %3677 = vmatpush1.bf16.msra.mxu0 %v3658
    %3678 = vmatprep.subr.bf16.mxu0 0
    %3679 = vmatpush1.bf16.msra.mxu0 %v3659
    %3680 = vmatprep.subr.bf16.mxu0 0
    %3681 = vmatpush1.bf16.msra.mxu0 %v3660
    %3682 = vmatprep.subr.bf16.mxu0 0
    %3683 = vmatpush1.bf16.msra.mxu0 %v3661
    %3684 = vmatprep.subr.bf16.mxu0 0
    %3685 = vmatpush1.bf16.msra.mxu0 %v3662
    %3686 = vmatprep.subr.bf16.mxu0 0
    %3687 = vmatpush1.bf16.msra.mxu0 %v3663
    %3688 = vmatprep.subr.bf16.mxu0 0
    %3689 = vmatpush1.bf16.msra.mxu0 0
    %3690 = vmatprep.subr.bf16.mxu0 0
    %3691 = vmatpush1.bf16.msra.mxu0 0
    %3692 = vmatprep.subr.bf16.mxu0 0
    %3693 = vmatpush1.bf16.msra.mxu0 0
    %3694 = vmatprep.subr.bf16.mxu0 0
    %3695 = vmatpush1.bf16.msra.mxu0 0
    %3696 = vmatprep.subr.bf16.mxu0 0
    %3697 = vmatpush1.bf16.msra.mxu0 0
    %3698 = vmatprep.subr.bf16.mxu0 0
    %3699 = vmatpush1.bf16.msra.mxu0 0
    %3700 = vmatprep.subr.bf16.mxu0 0
    %3701 = vmatpush1.bf16.msra.mxu0 0
    %3702 = vmatprep.subr.bf16.mxu0 0
    %3703 = vmatpush1.bf16.msra.mxu0 0
    %3704 = vmatprep.mubr.bf16.mxu0 0
    %3705 = vmatmul.mubr.bf16.gmra.mrb[0].mxu0 %v3594
    %v3706 = vpop.f32.mrb[0].mxu0
    %v3707 = vadd.f32 %v3623, %v3706
    %v3708 = vpop.f32.mrb[0].mxu0
    %v3709 = vpop.f32.mrb[0].mxu0
    %v3710 = vadd.f32 %v3623, %v3709
    %v3711 = vpop.f32.mrb[0].mxu0
    %3712 = vmatprep.mubr.bf16.mxu0 0
    %3713 = vmatmul.mubr.bf16.gmra.mrb[0].mxu0 %v3595
    %v3714 = vpop.f32.mrb[0].mxu0
    %v3715 = vadd.f32 %v3623, %v3714
    %v3716 = vpop.f32.mrb[0].mxu0
    %v3717 = vpop.f32.mrb[0].mxu0
    %v3718 = vadd.f32 %v3623, %v3717
    %v3719 = vpop.f32.mrb[0].mxu0
    %3720 = vmatprep.mubr.bf16.mxu0 0
    %3721 = vmatmul.mubr.bf16.gmra.mrb[0].mxu0 %v3596
    %v3722 = vpop.f32.mrb[0].mxu0
    %v3723 = vadd.f32 %v3623, %v3722
    %v3724 = vpop.f32.mrb[0].mxu0
    %v3725 = vpop.f32.mrb[0].mxu0
    %v3726 = vadd.f32 %v3623, %v3725
    %v3727 = vpop.f32.mrb[0].mxu0
    %3728 = vmatprep.mubr.bf16.mxu0 0
    %3729 = vmatmul.mubr.bf16.gmra.mrb[0].mxu0 %v3597
    %v3730 = vpop.f32.mrb[0].mxu0
    %v3731 = vadd.f32 %v3623, %v3730
    %v3732 = vpop.f32.mrb[0].mxu0
    %v3733 = vpop.f32.mrb[0].mxu0
    %v3734 = vadd.f32 %v3623, %v3733
    %v3735 = vpop.f32.mrb[0].mxu0
    %3736 = vmatprep.mubr.bf16.mxu0 0
    %3737 = vmatmul.mubr.bf16.gmra.mrb[0].mxu0 %v3598
    %v3738 = vpop.f32.mrb[0].mxu0
    %v3739 = vadd.f32 %v3623, %v3738
    %v3740 = vpop.f32.mrb[0].mxu0
    %v3741 = vpop.f32.mrb[0].mxu0
    %v3742 = vadd.f32 %v3623, %v3741
    %v3743 = vpop.f32.mrb[0].mxu0
    %3744 = vmatprep.mubr.bf16.mxu0 0
    %3745 = vmatmul.mubr.bf16.gmra.mrb[0].mxu0 %v3599
    %v3746 = vpop.f32.mrb[0].mxu0
    %v3747 = vadd.f32 %v3623, %v3746
    %v3748 = vpop.f32.mrb[0].mxu0
    %v3749 = vpop.f32.mrb[0].mxu0
    %v3750 = vadd.f32 %v3623, %v3749
    %v3751 = vpop.f32.mrb[0].mxu0
    %3752 = vmatprep.mubr.bf16.mxu0 0
    %3753 = vmatmul.mubr.bf16.gmra.mrb[0].mxu0 %v3600
    %v3754 = vpop.f32.mrb[0].mxu0
    %v3755 = vadd.f32 %v3623, %v3754
    %v3756 = vpop.f32.mrb[0].mxu0
    %v3757 = vpop.f32.mrb[0].mxu0
    %v3758 = vadd.f32 %v3623, %v3757
    %v3759 = vpop.f32.mrb[0].mxu0
    %3760 = vmatprep.mubr.bf16.mxu0 0
    %3761 = vmatmul.mubr.bf16.gmra.mrb[0].mxu0 %v3601
    %v3762 = vpop.f32.mrb[0].mxu0
    %v3763 = vadd.f32 %v3623, %v3762
    %v3764 = vpop.f32.mrb[0].mxu0
    %v3765 = vpop.f32.mrb[0].mxu0
    %v3766 = vadd.f32 %v3623, %v3765
    %v3767 = vpop.f32.mrb[0].mxu0
    %3768 = vdwg.mxu0
    %s3769 = scalar_lea.vmem [#allocation8], 896
    %v3770 = vld [vmem:[%s3769] sm:$0xf]
    %v3771 = vld [vmem:[%s3769 + $0x4] sm:$0xf]
    %v3772 = vld [vmem:[%s3769 + $0x8] sm:$0xf]
    %v3773 = vld [vmem:[%s3769 + $0xc] sm:$0xf]
    %v3774 = vld [vmem:[%s3769 + $0x10] sm:$0xf]
    %v3775 = vld [vmem:[%s3769 + $0x14] sm:$0xf]
    %v3776 = vld [vmem:[%s3769 + $0x18] sm:$0xf]
    %v3777 = vld [vmem:[%s3769 + $0x1c] sm:$0xf]
    %v3778 = vld [vmem:[%s3769 + $0x20] sm:$0xf]
    %v3779 = vld [vmem:[%s3769 + $0x24] sm:$0xf]
    %v3780 = vld [vmem:[%s3769 + $0x28] sm:$0xf]
    %v3781 = vld [vmem:[%s3769 + $0x2c] sm:$0xf]
    %v3782 = vld [vmem:[%s3769 + $0x30] sm:$0xf]
    %v3783 = vld [vmem:[%s3769 + $0x34] sm:$0xf]
    %v3784 = vld [vmem:[%s3769 + $0x38] sm:$0xf]
    %v3785 = vld [vmem:[%s3769 + $0x3c] sm:$0xf]
    %v3802 = vunpack.c.l.b16 %v3770
    %v3803 = vunpack.c.l.b16 %v3771
    %v3804 = vunpack.c.l.b16 %v3772
    %v3805 = vunpack.c.l.b16 %v3773
    %v3806 = vunpack.c.l.b16 %v3774
    %v3807 = vunpack.c.l.b16 %v3775
    %v3808 = vunpack.c.l.b16 %v3776
    %v3809 = vunpack.c.l.b16 %v3777
    %v3810 = vunpack.c.l.b16 %v3778
    %v3811 = vunpack.c.l.b16 %v3779
    %v3812 = vunpack.c.l.b16 %v3780
    %v3813 = vunpack.c.l.b16 %v3781
    %v3814 = vunpack.c.l.b16 %v3782
    %v3815 = vunpack.c.l.b16 %v3783
    %v3816 = vunpack.c.l.b16 %v3784
    %v3817 = vunpack.c.l.b16 %v3785
    %v3818 = vpack.c.b16 %v3803, %v3802
    %v3819 = vpack.c.b16 %v3805, %v3804
    %v3820 = vpack.c.b16 %v3807, %v3806
    %v3821 = vpack.c.b16 %v3809, %v3808
    %v3822 = vpack.c.b16 %v3811, %v3810
    %v3823 = vpack.c.b16 %v3813, %v3812
    %v3824 = vpack.c.b16 %v3815, %v3814
    %v3825 = vpack.c.b16 %v3817, %v3816
    %3834 = vmatprep.subr.bf16.mxu0 0
    %3835 = vmatpush1.bf16.msra.mxu0 %v3818
    %3836 = vmatprep.subr.bf16.mxu0 0
    %3837 = vmatpush1.bf16.msra.mxu0 %v3819
    %3838 = vmatprep.subr.bf16.mxu0 0
    %3839 = vmatpush1.bf16.msra.mxu0 %v3820
    %3840 = vmatprep.subr.bf16.mxu0 0
    %3841 = vmatpush1.bf16.msra.mxu0 %v3821
    %3842 = vmatprep.subr.bf16.mxu0 0
    %3843 = vmatpush1.bf16.msra.mxu0 %v3822
    %3844 = vmatprep.subr.bf16.mxu0 0
    %3845 = vmatpush1.bf16.msra.mxu0 %v3823
    %3846 = vmatprep.subr.bf16.mxu0 0
    %3847 = vmatpush1.bf16.msra.mxu0 %v3824
    %3848 = vmatprep.subr.bf16.mxu0 0
    %3849 = vmatpush1.bf16.msra.mxu0 %v3825
    %3850 = vmatprep.subr.bf16.mxu0 0
    %3851 = vmatpush1.bf16.msra.mxu0 0
    %3852 = vmatprep.subr.bf16.mxu0 0
    %3853 = vmatpush1.bf16.msra.mxu0 0
    %3854 = vmatprep.subr.bf16.mxu0 0
    %3855 = vmatpush1.bf16.msra.mxu0 0
    %3856 = vmatprep.subr.bf16.mxu0 0
    %3857 = vmatpush1.bf16.msra.mxu0 0
    %3858 = vmatprep.subr.bf16.mxu0 0
    %3859 = vmatpush1.bf16.msra.mxu0 0
    %3860 = vmatprep.subr.bf16.mxu0 0
    %3861 = vmatpush1.bf16.msra.mxu0 0
    %3862 = vmatprep.subr.bf16.mxu0 0
    %3863 = vmatpush1.bf16.msra.mxu0 0
    %3864 = vmatprep.subr.bf16.mxu0 0
    %3865 = vmatpush1.bf16.msra.mxu0 0
    %3866 = vmatprep.mubr.bf16.mxu0 0
    %3867 = vmatmul.mubr.bf16.gmra.mrb[0].mxu0 %v3489
    %v3868 = vpop.f32.mrb[0].mxu0
    %v3869 = vadd.f32 0.0, %v3868
    %v3870 = vpop.f32.mrb[0].mxu0
    %v3871 = vpop.f32.mrb[0].mxu0
    %v3872 = vadd.f32 0.0, %v3871
    %v3873 = vpop.f32.mrb[0].mxu0
    %3874 = vmatprep.mubr.bf16.mxu0 0
    %3875 = vmatmul.mubr.bf16.gmra.mrb[0].mxu0 %v3490
    %v3876 = vpop.f32.mrb[0].mxu0
    %v3877 = vadd.f32 0.0, %v3876
    %v3878 = vpop.f32.mrb[0].mxu0
    %v3879 = vpop.f32.mrb[0].mxu0
    %v3880 = vadd.f32 0.0, %v3879
    %v3881 = vpop.f32.mrb[0].mxu0
    %3882 = vmatprep.mubr.bf16.mxu0 0
    %3883 = vmatmul.mubr.bf16.gmra.mrb[0].mxu0 %v3491
    %v3884 = vpop.f32.mrb[0].mxu0
    %v3885 = vadd.f32 0.0, %v3884
    %v3886 = vpop.f32.mrb[0].mxu0
    %v3887 = vpop.f32.mrb[0].mxu0
    %v3888 = vadd.f32 0.0, %v3887
    %v3889 = vpop.f32.mrb[0].mxu0
    %3890 = vmatprep.mubr.bf16.mxu0 0
    %3891 = vmatmul.mubr.bf16.gmra.mrb[0].mxu0 %v3492
    %v3892 = vpop.f32.mrb[0].mxu0
    %v3893 = vadd.f32 0.0, %v3892
    %v3894 = vpop.f32.mrb[0].mxu0
    %v3895 = vpop.f32.mrb[0].mxu0
    %v3896 = vadd.f32 0.0, %v3895
    %v3897 = vpop.f32.mrb[0].mxu0
    %3898 = vmatprep.mubr.bf16.mxu0 0
    %3899 = vmatmul.mubr.bf16.gmra.mrb[0].mxu0 %v3493
    %v3900 = vpop.f32.mrb[0].mxu0
    %v3901 = vadd.f32 0.0, %v3900
    %v3902 = vpop.f32.mrb[0].mxu0
    %v3903 = vpop.f32.mrb[0].mxu0
    %v3904 = vadd.f32 0.0, %v3903
    %v3905 = vpop.f32.mrb[0].mxu0
    %3906 = vmatprep.mubr.bf16.mxu0 0
    %3907 = vmatmul.mubr.bf16.gmra.mrb[0].mxu0 %v3494
    %v3908 = vpop.f32.mrb[0].mxu0
    %v3909 = vadd.f32 0.0, %v3908
    %v3910 = vpop.f32.mrb[0].mxu0
    %v3911 = vpop.f32.mrb[0].mxu0
    %v3912 = vadd.f32 0.0, %v3911
    %v3913 = vpop.f32.mrb[0].mxu0
    %3914 = vmatprep.mubr.bf16.mxu0 0
    %3915 = vmatmul.mubr.bf16.gmra.mrb[0].mxu0 %v3495
    %v3916 = vpop.f32.mrb[0].mxu0
    %v3917 = vadd.f32 0.0, %v3916
    %v3918 = vpop.f32.mrb[0].mxu0
    %v3919 = vpop.f32.mrb[0].mxu0
    %v3920 = vadd.f32 0.0, %v3919
    %v3921 = vpop.f32.mrb[0].mxu0
    %3922 = vmatprep.mubr.bf16.mxu0 0
    %3923 = vmatmul.mubr.bf16.gmra.mrb[0].mxu0 %v3496
    %v3924 = vpop.f32.mrb[0].mxu0
    %v3925 = vadd.f32 0.0, %v3924
    %v3926 = vpop.f32.mrb[0].mxu0
    %v3927 = vpop.f32.mrb[0].mxu0
    %v3928 = vadd.f32 0.0, %v3927
    %v3929 = vpop.f32.mrb[0].mxu0
    %3930 = vdwg.mxu0
    %v3931 = vadd.f32 %v3707, %v3869
    %v3932 = vadd.f32 %v3710, %v3872
    %v3933 = vadd.f32 %v3715, %v3877
    %v3934 = vadd.f32 %v3718, %v3880
    %v3935 = vadd.f32 %v3723, %v3885
    %v3936 = vadd.f32 %v3726, %v3888
    %v3937 = vadd.f32 %v3731, %v3893
    %v3938 = vadd.f32 %v3734, %v3896
    %v3939 = vadd.f32 %v3739, %v3901
    %v3940 = vadd.f32 %v3742, %v3904
    %v3941 = vadd.f32 %v3747, %v3909
    %v3942 = vadd.f32 %v3750, %v3912
    %v3943 = vadd.f32 %v3755, %v3917
    %v3944 = vadd.f32 %v3758, %v3920
    %v3945 = vadd.f32 %v3763, %v3925
    %v3946 = vadd.f32 %v3766, %v3928
    %v3947 = vld [vmem:[#allocation10 + $0x18] sm:$0x1]
    %v3948 = vlaneseq
    %v3949 = vshrl.u32 %v3948, 7
    %v3950 = vsub.s32 0, %v3949
    %v3951 = vrot.slane %v3947, %v3950
    %v3952 = vmul.f32 %v3931, %v3951
    %v3953 = vmul.f32 %v3932, %v3951
    %v3954 = vmul.f32 %v3933, %v3951
    %v3955 = vmul.f32 %v3934, %v3951
    %v3956 = vmul.f32 %v3935, %v3951
    %v3957 = vmul.f32 %v3936, %v3951
    %v3958 = vmul.f32 %v3937, %v3951
    %v3959 = vmul.f32 %v3938, %v3951
    %v3960 = vmul.f32 %v3939, %v3951
    %v3961 = vmul.f32 %v3940, %v3951
    %v3962 = vmul.f32 %v3941, %v3951
    %v3963 = vmul.f32 %v3942, %v3951
    %v3964 = vmul.f32 %v3943, %v3951
    %v3965 = vmul.f32 %v3944, %v3951
    %v3966 = vmul.f32 %v3945, %v3951
    %v3967 = vmul.f32 %v3946, %v3951
    %v3968 = vld [vmem:[#allocation10 + $0x19] sm:$0x1]
    %v3969 = vlaneseq
    %v3970 = vshrl.u32 %v3969, 7
    %v3971 = vsub.s32 0, %v3970
    %v3972 = vrot.slane %v3968, %v3971
    %v3973 = vadd.f32 %v3952, %v3972
    %v3974 = vadd.f32 %v3953, %v3972
    %v3975 = vadd.f32 %v3954, %v3972
    %v3976 = vadd.f32 %v3955, %v3972
    %v3977 = vadd.f32 %v3956, %v3972
    %v3978 = vadd.f32 %v3957, %v3972
    %v3979 = vadd.f32 %v3958, %v3972
    %v3980 = vadd.f32 %v3959, %v3972
    %v3981 = vadd.f32 %v3960, %v3972
    %v3982 = vadd.f32 %v3961, %v3972
    %v3983 = vadd.f32 %v3962, %v3972
    %v3984 = vadd.f32 %v3963, %v3972
    %v3985 = vadd.f32 %v3964, %v3972
    %v3986 = vadd.f32 %v3965, %v3972
    %v3987 = vadd.f32 %v3966, %v3972
    %v3988 = vadd.f32 %v3967, %v3972
    %v3989 = vpack.c.bf16 %v3974, %v3973
    %v3990 = vpack.c.bf16 %v3976, %v3975
    %v3991 = vpack.c.bf16 %v3978, %v3977
    %v3992 = vpack.c.bf16 %v3980, %v3979
    %v3993 = vpack.c.bf16 %v3982, %v3981
    %v3994 = vpack.c.bf16 %v3984, %v3983
    %v3995 = vpack.c.bf16 %v3986, %v3985
    %v3996 = vpack.c.bf16 %v3988, %v3987
    %s3997 = scalar_lea.vmem [#allocation8], 960
    %v3998 = vld [vmem:[%s3997] sm:$0xf]
    %v3999 = vld [vmem:[%s3997 + $0x4] sm:$0xf]
    %v4000 = vld [vmem:[%s3997 + $0x8] sm:$0xf]
    %v4001 = vld [vmem:[%s3997 + $0xc] sm:$0xf]
    %v4002 = vld [vmem:[%s3997 + $0x10] sm:$0xf]
    %v4003 = vld [vmem:[%s3997 + $0x14] sm:$0xf]
    %v4004 = vld [vmem:[%s3997 + $0x18] sm:$0xf]
    %v4005 = vld [vmem:[%s3997 + $0x1c] sm:$0xf]
    %v4006 = vld [vmem:[%s3997 + $0x20] sm:$0xf]
    %v4007 = vld [vmem:[%s3997 + $0x24] sm:$0xf]
    %v4008 = vld [vmem:[%s3997 + $0x28] sm:$0xf]
    %v4009 = vld [vmem:[%s3997 + $0x2c] sm:$0xf]
    %v4010 = vld [vmem:[%s3997 + $0x30] sm:$0xf]
    %v4011 = vld [vmem:[%s3997 + $0x34] sm:$0xf]
    %v4012 = vld [vmem:[%s3997 + $0x38] sm:$0xf]
    %v4013 = vld [vmem:[%s3997 + $0x3c] sm:$0xf]
    %v4014 = vld [vmem:[#allocation10 + $0x1a] sm:$0x1]
    %v4015 = vlaneseq
    %v4016 = vshrl.u32 %v4015, 7
    %v4017 = vsub.s32 0, %v4016
    %v4018 = vrot.slane %v4014, %v4017
    %v4035 = vunpack.c.l.b16 %v3998
    %v4036 = vunpack.c.l.b16 %v3999
    %v4037 = vunpack.c.l.b16 %v4000
    %v4038 = vunpack.c.l.b16 %v4001
    %v4039 = vunpack.c.l.b16 %v4002
    %v4040 = vunpack.c.l.b16 %v4003
    %v4041 = vunpack.c.l.b16 %v4004
    %v4042 = vunpack.c.l.b16 %v4005
    %v4043 = vunpack.c.l.b16 %v4006
    %v4044 = vunpack.c.l.b16 %v4007
    %v4045 = vunpack.c.l.b16 %v4008
    %v4046 = vunpack.c.l.b16 %v4009
    %v4047 = vunpack.c.l.b16 %v4010
    %v4048 = vunpack.c.l.b16 %v4011
    %v4049 = vunpack.c.l.b16 %v4012
    %v4050 = vunpack.c.l.b16 %v4013
    %v4051 = vpack.c.b16 %v4036, %v4035
    %v4052 = vpack.c.b16 %v4038, %v4037
    %v4053 = vpack.c.b16 %v4040, %v4039
    %v4054 = vpack.c.b16 %v4042, %v4041
    %v4055 = vpack.c.b16 %v4044, %v4043
    %v4056 = vpack.c.b16 %v4046, %v4045
    %v4057 = vpack.c.b16 %v4048, %v4047
    %v4058 = vpack.c.b16 %v4050, %v4049
    %4067 = vmatprep.subr.bf16.mxu0 0
    %4068 = vmatpush1.bf16.msra.mxu0 %v4051
    %4069 = vmatprep.subr.bf16.mxu0 0
    %4070 = vmatpush1.bf16.msra.mxu0 %v4052
    %4071 = vmatprep.subr.bf16.mxu0 0
    %4072 = vmatpush1.bf16.msra.mxu0 %v4053
    %4073 = vmatprep.subr.bf16.mxu0 0
    %4074 = vmatpush1.bf16.msra.mxu0 %v4054
    %4075 = vmatprep.subr.bf16.mxu0 0
    %4076 = vmatpush1.bf16.msra.mxu0 %v4055
    %4077 = vmatprep.subr.bf16.mxu0 0
    %4078 = vmatpush1.bf16.msra.mxu0 %v4056
    %4079 = vmatprep.subr.bf16.mxu0 0
    %4080 = vmatpush1.bf16.msra.mxu0 %v4057
    %4081 = vmatprep.subr.bf16.mxu0 0
    %4082 = vmatpush1.bf16.msra.mxu0 %v4058
    %4083 = vmatprep.subr.bf16.mxu0 0
    %4084 = vmatpush1.bf16.msra.mxu0 0
    %4085 = vmatprep.subr.bf16.mxu0 0
    %4086 = vmatpush1.bf16.msra.mxu0 0
    %4087 = vmatprep.subr.bf16.mxu0 0
    %4088 = vmatpush1.bf16.msra.mxu0 0
    %4089 = vmatprep.subr.bf16.mxu0 0
    %4090 = vmatpush1.bf16.msra.mxu0 0
    %4091 = vmatprep.subr.bf16.mxu0 0
    %4092 = vmatpush1.bf16.msra.mxu0 0
    %4093 = vmatprep.subr.bf16.mxu0 0
    %4094 = vmatpush1.bf16.msra.mxu0 0
    %4095 = vmatprep.subr.bf16.mxu0 0
    %4096 = vmatpush1.bf16.msra.mxu0 0
    %4097 = vmatprep.subr.bf16.mxu0 0
    %4098 = vmatpush1.bf16.msra.mxu0 0
    %4099 = vmatprep.mubr.bf16.mxu0 0
    %4100 = vmatmul.mubr.bf16.gmra.mrb[0].mxu0 %v3989
    %v4101 = vpop.f32.mrb[0].mxu0
    %v4102 = vadd.f32 %v4018, %v4101
    %v4103 = vpop.f32.mrb[0].mxu0
    %v4104 = vpop.f32.mrb[0].mxu0
    %v4105 = vadd.f32 %v4018, %v4104
    %v4106 = vpop.f32.mrb[0].mxu0
    %4107 = vmatprep.mubr.bf16.mxu0 0
    %4108 = vmatmul.mubr.bf16.gmra.mrb[0].mxu0 %v3990
    %v4109 = vpop.f32.mrb[0].mxu0
    %v4110 = vadd.f32 %v4018, %v4109
    %v4111 = vpop.f32.mrb[0].mxu0
    %v4112 = vpop.f32.mrb[0].mxu0
    %v4113 = vadd.f32 %v4018, %v4112
    %v4114 = vpop.f32.mrb[0].mxu0
    %4115 = vmatprep.mubr.bf16.mxu0 0
    %4116 = vmatmul.mubr.bf16.gmra.mrb[0].mxu0 %v3991
    %v4117 = vpop.f32.mrb[0].mxu0
    %v4118 = vadd.f32 %v4018, %v4117
    %v4119 = vpop.f32.mrb[0].mxu0
    %v4120 = vpop.f32.mrb[0].mxu0
    %v4121 = vadd.f32 %v4018, %v4120
    %v4122 = vpop.f32.mrb[0].mxu0
    %4123 = vmatprep.mubr.bf16.mxu0 0
    %4124 = vmatmul.mubr.bf16.gmra.mrb[0].mxu0 %v3992
    %v4125 = vpop.f32.mrb[0].mxu0
    %v4126 = vadd.f32 %v4018, %v4125
    %v4127 = vpop.f32.mrb[0].mxu0
    %v4128 = vpop.f32.mrb[0].mxu0
    %v4129 = vadd.f32 %v4018, %v4128
    %v4130 = vpop.f32.mrb[0].mxu0
    %4131 = vmatprep.mubr.bf16.mxu0 0
    %4132 = vmatmul.mubr.bf16.gmra.mrb[0].mxu0 %v3993
    %v4133 = vpop.f32.mrb[0].mxu0
    %v4134 = vadd.f32 %v4018, %v4133
    %v4135 = vpop.f32.mrb[0].mxu0
    %v4136 = vpop.f32.mrb[0].mxu0
    %v4137 = vadd.f32 %v4018, %v4136
    %v4138 = vpop.f32.mrb[0].mxu0
    %4139 = vmatprep.mubr.bf16.mxu0 0
    %4140 = vmatmul.mubr.bf16.gmra.mrb[0].mxu0 %v3994
    %v4141 = vpop.f32.mrb[0].mxu0
    %v4142 = vadd.f32 %v4018, %v4141
    %v4143 = vpop.f32.mrb[0].mxu0
    %v4144 = vpop.f32.mrb[0].mxu0
    %v4145 = vadd.f32 %v4018, %v4144
    %v4146 = vpop.f32.mrb[0].mxu0
    %4147 = vmatprep.mubr.bf16.mxu0 0
    %4148 = vmatmul.mubr.bf16.gmra.mrb[0].mxu0 %v3995
    %v4149 = vpop.f32.mrb[0].mxu0
    %v4150 = vadd.f32 %v4018, %v4149
    %v4151 = vpop.f32.mrb[0].mxu0
    %v4152 = vpop.f32.mrb[0].mxu0
    %v4153 = vadd.f32 %v4018, %v4152
    %v4154 = vpop.f32.mrb[0].mxu0
    %4155 = vmatprep.mubr.bf16.mxu0 0
    %4156 = vmatmul.mubr.bf16.gmra.mrb[0].mxu0 %v3996
    %v4157 = vpop.f32.mrb[0].mxu0
    %v4158 = vadd.f32 %v4018, %v4157
    %v4159 = vpop.f32.mrb[0].mxu0
    %v4160 = vpop.f32.mrb[0].mxu0
    %v4161 = vadd.f32 %v4018, %v4160
    %v4162 = vpop.f32.mrb[0].mxu0
    %4163 = vdwg.mxu0
    %v4164 = vmul.f32 %v4102, 0.5
    %v4165 = vmul.f32 %v4105, 0.5
    %v4166 = vmul.f32 %v4110, 0.5
    %v4167 = vmul.f32 %v4113, 0.5
    %v4168 = vmul.f32 %v4118, 0.5
    %v4169 = vmul.f32 %v4121, 0.5
    %v4170 = vmul.f32 %v4126, 0.5
    %v4171 = vmul.f32 %v4129, 0.5
    %v4172 = vmul.f32 %v4134, 0.5
    %v4173 = vmul.f32 %v4137, 0.5
    %v4174 = vmul.f32 %v4142, 0.5
    %v4175 = vmul.f32 %v4145, 0.5
    %v4176 = vmul.f32 %v4150, 0.5
    %v4177 = vmul.f32 %v4153, 0.5
    %v4178 = vmul.f32 %v4158, 0.5
    %v4179 = vmul.f32 %v4161, 0.5
    %v4180 = vmul.f32 %v4102, 0.70710677
    %v4181 = vmul.f32 %v4105, 0.70710677
    %v4182 = vmul.f32 %v4110, 0.70710677
    %v4183 = vmul.f32 %v4113, 0.70710677
    %v4184 = vmul.f32 %v4118, 0.70710677
    %v4185 = vmul.f32 %v4121, 0.70710677
    %v4186 = vmul.f32 %v4126, 0.70710677
    %v4187 = vmul.f32 %v4129, 0.70710677
    %v4188 = vmul.f32 %v4134, 0.70710677
    %v4189 = vmul.f32 %v4137, 0.70710677
    %v4190 = vmul.f32 %v4142, 0.70710677
    %v4191 = vmul.f32 %v4145, 0.70710677
    %v4192 = vmul.f32 %v4150, 0.70710677
    %v4193 = vmul.f32 %v4153, 0.70710677
    %v4194 = vmul.f32 %v4158, 0.70710677
    %v4195 = vmul.f32 %v4161, 0.70710677
    %v4196 = verf.f32.pop %v4180
    %v4197 = verf.f32.pop %v4181
    %v4198 = verf.f32.pop %v4182
    %v4199 = verf.f32.pop %v4183
    %v4200 = verf.f32.pop %v4184
    %v4201 = verf.f32.pop %v4185
    %v4202 = verf.f32.pop %v4186
    %v4203 = verf.f32.pop %v4187
    %v4204 = verf.f32.pop %v4188
    %v4205 = verf.f32.pop %v4189
    %v4206 = verf.f32.pop %v4190
    %v4207 = verf.f32.pop %v4191
    %v4208 = verf.f32.pop %v4192
    %v4209 = verf.f32.pop %v4193
    %v4210 = verf.f32.pop %v4194
    %v4211 = verf.f32.pop %v4195
    %v4212 = vadd.f32 %v4196, 1.0
    %v4213 = vadd.f32 %v4197, 1.0
    %v4214 = vadd.f32 %v4198, 1.0
    %v4215 = vadd.f32 %v4199, 1.0
    %v4216 = vadd.f32 %v4200, 1.0
    %v4217 = vadd.f32 %v4201, 1.0
    %v4218 = vadd.f32 %v4202, 1.0
    %v4219 = vadd.f32 %v4203, 1.0
    %v4220 = vadd.f32 %v4204, 1.0
    %v4221 = vadd.f32 %v4205, 1.0
    %v4222 = vadd.f32 %v4206, 1.0
    %v4223 = vadd.f32 %v4207, 1.0
    %v4224 = vadd.f32 %v4208, 1.0
    %v4225 = vadd.f32 %v4209, 1.0
    %v4226 = vadd.f32 %v4210, 1.0
    %v4227 = vadd.f32 %v4211, 1.0
    %v4228 = vmul.f32 %v4164, %v4212
    %v4229 = vmul.f32 %v4165, %v4213
    %v4230 = vmul.f32 %v4166, %v4214
    %v4231 = vmul.f32 %v4167, %v4215
    %v4232 = vmul.f32 %v4168, %v4216
    %v4233 = vmul.f32 %v4169, %v4217
    %v4234 = vmul.f32 %v4170, %v4218
    %v4235 = vmul.f32 %v4171, %v4219
    %v4236 = vmul.f32 %v4172, %v4220
    %v4237 = vmul.f32 %v4173, %v4221
    %v4238 = vmul.f32 %v4174, %v4222
    %v4239 = vmul.f32 %v4175, %v4223
    %v4240 = vmul.f32 %v4176, %v4224
    %v4241 = vmul.f32 %v4177, %v4225
    %v4242 = vmul.f32 %v4178, %v4226
    %v4243 = vmul.f32 %v4179, %v4227
    %v4244 = vpack.c.bf16 %v4229, %v4228
    %v4245 = vpack.c.bf16 %v4231, %v4230
    %v4246 = vpack.c.bf16 %v4233, %v4232
    %v4247 = vpack.c.bf16 %v4235, %v4234
    %v4248 = vpack.c.bf16 %v4237, %v4236
    %v4249 = vpack.c.bf16 %v4239, %v4238
    %v4250 = vpack.c.bf16 %v4241, %v4240
    %v4251 = vpack.c.bf16 %v4243, %v4242
    %s4252 = scalar_lea.vmem [#allocation8], 1024
    %v4253 = vld [vmem:[%s4252] sm:$0xf]
    %v4254 = vld [vmem:[%s4252 + $0x4] sm:$0xf]
    %v4255 = vld [vmem:[%s4252 + $0x8] sm:$0xf]
    %v4256 = vld [vmem:[%s4252 + $0xc] sm:$0xf]
    %v4257 = vld [vmem:[%s4252 + $0x10] sm:$0xf]
    %v4258 = vld [vmem:[%s4252 + $0x14] sm:$0xf]
    %v4259 = vld [vmem:[%s4252 + $0x18] sm:$0xf]
    %v4260 = vld [vmem:[%s4252 + $0x1c] sm:$0xf]
    %v4261 = vld [vmem:[%s4252 + $0x20] sm:$0xf]
    %v4262 = vld [vmem:[%s4252 + $0x24] sm:$0xf]
    %v4263 = vld [vmem:[%s4252 + $0x28] sm:$0xf]
    %v4264 = vld [vmem:[%s4252 + $0x2c] sm:$0xf]
    %v4265 = vld [vmem:[%s4252 + $0x30] sm:$0xf]
    %v4266 = vld [vmem:[%s4252 + $0x34] sm:$0xf]
    %v4267 = vld [vmem:[%s4252 + $0x38] sm:$0xf]
    %v4268 = vld [vmem:[%s4252 + $0x3c] sm:$0xf]
    %v4269 = vld [vmem:[#allocation10 + $0x1b] sm:$0x1]
    %v4270 = vlaneseq
    %v4271 = vshrl.u32 %v4270, 7
    %v4272 = vsub.s32 0, %v4271
    %v4273 = vrot.slane %v4269, %v4272
    %v4290 = vunpack.c.l.b16 %v4253
    %v4291 = vunpack.c.l.b16 %v4254
    %v4292 = vunpack.c.l.b16 %v4255
    %v4293 = vunpack.c.l.b16 %v4256
    %v4294 = vunpack.c.l.b16 %v4257
    %v4295 = vunpack.c.l.b16 %v4258
    %v4296 = vunpack.c.l.b16 %v4259
    %v4297 = vunpack.c.l.b16 %v4260
    %v4298 = vunpack.c.l.b16 %v4261
    %v4299 = vunpack.c.l.b16 %v4262
    %v4300 = vunpack.c.l.b16 %v4263
    %v4301 = vunpack.c.l.b16 %v4264
    %v4302 = vunpack.c.l.b16 %v4265
    %v4303 = vunpack.c.l.b16 %v4266
    %v4304 = vunpack.c.l.b16 %v4267
    %v4305 = vunpack.c.l.b16 %v4268
    %v4306 = vpack.c.b16 %v4291, %v4290
    %v4307 = vpack.c.b16 %v4293, %v4292
    %v4308 = vpack.c.b16 %v4295, %v4294
    %v4309 = vpack.c.b16 %v4297, %v4296
    %v4310 = vpack.c.b16 %v4299, %v4298
    %v4311 = vpack.c.b16 %v4301, %v4300
    %v4312 = vpack.c.b16 %v4303, %v4302
    %v4313 = vpack.c.b16 %v4305, %v4304
    %4322 = vmatprep.subr.bf16.mxu0 0
    %4323 = vmatpush1.bf16.msra.mxu0 %v4306
    %4324 = vmatprep.subr.bf16.mxu0 0
    %4325 = vmatpush1.bf16.msra.mxu0 %v4307
    %4326 = vmatprep.subr.bf16.mxu0 0
    %4327 = vmatpush1.bf16.msra.mxu0 %v4308
    %4328 = vmatprep.subr.bf16.mxu0 0
    %4329 = vmatpush1.bf16.msra.mxu0 %v4309
    %4330 = vmatprep.subr.bf16.mxu0 0
    %4331 = vmatpush1.bf16.msra.mxu0 %v4310
    %4332 = vmatprep.subr.bf16.mxu0 0
    %4333 = vmatpush1.bf16.msra.mxu0 %v4311
    %4334 = vmatprep.subr.bf16.mxu0 0
    %4335 = vmatpush1.bf16.msra.mxu0 %v4312
    %4336 = vmatprep.subr.bf16.mxu0 0
    %4337 = vmatpush1.bf16.msra.mxu0 %v4313
    %4338 = vmatprep.subr.bf16.mxu0 0
    %4339 = vmatpush1.bf16.msra.mxu0 0
    %4340 = vmatprep.subr.bf16.mxu0 0
    %4341 = vmatpush1.bf16.msra.mxu0 0
    %4342 = vmatprep.subr.bf16.mxu0 0
    %4343 = vmatpush1.bf16.msra.mxu0 0
    %4344 = vmatprep.subr.bf16.mxu0 0
    %4345 = vmatpush1.bf16.msra.mxu0 0
    %4346 = vmatprep.subr.bf16.mxu0 0
    %4347 = vmatpush1.bf16.msra.mxu0 0
    %4348 = vmatprep.subr.bf16.mxu0 0
    %4349 = vmatpush1.bf16.msra.mxu0 0
    %4350 = vmatprep.subr.bf16.mxu0 0
    %4351 = vmatpush1.bf16.msra.mxu0 0
    %4352 = vmatprep.subr.bf16.mxu0 0
    %4353 = vmatpush1.bf16.msra.mxu0 0
    %4354 = vmatprep.mubr.bf16.mxu0 0
    %4355 = vmatmul.mubr.bf16.gmra.mrb[0].mxu0 %v4244
    %v4356 = vpop.f32.mrb[0].mxu0
    %v4357 = vadd.f32 %v4273, %v4356
    %v4358 = vpop.f32.mrb[0].mxu0
    %v4359 = vpop.f32.mrb[0].mxu0
    %v4360 = vadd.f32 %v4273, %v4359
    %v4361 = vpop.f32.mrb[0].mxu0
    %4362 = vmatprep.mubr.bf16.mxu0 0
    %4363 = vmatmul.mubr.bf16.gmra.mrb[0].mxu0 %v4245
    %v4364 = vpop.f32.mrb[0].mxu0
    %v4365 = vadd.f32 %v4273, %v4364
    %v4366 = vpop.f32.mrb[0].mxu0
    %v4367 = vpop.f32.mrb[0].mxu0
    %v4368 = vadd.f32 %v4273, %v4367
    %v4369 = vpop.f32.mrb[0].mxu0
    %4370 = vmatprep.mubr.bf16.mxu0 0
    %4371 = vmatmul.mubr.bf16.gmra.mrb[0].mxu0 %v4246
    %v4372 = vpop.f32.mrb[0].mxu0
    %v4373 = vadd.f32 %v4273, %v4372
    %v4374 = vpop.f32.mrb[0].mxu0
    %v4375 = vpop.f32.mrb[0].mxu0
    %v4376 = vadd.f32 %v4273, %v4375
    %v4377 = vpop.f32.mrb[0].mxu0
    %4378 = vmatprep.mubr.bf16.mxu0 0
    %4379 = vmatmul.mubr.bf16.gmra.mrb[0].mxu0 %v4247
    %v4380 = vpop.f32.mrb[0].mxu0
    %v4381 = vadd.f32 %v4273, %v4380
    %v4382 = vpop.f32.mrb[0].mxu0
    %v4383 = vpop.f32.mrb[0].mxu0
    %v4384 = vadd.f32 %v4273, %v4383
    %v4385 = vpop.f32.mrb[0].mxu0
    %4386 = vmatprep.mubr.bf16.mxu0 0
    %4387 = vmatmul.mubr.bf16.gmra.mrb[0].mxu0 %v4248
    %v4388 = vpop.f32.mrb[0].mxu0
    %v4389 = vadd.f32 %v4273, %v4388
    %v4390 = vpop.f32.mrb[0].mxu0
    %v4391 = vpop.f32.mrb[0].mxu0
    %v4392 = vadd.f32 %v4273, %v4391
    %v4393 = vpop.f32.mrb[0].mxu0
    %4394 = vmatprep.mubr.bf16.mxu0 0
    %4395 = vmatmul.mubr.bf16.gmra.mrb[0].mxu0 %v4249
    %v4396 = vpop.f32.mrb[0].mxu0
    %v4397 = vadd.f32 %v4273, %v4396
    %v4398 = vpop.f32.mrb[0].mxu0
    %v4399 = vpop.f32.mrb[0].mxu0
    %v4400 = vadd.f32 %v4273, %v4399
    %v4401 = vpop.f32.mrb[0].mxu0
    %4402 = vmatprep.mubr.bf16.mxu0 0
    %4403 = vmatmul.mubr.bf16.gmra.mrb[0].mxu0 %v4250
    %v4404 = vpop.f32.mrb[0].mxu0
    %v4405 = vadd.f32 %v4273, %v4404
    %v4406 = vpop.f32.mrb[0].mxu0
    %v4407 = vpop.f32.mrb[0].mxu0
    %v4408 = vadd.f32 %v4273, %v4407
    %v4409 = vpop.f32.mrb[0].mxu0
    %4410 = vmatprep.mubr.bf16.mxu0 0
    %4411 = vmatmul.mubr.bf16.gmra.mrb[0].mxu0 %v4251
    %v4412 = vpop.f32.mrb[0].mxu0
    %v4413 = vadd.f32 %v4273, %v4412
    %v4414 = vpop.f32.mrb[0].mxu0
    %v4415 = vpop.f32.mrb[0].mxu0
    %v4416 = vadd.f32 %v4273, %v4415
    %v4417 = vpop.f32.mrb[0].mxu0
    %4418 = vdwg.mxu0
    %v4419 = vadd.f32 %v3973, %v4357
    %v4420 = vadd.f32 %v3974, %v4360
    %v4421 = vadd.f32 %v3975, %v4365
    %v4422 = vadd.f32 %v3976, %v4368
    %v4423 = vadd.f32 %v3977, %v4373
    %v4424 = vadd.f32 %v3978, %v4376
    %v4425 = vadd.f32 %v3979, %v4381
    %v4426 = vadd.f32 %v3980, %v4384
    %v4427 = vadd.f32 %v3981, %v4389
    %v4428 = vadd.f32 %v3982, %v4392
    %v4429 = vadd.f32 %v3983, %v4397
    %v4430 = vadd.f32 %v3984, %v4400
    %v4431 = vadd.f32 %v3985, %v4405
    %v4432 = vadd.f32 %v3986, %v4408
    %v4433 = vadd.f32 %v3987, %v4413
    %v4434 = vadd.f32 %v3988, %v4416
    %v4435 = vld [vmem:[#allocation10 + $0x1c] sm:$0x1]
    %v4436 = vlaneseq
    %v4437 = vshrl.u32 %v4436, 7
    %v4438 = vsub.s32 0, %v4437
    %v4439 = vrot.slane %v4435, %v4438
    %v4440 = vmul.f32 %v4419, %v4439
    %v4441 = vmul.f32 %v4420, %v4439
    %v4442 = vmul.f32 %v4421, %v4439
    %v4443 = vmul.f32 %v4422, %v4439
    %v4444 = vmul.f32 %v4423, %v4439
    %v4445 = vmul.f32 %v4424, %v4439
    %v4446 = vmul.f32 %v4425, %v4439
    %v4447 = vmul.f32 %v4426, %v4439
    %v4448 = vmul.f32 %v4427, %v4439
    %v4449 = vmul.f32 %v4428, %v4439
    %v4450 = vmul.f32 %v4429, %v4439
    %v4451 = vmul.f32 %v4430, %v4439
    %v4452 = vmul.f32 %v4431, %v4439
    %v4453 = vmul.f32 %v4432, %v4439
    %v4454 = vmul.f32 %v4433, %v4439
    %v4455 = vmul.f32 %v4434, %v4439
    %v4456 = vld [vmem:[#allocation10 + $0x1d] sm:$0x1]
    %v4457 = vlaneseq
    %v4458 = vshrl.u32 %v4457, 7
    %v4459 = vsub.s32 0, %v4458
    %v4460 = vrot.slane %v4456, %v4459
    %v4461 = vadd.f32 %v4440, %v4460
    %v4462 = vadd.f32 %v4441, %v4460
    %v4463 = vadd.f32 %v4442, %v4460
    %v4464 = vadd.f32 %v4443, %v4460
    %v4465 = vadd.f32 %v4444, %v4460
    %v4466 = vadd.f32 %v4445, %v4460
    %v4467 = vadd.f32 %v4446, %v4460
    %v4468 = vadd.f32 %v4447, %v4460
    %v4469 = vadd.f32 %v4448, %v4460
    %v4470 = vadd.f32 %v4449, %v4460
    %v4471 = vadd.f32 %v4450, %v4460
    %v4472 = vadd.f32 %v4451, %v4460
    %v4473 = vadd.f32 %v4452, %v4460
    %v4474 = vadd.f32 %v4453, %v4460
    %v4475 = vadd.f32 %v4454, %v4460
    %v4476 = vadd.f32 %v4455, %v4460
    %v4477 = vld [vmem:[#allocation10 + $0x1e] sm:$0x1]
    %v4478 = vlaneseq
    %v4479 = vshrl.u32 %v4478, 7
    %v4480 = vsub.s32 0, %v4479
    %v4481 = vrot.slane %v4477, %v4480
    %v4482 = vmul.f32 %v4461, %v4481
    %v4483 = vmul.f32 %v4462, %v4481
    %v4484 = vmul.f32 %v4463, %v4481
    %v4485 = vmul.f32 %v4464, %v4481
    %v4486 = vmul.f32 %v4465, %v4481
    %v4487 = vmul.f32 %v4466, %v4481
    %v4488 = vmul.f32 %v4467, %v4481
    %v4489 = vmul.f32 %v4468, %v4481
    %v4490 = vmul.f32 %v4469, %v4481
    %v4491 = vmul.f32 %v4470, %v4481
    %v4492 = vmul.f32 %v4471, %v4481
    %v4493 = vmul.f32 %v4472, %v4481
    %v4494 = vmul.f32 %v4473, %v4481
    %v4495 = vmul.f32 %v4474, %v4481
    %v4496 = vmul.f32 %v4475, %v4481
    %v4497 = vmul.f32 %v4476, %v4481
    %v4498 = vld [vmem:[#allocation10 + $0x1f] sm:$0x1]
    %v4499 = vlaneseq
    %v4500 = vshrl.u32 %v4499, 7
    %v4501 = vsub.s32 0, %v4500
    %v4502 = vrot.slane %v4498, %v4501
    %v4503 = vadd.f32 %v4482, %v4502
    %v4504 = vadd.f32 %v4483, %v4502
    %v4505 = vadd.f32 %v4484, %v4502
    %v4506 = vadd.f32 %v4485, %v4502
    %v4507 = vadd.f32 %v4486, %v4502
    %v4508 = vadd.f32 %v4487, %v4502
    %v4509 = vadd.f32 %v4488, %v4502
    %v4510 = vadd.f32 %v4489, %v4502
    %v4511 = vadd.f32 %v4490, %v4502
    %v4512 = vadd.f32 %v4491, %v4502
    %v4513 = vadd.f32 %v4492, %v4502
    %v4514 = vadd.f32 %v4493, %v4502
    %v4515 = vadd.f32 %v4494, %v4502
    %v4516 = vadd.f32 %v4495, %v4502
    %v4517 = vadd.f32 %v4496, %v4502
    %v4518 = vadd.f32 %v4497, %v4502
    %v4519 = vpack.c.bf16 %v4504, %v4503
    %v4520 = vpack.c.bf16 %v4506, %v4505
    %v4521 = vpack.c.bf16 %v4508, %v4507
    %v4522 = vpack.c.bf16 %v4510, %v4509
    %v4523 = vpack.c.bf16 %v4512, %v4511
    %v4524 = vpack.c.bf16 %v4514, %v4513
    %v4525 = vpack.c.bf16 %v4516, %v4515
    %v4526 = vpack.c.bf16 %v4518, %v4517
    %s4527 = scalar_lea.vmem [#allocation8], 1088
    %v4528 = vld [vmem:[%s4527] sm:$0xf]
    %v4529 = vld [vmem:[%s4527 + $0x4] sm:$0xf]
    %v4530 = vld [vmem:[%s4527 + $0x8] sm:$0xf]
    %v4531 = vld [vmem:[%s4527 + $0xc] sm:$0xf]
    %v4532 = vld [vmem:[%s4527 + $0x10] sm:$0xf]
    %v4533 = vld [vmem:[%s4527 + $0x14] sm:$0xf]
    %v4534 = vld [vmem:[%s4527 + $0x18] sm:$0xf]
    %v4535 = vld [vmem:[%s4527 + $0x1c] sm:$0xf]
    %v4536 = vld [vmem:[%s4527 + $0x20] sm:$0xf]
    %v4537 = vld [vmem:[%s4527 + $0x24] sm:$0xf]
    %v4538 = vld [vmem:[%s4527 + $0x28] sm:$0xf]
    %v4539 = vld [vmem:[%s4527 + $0x2c] sm:$0xf]
    %v4540 = vld [vmem:[%s4527 + $0x30] sm:$0xf]
    %v4541 = vld [vmem:[%s4527 + $0x34] sm:$0xf]
    %v4542 = vld [vmem:[%s4527 + $0x38] sm:$0xf]
    %v4543 = vld [vmem:[%s4527 + $0x3c] sm:$0xf]
    %v4544 = vld [vmem:[#allocation10 + $0x20] sm:$0x1]
    %v4545 = vlaneseq
    %v4546 = vshrl.u32 %v4545, 7
    %v4547 = vsub.s32 0, %v4546
    %v4548 = vrot.slane %v4544, %v4547
    %v4565 = vunpack.c.l.b16 %v4528
    %v4566 = vunpack.c.l.b16 %v4529
    %v4567 = vunpack.c.l.b16 %v4530
    %v4568 = vunpack.c.l.b16 %v4531
    %v4569 = vunpack.c.l.b16 %v4532
    %v4570 = vunpack.c.l.b16 %v4533
    %v4571 = vunpack.c.l.b16 %v4534
    %v4572 = vunpack.c.l.b16 %v4535
    %v4573 = vunpack.c.l.b16 %v4536
    %v4574 = vunpack.c.l.b16 %v4537
    %v4575 = vunpack.c.l.b16 %v4538
    %v4576 = vunpack.c.l.b16 %v4539
    %v4577 = vunpack.c.l.b16 %v4540
    %v4578 = vunpack.c.l.b16 %v4541
    %v4579 = vunpack.c.l.b16 %v4542
    %v4580 = vunpack.c.l.b16 %v4543
    %v4581 = vpack.c.b16 %v4566, %v4565
    %v4582 = vpack.c.b16 %v4568, %v4567
    %v4583 = vpack.c.b16 %v4570, %v4569
    %v4584 = vpack.c.b16 %v4572, %v4571
    %v4585 = vpack.c.b16 %v4574, %v4573
    %v4586 = vpack.c.b16 %v4576, %v4575
    %v4587 = vpack.c.b16 %v4578, %v4577
    %v4588 = vpack.c.b16 %v4580, %v4579
    %4597 = vmatprep.subr.bf16.mxu0 0
    %4598 = vmatpush1.bf16.msra.mxu0 %v4581
    %4599 = vmatprep.subr.bf16.mxu0 0
    %4600 = vmatpush1.bf16.msra.mxu0 %v4582
    %4601 = vmatprep.subr.bf16.mxu0 0
    %4602 = vmatpush1.bf16.msra.mxu0 %v4583
    %4603 = vmatprep.subr.bf16.mxu0 0
    %4604 = vmatpush1.bf16.msra.mxu0 %v4584
    %4605 = vmatprep.subr.bf16.mxu0 0
    %4606 = vmatpush1.bf16.msra.mxu0 %v4585
    %4607 = vmatprep.subr.bf16.mxu0 0
    %4608 = vmatpush1.bf16.msra.mxu0 %v4586
    %4609 = vmatprep.subr.bf16.mxu0 0
    %4610 = vmatpush1.bf16.msra.mxu0 %v4587
    %4611 = vmatprep.subr.bf16.mxu0 0
    %4612 = vmatpush1.bf16.msra.mxu0 %v4588
    %4613 = vmatprep.subr.bf16.mxu0 0
    %4614 = vmatpush1.bf16.msra.mxu0 0
    %4615 = vmatprep.subr.bf16.mxu0 0
    %4616 = vmatpush1.bf16.msra.mxu0 0
    %4617 = vmatprep.subr.bf16.mxu0 0
    %4618 = vmatpush1.bf16.msra.mxu0 0
    %4619 = vmatprep.subr.bf16.mxu0 0
    %4620 = vmatpush1.bf16.msra.mxu0 0
    %4621 = vmatprep.subr.bf16.mxu0 0
    %4622 = vmatpush1.bf16.msra.mxu0 0
    %4623 = vmatprep.subr.bf16.mxu0 0
    %4624 = vmatpush1.bf16.msra.mxu0 0
    %4625 = vmatprep.subr.bf16.mxu0 0
    %4626 = vmatpush1.bf16.msra.mxu0 0
    %4627 = vmatprep.subr.bf16.mxu0 0
    %4628 = vmatpush1.bf16.msra.mxu0 0
    %4629 = vmatprep.mubr.bf16.mxu0 0
    %4630 = vmatmul.mubr.bf16.gmra.mrb[0].mxu0 %v4519
    %v4631 = vpop.f32.mrb[0].mxu0
    %v4632 = vadd.f32 %v4548, %v4631
    %v4633 = vpop.f32.mrb[0].mxu0
    %v4634 = vpop.f32.mrb[0].mxu0
    %v4635 = vadd.f32 %v4548, %v4634
    %v4636 = vpop.f32.mrb[0].mxu0
    %4637 = vmatprep.mubr.bf16.mxu0 0
    %4638 = vmatmul.mubr.bf16.gmra.mrb[0].mxu0 %v4520
    %v4639 = vpop.f32.mrb[0].mxu0
    %v4640 = vadd.f32 %v4548, %v4639
    %v4641 = vpop.f32.mrb[0].mxu0
    %v4642 = vpop.f32.mrb[0].mxu0
    %v4643 = vadd.f32 %v4548, %v4642
    %v4644 = vpop.f32.mrb[0].mxu0
    %4645 = vmatprep.mubr.bf16.mxu0 0
    %4646 = vmatmul.mubr.bf16.gmra.mrb[0].mxu0 %v4521
    %v4647 = vpop.f32.mrb[0].mxu0
    %v4648 = vadd.f32 %v4548, %v4647
    %v4649 = vpop.f32.mrb[0].mxu0
    %v4650 = vpop.f32.mrb[0].mxu0
    %v4651 = vadd.f32 %v4548, %v4650
    %v4652 = vpop.f32.mrb[0].mxu0
    %4653 = vmatprep.mubr.bf16.mxu0 0
    %4654 = vmatmul.mubr.bf16.gmra.mrb[0].mxu0 %v4522
    %v4655 = vpop.f32.mrb[0].mxu0
    %v4656 = vadd.f32 %v4548, %v4655
    %v4657 = vpop.f32.mrb[0].mxu0
    %v4658 = vpop.f32.mrb[0].mxu0
    %v4659 = vadd.f32 %v4548, %v4658
    %v4660 = vpop.f32.mrb[0].mxu0
    %4661 = vmatprep.mubr.bf16.mxu0 0
    %4662 = vmatmul.mubr.bf16.gmra.mrb[0].mxu0 %v4523
    %v4663 = vpop.f32.mrb[0].mxu0
    %v4664 = vadd.f32 %v4548, %v4663
    %v4665 = vpop.f32.mrb[0].mxu0
    %v4666 = vpop.f32.mrb[0].mxu0
    %v4667 = vadd.f32 %v4548, %v4666
    %v4668 = vpop.f32.mrb[0].mxu0
    %4669 = vmatprep.mubr.bf16.mxu0 0
    %4670 = vmatmul.mubr.bf16.gmra.mrb[0].mxu0 %v4524
    %v4671 = vpop.f32.mrb[0].mxu0
    %v4672 = vadd.f32 %v4548, %v4671
    %v4673 = vpop.f32.mrb[0].mxu0
    %v4674 = vpop.f32.mrb[0].mxu0
    %v4675 = vadd.f32 %v4548, %v4674
    %v4676 = vpop.f32.mrb[0].mxu0
    %4677 = vmatprep.mubr.bf16.mxu0 0
    %4678 = vmatmul.mubr.bf16.gmra.mrb[0].mxu0 %v4525
    %v4679 = vpop.f32.mrb[0].mxu0
    %v4680 = vadd.f32 %v4548, %v4679
    %v4681 = vpop.f32.mrb[0].mxu0
    %v4682 = vpop.f32.mrb[0].mxu0
    %v4683 = vadd.f32 %v4548, %v4682
    %v4684 = vpop.f32.mrb[0].mxu0
    %4685 = vmatprep.mubr.bf16.mxu0 0
    %4686 = vmatmul.mubr.bf16.gmra.mrb[0].mxu0 %v4526
    %v4687 = vpop.f32.mrb[0].mxu0
    %v4688 = vadd.f32 %v4548, %v4687
    %v4689 = vpop.f32.mrb[0].mxu0
    %v4690 = vpop.f32.mrb[0].mxu0
    %v4691 = vadd.f32 %v4548, %v4690
    %v4692 = vpop.f32.mrb[0].mxu0
    %4693 = vdwg.mxu0
    %v4694 = vmul.f32 %v4632, 0.5
    %v4695 = vmul.f32 %v4635, 0.5
    %v4696 = vmul.f32 %v4640, 0.5
    %v4697 = vmul.f32 %v4643, 0.5
    %v4698 = vmul.f32 %v4648, 0.5
    %v4699 = vmul.f32 %v4651, 0.5
    %v4700 = vmul.f32 %v4656, 0.5
    %v4701 = vmul.f32 %v4659, 0.5
    %v4702 = vmul.f32 %v4664, 0.5
    %v4703 = vmul.f32 %v4667, 0.5
    %v4704 = vmul.f32 %v4672, 0.5
    %v4705 = vmul.f32 %v4675, 0.5
    %v4706 = vmul.f32 %v4680, 0.5
    %v4707 = vmul.f32 %v4683, 0.5
    %v4708 = vmul.f32 %v4688, 0.5
    %v4709 = vmul.f32 %v4691, 0.5
    %v4710 = vmul.f32 %v4632, 0.70710677
    %v4711 = vmul.f32 %v4635, 0.70710677
    %v4712 = vmul.f32 %v4640, 0.70710677
    %v4713 = vmul.f32 %v4643, 0.70710677
    %v4714 = vmul.f32 %v4648, 0.70710677
    %v4715 = vmul.f32 %v4651, 0.70710677
    %v4716 = vmul.f32 %v4656, 0.70710677
    %v4717 = vmul.f32 %v4659, 0.70710677
    %v4718 = vmul.f32 %v4664, 0.70710677
    %v4719 = vmul.f32 %v4667, 0.70710677
    %v4720 = vmul.f32 %v4672, 0.70710677
    %v4721 = vmul.f32 %v4675, 0.70710677
    %v4722 = vmul.f32 %v4680, 0.70710677
    %v4723 = vmul.f32 %v4683, 0.70710677
    %v4724 = vmul.f32 %v4688, 0.70710677
    %v4725 = vmul.f32 %v4691, 0.70710677
    %v4726 = verf.f32.pop %v4710
    %v4727 = verf.f32.pop %v4711
    %v4728 = verf.f32.pop %v4712
    %v4729 = verf.f32.pop %v4713
    %v4730 = verf.f32.pop %v4714
    %v4731 = verf.f32.pop %v4715
    %v4732 = verf.f32.pop %v4716
    %v4733 = verf.f32.pop %v4717
    %v4734 = verf.f32.pop %v4718
    %v4735 = verf.f32.pop %v4719
    %v4736 = verf.f32.pop %v4720
    %v4737 = verf.f32.pop %v4721
    %v4738 = verf.f32.pop %v4722
    %v4739 = verf.f32.pop %v4723
    %v4740 = verf.f32.pop %v4724
    %v4741 = verf.f32.pop %v4725
    %v4742 = vadd.f32 %v4726, 1.0
    %v4743 = vadd.f32 %v4727, 1.0
    %v4744 = vadd.f32 %v4728, 1.0
    %v4745 = vadd.f32 %v4729, 1.0
    %v4746 = vadd.f32 %v4730, 1.0
    %v4747 = vadd.f32 %v4731, 1.0
    %v4748 = vadd.f32 %v4732, 1.0
    %v4749 = vadd.f32 %v4733, 1.0
    %v4750 = vadd.f32 %v4734, 1.0
    %v4751 = vadd.f32 %v4735, 1.0
    %v4752 = vadd.f32 %v4736, 1.0
    %v4753 = vadd.f32 %v4737, 1.0
    %v4754 = vadd.f32 %v4738, 1.0
    %v4755 = vadd.f32 %v4739, 1.0
    %v4756 = vadd.f32 %v4740, 1.0
    %v4757 = vadd.f32 %v4741, 1.0
    %v4758 = vmul.f32 %v4694, %v4742
    %v4759 = vmul.f32 %v4695, %v4743
    %v4760 = vmul.f32 %v4696, %v4744
    %v4761 = vmul.f32 %v4697, %v4745
    %v4762 = vmul.f32 %v4698, %v4746
    %v4763 = vmul.f32 %v4699, %v4747
    %v4764 = vmul.f32 %v4700, %v4748
    %v4765 = vmul.f32 %v4701, %v4749
    %v4766 = vmul.f32 %v4702, %v4750
    %v4767 = vmul.f32 %v4703, %v4751
    %v4768 = vmul.f32 %v4704, %v4752
    %v4769 = vmul.f32 %v4705, %v4753
    %v4770 = vmul.f32 %v4706, %v4754
    %v4771 = vmul.f32 %v4707, %v4755
    %v4772 = vmul.f32 %v4708, %v4756
    %v4773 = vmul.f32 %v4709, %v4757
    %v4774 = vpack.c.bf16 %v4759, %v4758
    %v4775 = vpack.c.bf16 %v4761, %v4760
    %v4776 = vpack.c.bf16 %v4763, %v4762
    %v4777 = vpack.c.bf16 %v4765, %v4764
    %v4778 = vpack.c.bf16 %v4767, %v4766
    %v4779 = vpack.c.bf16 %v4769, %v4768
    %v4780 = vpack.c.bf16 %v4771, %v4770
    %v4781 = vpack.c.bf16 %v4773, %v4772
    %s4782 = scalar_lea.vmem [#allocation8], 1152
    %v4783 = vld [vmem:[%s4782] sm:$0xf]
    %v4784 = vld [vmem:[%s4782 + $0x4] sm:$0xf]
    %v4785 = vld [vmem:[%s4782 + $0x8] sm:$0xf]
    %v4786 = vld [vmem:[%s4782 + $0xc] sm:$0xf]
    %v4787 = vld [vmem:[%s4782 + $0x10] sm:$0xf]
    %v4788 = vld [vmem:[%s4782 + $0x14] sm:$0xf]
    %v4789 = vld [vmem:[%s4782 + $0x18] sm:$0xf]
    %v4790 = vld [vmem:[%s4782 + $0x1c] sm:$0xf]
    %v4791 = vld [vmem:[%s4782 + $0x20] sm:$0xf]
    %v4792 = vld [vmem:[%s4782 + $0x24] sm:$0xf]
    %v4793 = vld [vmem:[%s4782 + $0x28] sm:$0xf]
    %v4794 = vld [vmem:[%s4782 + $0x2c] sm:$0xf]
    %v4795 = vld [vmem:[%s4782 + $0x30] sm:$0xf]
    %v4796 = vld [vmem:[%s4782 + $0x34] sm:$0xf]
    %v4797 = vld [vmem:[%s4782 + $0x38] sm:$0xf]
    %v4798 = vld [vmem:[%s4782 + $0x3c] sm:$0xf]
    %v4799 = vld [vmem:[#allocation10 + $0x21] sm:$0x1]
    %v4800 = vlaneseq
    %v4801 = vshrl.u32 %v4800, 7
    %v4802 = vsub.s32 0, %v4801
    %v4803 = vrot.slane %v4799, %v4802
    %v4820 = vunpack.c.l.b16 %v4783
    %v4821 = vunpack.c.l.b16 %v4784
    %v4822 = vunpack.c.l.b16 %v4785
    %v4823 = vunpack.c.l.b16 %v4786
    %v4824 = vunpack.c.l.b16 %v4787
    %v4825 = vunpack.c.l.b16 %v4788
    %v4826 = vunpack.c.l.b16 %v4789
    %v4827 = vunpack.c.l.b16 %v4790
    %v4828 = vunpack.c.l.b16 %v4791
    %v4829 = vunpack.c.l.b16 %v4792
    %v4830 = vunpack.c.l.b16 %v4793
    %v4831 = vunpack.c.l.b16 %v4794
    %v4832 = vunpack.c.l.b16 %v4795
    %v4833 = vunpack.c.l.b16 %v4796
    %v4834 = vunpack.c.l.b16 %v4797
    %v4835 = vunpack.c.l.b16 %v4798
    %v4836 = vpack.c.b16 %v4821, %v4820
    %v4837 = vpack.c.b16 %v4823, %v4822
    %v4838 = vpack.c.b16 %v4825, %v4824
    %v4839 = vpack.c.b16 %v4827, %v4826
    %v4840 = vpack.c.b16 %v4829, %v4828
    %v4841 = vpack.c.b16 %v4831, %v4830
    %v4842 = vpack.c.b16 %v4833, %v4832
    %v4843 = vpack.c.b16 %v4835, %v4834
    %4852 = vmatprep.subr.bf16.mxu0 0
    %4853 = vmatpush1.bf16.msra.mxu0 %v4836
    %4854 = vmatprep.subr.bf16.mxu0 0
    %4855 = vmatpush1.bf16.msra.mxu0 %v4837
    %4856 = vmatprep.subr.bf16.mxu0 0
    %4857 = vmatpush1.bf16.msra.mxu0 %v4838
    %4858 = vmatprep.subr.bf16.mxu0 0
    %4859 = vmatpush1.bf16.msra.mxu0 %v4839
    %4860 = vmatprep.subr.bf16.mxu0 0
    %4861 = vmatpush1.bf16.msra.mxu0 %v4840
    %4862 = vmatprep.subr.bf16.mxu0 0
    %4863 = vmatpush1.bf16.msra.mxu0 %v4841
    %4864 = vmatprep.subr.bf16.mxu0 0
    %4865 = vmatpush1.bf16.msra.mxu0 %v4842
    %4866 = vmatprep.subr.bf16.mxu0 0
    %4867 = vmatpush1.bf16.msra.mxu0 %v4843
    %4868 = vmatprep.subr.bf16.mxu0 0
    %4869 = vmatpush1.bf16.msra.mxu0 0
    %4870 = vmatprep.subr.bf16.mxu0 0
    %4871 = vmatpush1.bf16.msra.mxu0 0
    %4872 = vmatprep.subr.bf16.mxu0 0
    %4873 = vmatpush1.bf16.msra.mxu0 0
    %4874 = vmatprep.subr.bf16.mxu0 0
    %4875 = vmatpush1.bf16.msra.mxu0 0
    %4876 = vmatprep.subr.bf16.mxu0 0
    %4877 = vmatpush1.bf16.msra.mxu0 0
    %4878 = vmatprep.subr.bf16.mxu0 0
    %4879 = vmatpush1.bf16.msra.mxu0 0
    %4880 = vmatprep.subr.bf16.mxu0 0
    %4881 = vmatpush1.bf16.msra.mxu0 0
    %4882 = vmatprep.subr.bf16.mxu0 0
    %4883 = vmatpush1.bf16.msra.mxu0 0
    %4884 = vmatprep.mubr.bf16.mxu0 0
    %4885 = vmatmul.mubr.bf16.gmra.mrb[0].mxu0 %v4774
    %v4886 = vpop.f32.mrb[0].mxu0
    %v4887 = vadd.f32 %v4803, %v4886
    %v4888 = vpop.f32.mrb[0].mxu0
    %v4889 = vpop.f32.mrb[0].mxu0
    %v4890 = vadd.f32 %v4803, %v4889
    %v4891 = vpop.f32.mrb[0].mxu0
    %4892 = vmatprep.mubr.bf16.mxu0 0
    %4893 = vmatmul.mubr.bf16.gmra.mrb[0].mxu0 %v4775
    %v4894 = vpop.f32.mrb[0].mxu0
    %v4895 = vadd.f32 %v4803, %v4894
    %v4896 = vpop.f32.mrb[0].mxu0
    %v4897 = vpop.f32.mrb[0].mxu0
    %v4898 = vadd.f32 %v4803, %v4897
    %v4899 = vpop.f32.mrb[0].mxu0
    %4900 = vmatprep.mubr.bf16.mxu0 0
    %4901 = vmatmul.mubr.bf16.gmra.mrb[0].mxu0 %v4776
    %v4902 = vpop.f32.mrb[0].mxu0
    %v4903 = vadd.f32 %v4803, %v4902
    %v4904 = vpop.f32.mrb[0].mxu0
    %v4905 = vpop.f32.mrb[0].mxu0
    %v4906 = vadd.f32 %v4803, %v4905
    %v4907 = vpop.f32.mrb[0].mxu0
    %4908 = vmatprep.mubr.bf16.mxu0 0
    %4909 = vmatmul.mubr.bf16.gmra.mrb[0].mxu0 %v4777
    %v4910 = vpop.f32.mrb[0].mxu0
    %v4911 = vadd.f32 %v4803, %v4910
    %v4912 = vpop.f32.mrb[0].mxu0
    %v4913 = vpop.f32.mrb[0].mxu0
    %v4914 = vadd.f32 %v4803, %v4913
    %v4915 = vpop.f32.mrb[0].mxu0
    %4916 = vmatprep.mubr.bf16.mxu0 0
    %4917 = vmatmul.mubr.bf16.gmra.mrb[0].mxu0 %v4778
    %v4918 = vpop.f32.mrb[0].mxu0
    %v4919 = vadd.f32 %v4803, %v4918
    %v4920 = vpop.f32.mrb[0].mxu0
    %v4921 = vpop.f32.mrb[0].mxu0
    %v4922 = vadd.f32 %v4803, %v4921
    %v4923 = vpop.f32.mrb[0].mxu0
    %4924 = vmatprep.mubr.bf16.mxu0 0
    %4925 = vmatmul.mubr.bf16.gmra.mrb[0].mxu0 %v4779
    %v4926 = vpop.f32.mrb[0].mxu0
    %v4927 = vadd.f32 %v4803, %v4926
    %v4928 = vpop.f32.mrb[0].mxu0
    %v4929 = vpop.f32.mrb[0].mxu0
    %v4930 = vadd.f32 %v4803, %v4929
    %v4931 = vpop.f32.mrb[0].mxu0
    %4932 = vmatprep.mubr.bf16.mxu0 0
    %4933 = vmatmul.mubr.bf16.gmra.mrb[0].mxu0 %v4780
    %v4934 = vpop.f32.mrb[0].mxu0
    %v4935 = vadd.f32 %v4803, %v4934
    %v4936 = vpop.f32.mrb[0].mxu0
    %v4937 = vpop.f32.mrb[0].mxu0
    %v4938 = vadd.f32 %v4803, %v4937
    %v4939 = vpop.f32.mrb[0].mxu0
    %4940 = vmatprep.mubr.bf16.mxu0 0
    %4941 = vmatmul.mubr.bf16.gmra.mrb[0].mxu0 %v4781
    %v4942 = vpop.f32.mrb[0].mxu0
    %v4943 = vadd.f32 %v4803, %v4942
    %v4944 = vpop.f32.mrb[0].mxu0
    %v4945 = vpop.f32.mrb[0].mxu0
    %v4946 = vadd.f32 %v4803, %v4945
    %v4947 = vpop.f32.mrb[0].mxu0
    %4948 = vdwg.mxu0
    %v4949 = vmul.f32 %v4887, 0.5
    %v4950 = vmul.f32 %v4890, 0.5
    %v4951 = vmul.f32 %v4895, 0.5
    %v4952 = vmul.f32 %v4898, 0.5
    %v4953 = vmul.f32 %v4903, 0.5
    %v4954 = vmul.f32 %v4906, 0.5
    %v4955 = vmul.f32 %v4911, 0.5
    %v4956 = vmul.f32 %v4914, 0.5
    %v4957 = vmul.f32 %v4919, 0.5
    %v4958 = vmul.f32 %v4922, 0.5
    %v4959 = vmul.f32 %v4927, 0.5
    %v4960 = vmul.f32 %v4930, 0.5
    %v4961 = vmul.f32 %v4935, 0.5
    %v4962 = vmul.f32 %v4938, 0.5
    %v4963 = vmul.f32 %v4943, 0.5
    %v4964 = vmul.f32 %v4946, 0.5
    %v4965 = vmul.f32 %v4887, 0.70710677
    %v4966 = vmul.f32 %v4890, 0.70710677
    %v4967 = vmul.f32 %v4895, 0.70710677
    %v4968 = vmul.f32 %v4898, 0.70710677
    %v4969 = vmul.f32 %v4903, 0.70710677
    %v4970 = vmul.f32 %v4906, 0.70710677
    %v4971 = vmul.f32 %v4911, 0.70710677
    %v4972 = vmul.f32 %v4914, 0.70710677
    %v4973 = vmul.f32 %v4919, 0.70710677
    %v4974 = vmul.f32 %v4922, 0.70710677
    %v4975 = vmul.f32 %v4927, 0.70710677
    %v4976 = vmul.f32 %v4930, 0.70710677
    %v4977 = vmul.f32 %v4935, 0.70710677
    %v4978 = vmul.f32 %v4938, 0.70710677
    %v4979 = vmul.f32 %v4943, 0.70710677
    %v4980 = vmul.f32 %v4946, 0.70710677
    %v4981 = verf.f32.pop %v4965
    %v4982 = verf.f32.pop %v4966
    %v4983 = verf.f32.pop %v4967
    %v4984 = verf.f32.pop %v4968
    %v4985 = verf.f32.pop %v4969
    %v4986 = verf.f32.pop %v4970
    %v4987 = verf.f32.pop %v4971
    %v4988 = verf.f32.pop %v4972
    %v4989 = verf.f32.pop %v4973
    %v4990 = verf.f32.pop %v4974
    %v4991 = verf.f32.pop %v4975
    %v4992 = verf.f32.pop %v4976
    %v4993 = verf.f32.pop %v4977
    %v4994 = verf.f32.pop %v4978
    %v4995 = verf.f32.pop %v4979
    %v4996 = verf.f32.pop %v4980
    %v4997 = vadd.f32 %v4981, 1.0
    %v4998 = vadd.f32 %v4982, 1.0
    %v4999 = vadd.f32 %v4983, 1.0
    %v5000 = vadd.f32 %v4984, 1.0
    %v5001 = vadd.f32 %v4985, 1.0
    %v5002 = vadd.f32 %v4986, 1.0
    %v5003 = vadd.f32 %v4987, 1.0
    %v5004 = vadd.f32 %v4988, 1.0
    %v5005 = vadd.f32 %v4989, 1.0
    %v5006 = vadd.f32 %v4990, 1.0
    %v5007 = vadd.f32 %v4991, 1.0
    %v5008 = vadd.f32 %v4992, 1.0
    %v5009 = vadd.f32 %v4993, 1.0
    %v5010 = vadd.f32 %v4994, 1.0
    %v5011 = vadd.f32 %v4995, 1.0
    %v5012 = vadd.f32 %v4996, 1.0
    %v5013 = vmul.f32 %v4949, %v4997
    %v5014 = vmul.f32 %v4950, %v4998
    %v5015 = vmul.f32 %v4951, %v4999
    %v5016 = vmul.f32 %v4952, %v5000
    %v5017 = vmul.f32 %v4953, %v5001
    %v5018 = vmul.f32 %v4954, %v5002
    %v5019 = vmul.f32 %v4955, %v5003
    %v5020 = vmul.f32 %v4956, %v5004
    %v5021 = vmul.f32 %v4957, %v5005
    %v5022 = vmul.f32 %v4958, %v5006
    %v5023 = vmul.f32 %v4959, %v5007
    %v5024 = vmul.f32 %v4960, %v5008
    %v5025 = vmul.f32 %v4961, %v5009
    %v5026 = vmul.f32 %v4962, %v5010
    %v5027 = vmul.f32 %v4963, %v5011
    %v5028 = vmul.f32 %v4964, %v5012
    %v5029 = vpack.c.bf16 %v5014, %v5013
    %v5030 = vpack.c.bf16 %v5016, %v5015
    %v5031 = vpack.c.bf16 %v5018, %v5017
    %v5032 = vpack.c.bf16 %v5020, %v5019
    %v5033 = vpack.c.bf16 %v5022, %v5021
    %v5034 = vpack.c.bf16 %v5024, %v5023
    %v5035 = vpack.c.bf16 %v5026, %v5025
    %v5036 = vpack.c.bf16 %v5028, %v5027
    %s5037 = scalar_lea.vmem [#allocation8], 1216
    %v5038 = vld [vmem:[%s5037] sm:$0xf]
    %v5039 = vld [vmem:[%s5037 + $0x4] sm:$0xf]
    %v5040 = vld [vmem:[%s5037 + $0x8] sm:$0xf]
    %v5041 = vld [vmem:[%s5037 + $0xc] sm:$0xf]
    %v5042 = vld [vmem:[%s5037 + $0x10] sm:$0xf]
    %v5043 = vld [vmem:[%s5037 + $0x14] sm:$0xf]
    %v5044 = vld [vmem:[%s5037 + $0x18] sm:$0xf]
    %v5045 = vld [vmem:[%s5037 + $0x1c] sm:$0xf]
    %v5046 = vld [vmem:[%s5037 + $0x20] sm:$0xf]
    %v5047 = vld [vmem:[%s5037 + $0x24] sm:$0xf]
    %v5048 = vld [vmem:[%s5037 + $0x28] sm:$0xf]
    %v5049 = vld [vmem:[%s5037 + $0x2c] sm:$0xf]
    %v5050 = vld [vmem:[%s5037 + $0x30] sm:$0xf]
    %v5051 = vld [vmem:[%s5037 + $0x34] sm:$0xf]
    %v5052 = vld [vmem:[%s5037 + $0x38] sm:$0xf]
    %v5053 = vld [vmem:[%s5037 + $0x3c] sm:$0xf]
    %v5054 = vld [vmem:[#allocation10 + $0x22] sm:$0x1]
    %v5055 = vlaneseq
    %v5056 = vshrl.u32 %v5055, 7
    %v5057 = vsub.s32 0, %v5056
    %v5058 = vrot.slane %v5054, %v5057
    %v5075 = vunpack.c.l.b16 %v5038
    %v5076 = vunpack.c.l.b16 %v5039
    %v5077 = vunpack.c.l.b16 %v5040
    %v5078 = vunpack.c.l.b16 %v5041
    %v5079 = vunpack.c.l.b16 %v5042
    %v5080 = vunpack.c.l.b16 %v5043
    %v5081 = vunpack.c.l.b16 %v5044
    %v5082 = vunpack.c.l.b16 %v5045
    %v5083 = vunpack.c.l.b16 %v5046
    %v5084 = vunpack.c.l.b16 %v5047
    %v5085 = vunpack.c.l.b16 %v5048
    %v5086 = vunpack.c.l.b16 %v5049
    %v5087 = vunpack.c.l.b16 %v5050
    %v5088 = vunpack.c.l.b16 %v5051
    %v5089 = vunpack.c.l.b16 %v5052
    %v5090 = vunpack.c.l.b16 %v5053
    %v5091 = vpack.c.b16 %v5076, %v5075
    %v5092 = vpack.c.b16 %v5078, %v5077
    %v5093 = vpack.c.b16 %v5080, %v5079
    %v5094 = vpack.c.b16 %v5082, %v5081
    %v5095 = vpack.c.b16 %v5084, %v5083
    %v5096 = vpack.c.b16 %v5086, %v5085
    %v5097 = vpack.c.b16 %v5088, %v5087
    %v5098 = vpack.c.b16 %v5090, %v5089
    %5107 = vmatprep.subr.bf16.mxu0 0
    %5108 = vmatpush1.bf16.msra.mxu0 %v5091
    %5109 = vmatprep.subr.bf16.mxu0 0
    %5110 = vmatpush1.bf16.msra.mxu0 %v5092
    %5111 = vmatprep.subr.bf16.mxu0 0
    %5112 = vmatpush1.bf16.msra.mxu0 %v5093
    %5113 = vmatprep.subr.bf16.mxu0 0
    %5114 = vmatpush1.bf16.msra.mxu0 %v5094
    %5115 = vmatprep.subr.bf16.mxu0 0
    %5116 = vmatpush1.bf16.msra.mxu0 %v5095
    %5117 = vmatprep.subr.bf16.mxu0 0
    %5118 = vmatpush1.bf16.msra.mxu0 %v5096
    %5119 = vmatprep.subr.bf16.mxu0 0
    %5120 = vmatpush1.bf16.msra.mxu0 %v5097
    %5121 = vmatprep.subr.bf16.mxu0 0
    %5122 = vmatpush1.bf16.msra.mxu0 %v5098
    %5123 = vmatprep.subr.bf16.mxu0 0
    %5124 = vmatpush1.bf16.msra.mxu0 0
    %5125 = vmatprep.subr.bf16.mxu0 0
    %5126 = vmatpush1.bf16.msra.mxu0 0
    %5127 = vmatprep.subr.bf16.mxu0 0
    %5128 = vmatpush1.bf16.msra.mxu0 0
    %5129 = vmatprep.subr.bf16.mxu0 0
    %5130 = vmatpush1.bf16.msra.mxu0 0
    %5131 = vmatprep.subr.bf16.mxu0 0
    %5132 = vmatpush1.bf16.msra.mxu0 0
    %5133 = vmatprep.subr.bf16.mxu0 0
    %5134 = vmatpush1.bf16.msra.mxu0 0
    %5135 = vmatprep.subr.bf16.mxu0 0
    %5136 = vmatpush1.bf16.msra.mxu0 0
    %5137 = vmatprep.subr.bf16.mxu0 0
    %5138 = vmatpush1.bf16.msra.mxu0 0
    %5139 = vmatprep.mubr.bf16.mxu0 0
    %5140 = vmatmul.mubr.bf16.gmra.mrb[0].mxu0 %v5029
    %v5141 = vpop.f32.mrb[0].mxu0
    %v5142 = vadd.f32 %v5058, %v5141
    %v5143 = vpop.f32.mrb[0].mxu0
    %v5144 = vpop.f32.mrb[0].mxu0
    %v5145 = vadd.f32 %v5058, %v5144
    %v5146 = vpop.f32.mrb[0].mxu0
    %5147 = vmatprep.mubr.bf16.mxu0 0
    %5148 = vmatmul.mubr.bf16.gmra.mrb[0].mxu0 %v5030
    %v5149 = vpop.f32.mrb[0].mxu0
    %v5150 = vadd.f32 %v5058, %v5149
    %v5151 = vpop.f32.mrb[0].mxu0
    %v5152 = vpop.f32.mrb[0].mxu0
    %v5153 = vadd.f32 %v5058, %v5152
    %v5154 = vpop.f32.mrb[0].mxu0
    %5155 = vmatprep.mubr.bf16.mxu0 0
    %5156 = vmatmul.mubr.bf16.gmra.mrb[0].mxu0 %v5031
    %v5157 = vpop.f32.mrb[0].mxu0
    %v5158 = vadd.f32 %v5058, %v5157
    %v5159 = vpop.f32.mrb[0].mxu0
    %v5160 = vpop.f32.mrb[0].mxu0
    %v5161 = vadd.f32 %v5058, %v5160
    %v5162 = vpop.f32.mrb[0].mxu0
    %5163 = vmatprep.mubr.bf16.mxu0 0
    %5164 = vmatmul.mubr.bf16.gmra.mrb[0].mxu0 %v5032
    %v5165 = vpop.f32.mrb[0].mxu0
    %v5166 = vadd.f32 %v5058, %v5165
    %v5167 = vpop.f32.mrb[0].mxu0
    %v5168 = vpop.f32.mrb[0].mxu0
    %v5169 = vadd.f32 %v5058, %v5168
    %v5170 = vpop.f32.mrb[0].mxu0
    %5171 = vmatprep.mubr.bf16.mxu0 0
    %5172 = vmatmul.mubr.bf16.gmra.mrb[0].mxu0 %v5033
    %v5173 = vpop.f32.mrb[0].mxu0
    %v5174 = vadd.f32 %v5058, %v5173
    %v5175 = vpop.f32.mrb[0].mxu0
    %v5176 = vpop.f32.mrb[0].mxu0
    %v5177 = vadd.f32 %v5058, %v5176
    %v5178 = vpop.f32.mrb[0].mxu0
    %5179 = vmatprep.mubr.bf16.mxu0 0
    %5180 = vmatmul.mubr.bf16.gmra.mrb[0].mxu0 %v5034
    %v5181 = vpop.f32.mrb[0].mxu0
    %v5182 = vadd.f32 %v5058, %v5181
    %v5183 = vpop.f32.mrb[0].mxu0
    %v5184 = vpop.f32.mrb[0].mxu0
    %v5185 = vadd.f32 %v5058, %v5184
    %v5186 = vpop.f32.mrb[0].mxu0
    %5187 = vmatprep.mubr.bf16.mxu0 0
    %5188 = vmatmul.mubr.bf16.gmra.mrb[0].mxu0 %v5035
    %v5189 = vpop.f32.mrb[0].mxu0
    %v5190 = vadd.f32 %v5058, %v5189
    %v5191 = vpop.f32.mrb[0].mxu0
    %v5192 = vpop.f32.mrb[0].mxu0
    %v5193 = vadd.f32 %v5058, %v5192
    %v5194 = vpop.f32.mrb[0].mxu0
    %5195 = vmatprep.mubr.bf16.mxu0 0
    %5196 = vmatmul.mubr.bf16.gmra.mrb[0].mxu0 %v5036
    %v5197 = vpop.f32.mrb[0].mxu0
    %v5198 = vadd.f32 %v5058, %v5197
    %v5199 = vpop.f32.mrb[0].mxu0
    %v5200 = vpop.f32.mrb[0].mxu0
    %v5201 = vadd.f32 %v5058, %v5200
    %v5202 = vpop.f32.mrb[0].mxu0
    %5203 = vdwg.mxu0
    %5204 = vst [vmem:[#allocation11] sm:$0xff] %v5142
    %5205 = vst [vmem:[#allocation11 + $0x8] sm:$0xff] %v5145
    %5206 = vst [vmem:[#allocation11 + $0x10] sm:$0xff] %v5150
    %5207 = vst [vmem:[#allocation11 + $0x18] sm:$0xff] %v5153
    %5208 = vst [vmem:[#allocation11 + $0x20] sm:$0xff] %v5158
    %5209 = vst [vmem:[#allocation11 + $0x28] sm:$0xff] %v5161
    %5210 = vst [vmem:[#allocation11 + $0x30] sm:$0xff] %v5166
    %5211 = vst [vmem:[#allocation11 + $0x38] sm:$0xff] %v5169
    %5212 = vst [vmem:[#allocation11 + $0x40] sm:$0xff] %v5174
    %5213 = vst [vmem:[#allocation11 + $0x48] sm:$0xff] %v5177
    %5214 = vst [vmem:[#allocation11 + $0x50] sm:$0xff] %v5182
    %5215 = vst [vmem:[#allocation11 + $0x58] sm:$0xff] %v5185
    %5216 = vst [vmem:[#allocation11 + $0x60] sm:$0xff] %v5190
    %5217 = vst [vmem:[#allocation11 + $0x68] sm:$0xff] %v5193
    %5218 = vst [vmem:[#allocation11 + $0x70] sm:$0xff] %v5198
    %5219 = vst [vmem:[#allocation11 + $0x78] sm:$0xff] %v5201
    // Predicated region
    $region42: #{tpu_custom_call.1} parent=1 // pred_check
      _
    $region43: #{tpu_custom_call.1} parent=1 // pred_check_branch
      %5221 = sbr.rel (0) target = $region45
    $region44: #{tpu_custom_call.1} parent=1 // pred_region
      %s5223 = ssub.s32 2048, 2048
      %5224 = vsyncadd [#allocation4], %s5223
      %s5225 = sshll.u32 [#allocation11], 4
      %s5226 = int_to_ptr.vmem [resolvable:$true] %s5225
      %5231 = dma.vmem_to_hbm [thread:$0]  %s5226, 2048, %s5, [#allocation4], 128, 128, 8
    $region45: #{tpu_custom_call.1} parent=1 // pred_fallthru
      _
    // Predicated region
    $region46: #{tpu_custom_call.1} parent=1 // pred_check
      _
    $region47: #{tpu_custom_call.1} parent=1 // pred_check_branch
      %5233 = sbr.rel (0) target = $region49
    $region48: #{tpu_custom_call.1} parent=1 // pred_region
      %5234 = dma.done [#allocation4], 2048
    $region49: #{tpu_custom_call.1} parent=1 // pred_fallthru
      _
    %5235 = vsyncpa [#allocation3], 1
    %5236 = vsyncpa [#allocation6], 1
    %5237 = vsyncpa [#allocation9], 1
    %5238 = vsyncpa [#allocation4], 1

</llo_original>
